<compile_context>
chip_gen: v7x
topology: tpu7x:2x2x1
jax: 0.10.0
libtpu: 0.0.40
codegen_flags: <defaults>
</compile_context>

<pallas_src>
import functools
import numpy as np

import jax
import jax.numpy as jnp
from jax.experimental import pallas as pl
from jax.experimental.pallas import tpu as pltpu


def _round_up(a, b):
    return (a + b - 1) // b * b


def _vmem_capacity_bytes(default=64 << 20):
    """Physical per-core VMEM; conservative default (v7x = 64 MiB) if unknown."""
    try:
        info = pltpu.get_tpu_info()
        cap = getattr(info, "vmem_capacity_bytes", None)
        if cap:
            return int(cap)
    except Exception:
        pass
    return default


# ------------------- resident path: fused MLP + K-step GPR ------------------ #
def gpr_resident_kernel(temp_ref, x_ref, w1_ref, b1_ref, w2_ref, b2_ref,
                        adj_ref, out_ref, *, K, nclass):
    # z0 = lin2(relu(lin1(x)))  -- bf16 MXU matmuls, f32 accumulation/elementwise.
    h = jnp.dot(x_ref[...], w1_ref[...],
                preferred_element_type=jnp.float32) + b1_ref[...]
    h = jnp.maximum(h, 0.0)
    z0 = jnp.dot(h.astype(jnp.bfloat16), w2_ref[...],
                 preferred_element_type=jnp.float32) + b2_ref[...]
    z = z0.astype(jnp.bfloat16)                     # bf16-rounded z_0
    adj = adj_ref[...]                              # [Np, Np] bf16, resident

    hidden = temp_ref[0] * z.astype(jnp.float32)    # f32 GPR accumulator
    # K propagation steps entirely in VMEM; no per-step grid overhead.
    for k in range(K):
        z_new = jnp.dot(adj, z, preferred_element_type=jnp.float32)
        hidden = hidden + temp_ref[k + 1] * z_new
        z = z_new.astype(jnp.bfloat16)

    # Masked log_softmax over the valid class columns (class axis is padded).
    col = jax.lax.broadcasted_iota(jnp.int32, hidden.shape, 1)
    valid = col < nclass
    m = jnp.max(jnp.where(valid, hidden, -jnp.inf), axis=1, keepdims=True)
    e = jnp.where(valid, jnp.exp(hidden - m), 0.0)
    lse = jnp.log(jnp.sum(e, axis=1, keepdims=True))
    out_ref[...] = hidden - m - lse


# --------------- streamed path: grid=(K+1, nb), fused MLP at k==0 ------------ #
def gpr_streamed_kernel(temp_ref, x_ref, w1_ref, b1_ref, w2_ref, b2_ref,
                        adj_ref, out_ref, z_ref, *, tm, nclass):
    k = pl.program_id(0)          # 0: fused MLP init; 1..K: propagation steps
    i = pl.program_id(1)          # node row block
    row0 = pl.multiple_of(i * tm, tm)
    rows = pl.ds(row0, tm)

    @pl.when(k == 0)
    def _():
        # z0 rows of this block = lin2(relu(lin1(x_rows))).
        h = jnp.dot(x_ref[...], w1_ref[...],
                    preferred_element_type=jnp.float32) + b1_ref[...]
        h = jnp.maximum(h, 0.0)
        z0 = jnp.dot(h.astype(jnp.bfloat16), w2_ref[...],
                     preferred_element_type=jnp.float32) + b2_ref[...]
        z0b = z0.astype(z_ref.dtype)
        z_ref[0, rows, :] = z0b
        out_ref[rows, :] = temp_ref[0] * z0b.astype(jnp.float32)

    @pl.when(k > 0)
    def _():
        slot = jax.lax.rem(k - 1, 2)                 # z_{k-1} lives in z_ref[slot]
        # z_{k} rows of this block: bf16 x bf16 MXU matmul, f32 accumulation.
        z_new = jnp.dot(adj_ref[...], z_ref[slot],
                        preferred_element_type=jnp.float32)   # [tm, C_pad] f32
        # Accumulate directly into the resident f32 output (lane-dense C_pad).
        out_ref[rows, :] = out_ref[rows, :] + temp_ref[k] * z_new

        z_new_b = z_new.astype(z_ref.dtype)

        @pl.when(slot == 0)
        def _():
            z_ref[1, rows, :] = z_new_b

        @pl.when(slot == 1)
        def _():
            z_ref[0, rows, :] = z_new_b

        # Last propagation step: masked log_softmax in place.
        @pl.when(k == pl.num_programs(0) - 1)
        def _():
            h = out_ref[rows, :]
            col = jax.lax.broadcasted_iota(jnp.int32, h.shape, 1)
            valid = col < nclass
            m = jnp.max(jnp.where(valid, h, -jnp.inf), axis=1, keepdims=True)
            e = jnp.where(valid, jnp.exp(h - m), 0.0)
            lse = jnp.log(jnp.sum(e, axis=1, keepdims=True))
            out_ref[rows, :] = h - m - lse


# ------------------------------- wrapper ------------------------------------ #
def gprgnn_forward(temp, x, w1t, b1, w2t, b2, adj, *, K, row_block=None,
                   mode="auto"):
    """Eval-mode GPRGNN forward. `adj` is the dense normalized adjacency (f32)."""
    assert K >= 1, "K >= 1 required (GPR_prop.niter)"
    N, nfeat = x.shape
    nhid = w1t.shape[1]
    nclass = w2t.shape[1]

    bf16, f32 = jnp.bfloat16, jnp.float32
    H_pad = _round_up(nhid, 128)       # lane-dense hidden axis
    C_pad = _round_up(nclass, 128)     # lane-dense class axis
    vmem_cap = _vmem_capacity_bytes()

    def resident_bytes(Np):
        return (Np * Np * 2 + Np * nfeat * 2
                + nfeat * H_pad * 2 + H_pad * C_pad * 2 + (H_pad + C_pad) * 8
                + Np * C_pad * 4            # resident output
                + 3 * Np * C_pad * 4        # z / hidden temporaries
                + (4 << 20))                # slack

    def streamed_bytes(tm, Np):
        return (2 * tm * nfeat * 2          # x row block, double-buffered
                + nfeat * H_pad * 2 + H_pad * C_pad * 2 + (H_pad + C_pad) * 8
                + 2 * tm * Np * 2           # adj row block, double-buffered
                + Np * C_pad * 4            # resident output
                + 2 * Np * C_pad * 2        # z slot scratch
                + (4 << 20))                # slack

    if mode == "auto":
        mode = ("resident"
                if resident_bytes(_round_up(N, 128)) <= int(0.6 * vmem_cap)
                else "streamed")

    # Zero-padded, lane-dense weights (bf16 for MXU) and f32 biases.
    w1_p = jnp.pad(w1t, ((0, 0), (0, H_pad - nhid))).astype(bf16)
    b1_p = jnp.pad(b1.reshape(1, nhid), ((0, 0), (0, H_pad - nhid))).astype(f32)
    w2_p = jnp.pad(w2t, ((0, H_pad - nhid), (0, C_pad - nclass))).astype(bf16)
    b2_p = jnp.pad(b2.reshape(1, nclass), ((0, 0), (0, C_pad - nclass))).astype(f32)
    temp_f = temp.astype(f32)

    if mode == "resident":
        Np = _round_up(N, 128)
        x_p = jnp.pad(x, ((0, Np - N), (0, 0))).astype(bf16)
        adj_p = jnp.pad(adj, ((0, Np - N), (0, Np - N))).astype(bf16)
        vlim = int(min(max(resident_bytes(Np), 32 << 20), int(0.9 * vmem_cap)))
        out_p = pl.pallas_call(
            functools.partial(gpr_resident_kernel, K=K, nclass=nclass),
            out_shape=jax.ShapeDtypeStruct((Np, C_pad), f32),
            grid=(1,),
            in_specs=[
                pl.BlockSpec(memory_space=pltpu.MemorySpace.SMEM),   # temp coeffs
                pl.BlockSpec((Np, nfeat), lambda i: (0, 0)),
                pl.BlockSpec((nfeat, H_pad), lambda i: (0, 0)),
                pl.BlockSpec((1, H_pad), lambda i: (0, 0)),
                pl.BlockSpec((H_pad, C_pad), lambda i: (0, 0)),
                pl.BlockSpec((1, C_pad), lambda i: (0, 0)),
                pl.BlockSpec((Np, Np), lambda i: (0, 0)),
            ],
            out_specs=pl.BlockSpec((Np, C_pad), lambda i: (0, 0)),
            compiler_params=pltpu.CompilerParams(
                dimension_semantics=("arbitrary",),
                vmem_limit_bytes=vlim),
            cost_estimate=pl.CostEstimate(
                flops=2 * Np * nfeat * H_pad + 2 * Np * H_pad * C_pad
                + 2 * K * Np * Np * C_pad,
                transcendentals=Np * C_pad,
                bytes_accessed=Np * nfeat * 2 + nfeat * H_pad * 2
                + H_pad * C_pad * 2 + Np * Np * 2 + Np * C_pad * 4),
        )(temp_f, x_p, w1_p, b1_p, w2_p, b2_p, adj_p)
        return out_p[:N, :nclass]

    # ------------------------------ streamed --------------------------------- #
    if row_block is None:
        row_block = 128
        for tm_try in (512, 256, 128):
            if streamed_bytes(tm_try, _round_up(N, tm_try)) <= int(0.75 * vmem_cap):
                row_block = tm_try
                break
    assert row_block % 128 == 0, "row_block must be a multiple of 128"
    tm = row_block
    Np = _round_up(N, tm)
    nb = Np // tm

    x_p = jnp.pad(x, ((0, Np - N), (0, 0))).astype(bf16)
    adj_p = jnp.pad(adj, ((0, Np - N), (0, Np - N))).astype(bf16)
    vlim = int(min(max(streamed_bytes(tm, Np), 32 << 20), int(0.9 * vmem_cap)))

    out_p = pl.pallas_call(
        functools.partial(gpr_streamed_kernel, tm=tm, nclass=nclass),
        out_shape=jax.ShapeDtypeStruct((Np, C_pad), f32),
        grid=(K + 1, nb),
        in_specs=[
            pl.BlockSpec(memory_space=pltpu.MemorySpace.SMEM),       # temp coeffs
            # x only needed at k==0; afterwards keep the index constant so the
            # pipeline does not re-fetch it.
            pl.BlockSpec((tm, nfeat),
                         lambda k, i: (jnp.where(k == 0, i, nb - 1), 0)),
            pl.BlockSpec((nfeat, H_pad), lambda k, i: (0, 0)),       # W1 (resident)
            pl.BlockSpec((1, H_pad), lambda k, i: (0, 0)),           # b1
            pl.BlockSpec((H_pad, C_pad), lambda k, i: (0, 0)),       # W2 (resident)
            pl.BlockSpec((1, C_pad), lambda k, i: (0, 0)),           # b2
            # adj not needed at k==0; park on block 0 so k==1 starts warm.
            pl.BlockSpec((tm, Np),
                         lambda k, i: (jnp.where(k == 0, 0, i), 0)),
        ],
        # Resident output (constant block index): accumulated in VMEM, written
        # back to HBM exactly once after the last grid step.
        out_specs=pl.BlockSpec((Np, C_pad), lambda k, i: (0, 0)),
        scratch_shapes=[pltpu.VMEM((2, Np, C_pad), bf16)],           # z slots
        compiler_params=pltpu.CompilerParams(
            # Row-block axis cannot be "parallel": every block at step k feeds
            # all blocks at step k+1 through the shared z scratch.
            dimension_semantics=("arbitrary", "arbitrary"),
            vmem_limit_bytes=vlim),
        cost_estimate=pl.CostEstimate(
            flops=2 * Np * nfeat * H_pad + 2 * Np * H_pad * C_pad
            + 2 * K * Np * Np * C_pad,
            transcendentals=Np * C_pad,
            bytes_accessed=Np * nfeat * 2 + nfeat * H_pad * 2 + H_pad * C_pad * 2
            + (K if nb > 1 else 1) * Np * Np * 2 + Np * C_pad * 4),
    )(temp_f, x_p, w1_p, b1_p, w2_p, b2_p, adj_p)
    return out_p[:N, :nclass]


# ------------------------------- JAX glue ------------------------------------ #
def gcn_norm_dense(edge_index, num_nodes):
    """Dense Â = D^-1/2 (A + I) D^-1/2, matching PyG gcn_norm (add_self_loops=True)."""
    src = edge_index[0]
    dst = edge_index[1]
    loop = jnp.arange(num_nodes, dtype=src.dtype)
    src = jnp.concatenate([src, loop])
    dst = jnp.concatenate([dst, loop])
    w = jnp.ones(src.shape[0], dtype=jnp.float32)
    deg = jnp.zeros((num_nodes,), dtype=jnp.float32).at[dst].add(w)
    dinv = jnp.where(deg > 0, 1.0 / jnp.sqrt(deg), 0.0)
    norm = dinv[src] * w * dinv[dst]
    # propagation: out[target] += norm * x[source]  ->  Â[target, source] = norm
    A = jnp.zeros((num_nodes, num_nodes), dtype=jnp.float32).at[dst, src].add(norm)
    return A


def gprgnn_reference(temp, x, w1t, b1, w2t, b2, adj, K):
    """Pure-JAX reference mirroring the kernel's bf16/f32 data flow."""
    f32, bf16 = jnp.float32, jnp.bfloat16
    hi = jax.lax.Precision.HIGHEST
    rd = lambda a: a.astype(bf16).astype(f32)          # bf16 rounding
    h = jnp.maximum(jnp.dot(rd(x), rd(w1t), precision=hi) + b1, 0.0)
    z = jnp.dot(rd(h), rd(w2t), precision=hi) + b2
    zb = rd(z)
    a32 = rd(adj)
    hidden = temp[0] * zb
    zc = zb
    for k in range(K):
        zn = jnp.dot(a32, zc, precision=hi)
        hidden = hidden + temp[k + 1] * zn
        zc = rd(zn)
    return jax.nn.log_softmax(hidden, axis=1)


# --------------------------------- main --------------------------------------- #
if __name__ == "__main__":
    # Small deterministic problem; N deliberately not a multiple of 128 to
    # exercise the padding path.  Both execution paths are tested.
    N, nfeat, nhid, nclass = 200, 64, 64, 16
    K, alpha = 10, 0.1
    E = 800

    key = jax.random.PRNGKey(0)
    kx, ke1, ke2, kw1, kb1, kw2, kb2 = jax.random.split(key, 7)

    x = jax.random.normal(kx, (N, nfeat), dtype=jnp.float32)
    edge_index = jnp.stack([
        jax.random.randint(ke1, (E,), 0, N, dtype=jnp.int32),
        jax.random.randint(ke2, (E,), 0, N, dtype=jnp.int32),
    ])

    # Linear params (PyTorch Linear: y = x @ W^T + b); stored pre-transposed.
    lim1 = 1.0 / np.sqrt(nfeat)
    lim2 = 1.0 / np.sqrt(nhid)
    w1t = jax.random.uniform(kw1, (nfeat, nhid), minval=-lim1, maxval=lim1,
                             dtype=jnp.float32)
    b1 = jax.random.uniform(kb1, (1, nhid), minval=-lim1, maxval=lim1,
                            dtype=jnp.float32)
    w2t = jax.random.uniform(kw2, (nhid, nclass), minval=-lim2, maxval=lim2,
                             dtype=jnp.float32)
    b2 = jax.random.uniform(kb2, (1, nclass), minval=-lim2, maxval=lim2,
                            dtype=jnp.float32)

    # GPR_prop coefficients: temp[k] = alpha*(1-alpha)^k, temp[K] = (1-alpha)^K
    temp_np = alpha * (1.0 - alpha) ** np.arange(K + 1)
    temp_np[-1] = (1.0 - alpha) ** K
    temp = jnp.asarray(temp_np, dtype=jnp.float32)

    adj = gcn_norm_dense(edge_index, N)
    ref = gprgnn_reference(temp, x, w1t, b1, w2t, b2, adj, K)

    # Resident path (adjacency fits VMEM -> fused single-invocation kernel).
    out_res = gprgnn_forward(temp, x, w1t, b1, w2t, b2, adj, K=K, mode="resident")
    out_res = jax.block_until_ready(out_res)
    np.testing.assert_allclose(np.asarray(out_res), np.asarray(ref),
                               rtol=2e-3, atol=2e-3)

    # Streamed path (row-blocked adjacency, nb=2) -> exercises the grid kernel.
    out_str = gprgnn_forward(temp, x, w1t, b1, w2t, b2, adj, K=K,
                             mode="streamed", row_block=128)
    out_str = jax.block_until_ready(out_str)
    np.testing.assert_allclose(np.asarray(out_str), np.asarray(ref),
                               rtol=2e-3, atol=2e-3)

    print("KERNEL_OK")
</pallas_src>

<mosaic_0001>
module attributes {stable_mosaic.version = 11 : i64} {
  func.func @gpr_resident_kernel(%arg0: i32, %arg1: memref<11xf32, #tpu.memory_space<smem>>, %arg2: memref<256x64xbf16, #tpu.memory_space<vmem>>, %arg3: memref<64x128xbf16, #tpu.memory_space<vmem>>, %arg4: memref<1x128xf32, #tpu.memory_space<vmem>>, %arg5: memref<128x128xbf16, #tpu.memory_space<vmem>>, %arg6: memref<1x128xf32, #tpu.memory_space<vmem>>, %arg7: memref<256x256xbf16, #tpu.memory_space<vmem>>, %arg8: memref<256x128xf32, #tpu.memory_space<vmem>>) attributes {dimension_semantics = [#tpu.dimension_semantics<arbitrary>], iteration_bounds = array<i64: 1>, scalar_prefetch = 0 : i64, scratch_operands = 0 : i64, tpu.core_type = #tpu.core_type<tc>, window_params = [{transform_indices = @transform_0, window_bounds = array<i64: 11>}, {pipeline_mode = #tpu.pipeline_mode<synchronous>, transform_indices = @transform_1, window_bounds = array<i64: 256, 64>}, {pipeline_mode = #tpu.pipeline_mode<synchronous>, transform_indices = @transform_2, window_bounds = array<i64: 64, 128>}, {pipeline_mode = #tpu.pipeline_mode<synchronous>, transform_indices = @transform_3, window_bounds = array<i64: 1, 128>}, {pipeline_mode = #tpu.pipeline_mode<synchronous>, transform_indices = @transform_4, window_bounds = array<i64: 128, 128>}, {pipeline_mode = #tpu.pipeline_mode<synchronous>, transform_indices = @transform_5, window_bounds = array<i64: 1, 128>}, {pipeline_mode = #tpu.pipeline_mode<synchronous>, transform_indices = @transform_6, window_bounds = array<i64: 256, 256>}, {pipeline_mode = #tpu.pipeline_mode<synchronous>, transform_indices = @transform_7, window_bounds = array<i64: 256, 128>}]} {
    %c0 = arith.constant 0 : index
    %c0_0 = arith.constant 0 : index
    %0 = vector.load %arg2[%c0, %c0_0] : memref<256x64xbf16, #tpu.memory_space<vmem>>, vector<256x64xbf16>
    %c0_1 = arith.constant 0 : index
    %c0_2 = arith.constant 0 : index
    %1 = vector.load %arg3[%c0_1, %c0_2] : memref<64x128xbf16, #tpu.memory_space<vmem>>, vector<64x128xbf16>
    %cst = arith.constant dense<0.000000e+00> : vector<256x128xf32>
    %2 = tpu.matmul %0, %1, %cst {dimension_numbers = #tpu.dot_dimension_numbers<[1], [0], [0], [1], [0, 0, 1, 1], [], []>} : vector<256x64xbf16>, vector<64x128xbf16>, vector<256x128xf32> -> vector<256x128xf32>
    %c0_3 = arith.constant 0 : index
    %c0_4 = arith.constant 0 : index
    %3 = vector.load %arg4[%c0_3, %c0_4] : memref<1x128xf32, #tpu.memory_space<vmem>>, vector<1x128xf32>
    %4 = vector.broadcast %3 : vector<1x128xf32> to vector<256x128xf32>
    %5 = arith.addf %2, %4 : vector<256x128xf32>
    %cst_5 = arith.constant 0.000000e+00 : f32
    %6 = vector.broadcast %cst_5 : f32 to vector<256x128xf32>
    %7 = arith.maximumf %5, %6 : vector<256x128xf32>
    %8 = arith.truncf %7 : vector<256x128xf32> to vector<256x128xbf16>
    %c0_6 = arith.constant 0 : index
    %c0_7 = arith.constant 0 : index
    %9 = vector.load %arg5[%c0_6, %c0_7] : memref<128x128xbf16, #tpu.memory_space<vmem>>, vector<128x128xbf16>
    %cst_8 = arith.constant dense<0.000000e+00> : vector<256x128xf32>
    %10 = tpu.matmul %8, %9, %cst_8 {dimension_numbers = #tpu.dot_dimension_numbers<[1], [0], [0], [1], [0, 0, 1, 1], [], []>} : vector<256x128xbf16>, vector<128x128xbf16>, vector<256x128xf32> -> vector<256x128xf32>
    %c0_9 = arith.constant 0 : index
    %c0_10 = arith.constant 0 : index
    %11 = vector.load %arg6[%c0_9, %c0_10] : memref<1x128xf32, #tpu.memory_space<vmem>>, vector<1x128xf32>
    %12 = vector.broadcast %11 : vector<1x128xf32> to vector<256x128xf32>
    %13 = arith.addf %10, %12 : vector<256x128xf32>
    %14 = arith.truncf %13 : vector<256x128xf32> to vector<256x128xbf16>
    %c0_11 = arith.constant 0 : index
    %c0_12 = arith.constant 0 : index
    %15 = vector.load %arg7[%c0_11, %c0_12] : memref<256x256xbf16, #tpu.memory_space<vmem>>, vector<256x256xbf16>
    %c0_13 = arith.constant 0 : index
    %16 = memref.load %arg1[%c0_13] : memref<11xf32, #tpu.memory_space<smem>>
    %17 = arith.extf %14 : vector<256x128xbf16> to vector<256x128xf32>
    %18 = vector.broadcast %16 : f32 to vector<256x128xf32>
    %19 = arith.mulf %18, %17 : vector<256x128xf32>
    %cst_14 = arith.constant dense<0.000000e+00> : vector<256x128xf32>
    %20 = tpu.matmul %15, %14, %cst_14 {dimension_numbers = #tpu.dot_dimension_numbers<[1], [0], [0], [1], [0, 0, 1, 1], [], []>} : vector<256x256xbf16>, vector<256x128xbf16>, vector<256x128xf32> -> vector<256x128xf32>
    %c1 = arith.constant 1 : index
    %21 = memref.load %arg1[%c1] : memref<11xf32, #tpu.memory_space<smem>>
    %22 = vector.broadcast %21 : f32 to vector<256x128xf32>
    %23 = arith.mulf %22, %20 : vector<256x128xf32>
    %24 = arith.addf %19, %23 : vector<256x128xf32>
    %25 = arith.truncf %20 : vector<256x128xf32> to vector<256x128xbf16>
    %cst_15 = arith.constant dense<0.000000e+00> : vector<256x128xf32>
    %26 = tpu.matmul %15, %25, %cst_15 {dimension_numbers = #tpu.dot_dimension_numbers<[1], [0], [0], [1], [0, 0, 1, 1], [], []>} : vector<256x256xbf16>, vector<256x128xbf16>, vector<256x128xf32> -> vector<256x128xf32>
    %c2 = arith.constant 2 : index
    %27 = memref.load %arg1[%c2] : memref<11xf32, #tpu.memory_space<smem>>
    %28 = vector.broadcast %27 : f32 to vector<256x128xf32>
    %29 = arith.mulf %28, %26 : vector<256x128xf32>
    %30 = arith.addf %24, %29 : vector<256x128xf32>
    %31 = arith.truncf %26 : vector<256x128xf32> to vector<256x128xbf16>
    %cst_16 = arith.constant dense<0.000000e+00> : vector<256x128xf32>
    %32 = tpu.matmul %15, %31, %cst_16 {dimension_numbers = #tpu.dot_dimension_numbers<[1], [0], [0], [1], [0, 0, 1, 1], [], []>} : vector<256x256xbf16>, vector<256x128xbf16>, vector<256x128xf32> -> vector<256x128xf32>
    %c3 = arith.constant 3 : index
    %33 = memref.load %arg1[%c3] : memref<11xf32, #tpu.memory_space<smem>>
    %34 = vector.broadcast %33 : f32 to vector<256x128xf32>
    %35 = arith.mulf %34, %32 : vector<256x128xf32>
    %36 = arith.addf %30, %35 : vector<256x128xf32>
    %37 = arith.truncf %32 : vector<256x128xf32> to vector<256x128xbf16>
    %cst_17 = arith.constant dense<0.000000e+00> : vector<256x128xf32>
    %38 = tpu.matmul %15, %37, %cst_17 {dimension_numbers = #tpu.dot_dimension_numbers<[1], [0], [0], [1], [0, 0, 1, 1], [], []>} : vector<256x256xbf16>, vector<256x128xbf16>, vector<256x128xf32> -> vector<256x128xf32>
    %c4 = arith.constant 4 : index
    %39 = memref.load %arg1[%c4] : memref<11xf32, #tpu.memory_space<smem>>
    %40 = vector.broadcast %39 : f32 to vector<256x128xf32>
    %41 = arith.mulf %40, %38 : vector<256x128xf32>
    %42 = arith.addf %36, %41 : vector<256x128xf32>
    %43 = arith.truncf %38 : vector<256x128xf32> to vector<256x128xbf16>
    %cst_18 = arith.constant dense<0.000000e+00> : vector<256x128xf32>
    %44 = tpu.matmul %15, %43, %cst_18 {dimension_numbers = #tpu.dot_dimension_numbers<[1], [0], [0], [1], [0, 0, 1, 1], [], []>} : vector<256x256xbf16>, vector<256x128xbf16>, vector<256x128xf32> -> vector<256x128xf32>
    %c5 = arith.constant 5 : index
    %45 = memref.load %arg1[%c5] : memref<11xf32, #tpu.memory_space<smem>>
    %46 = vector.broadcast %45 : f32 to vector<256x128xf32>
    %47 = arith.mulf %46, %44 : vector<256x128xf32>
    %48 = arith.addf %42, %47 : vector<256x128xf32>
    %49 = arith.truncf %44 : vector<256x128xf32> to vector<256x128xbf16>
    %cst_19 = arith.constant dense<0.000000e+00> : vector<256x128xf32>
    %50 = tpu.matmul %15, %49, %cst_19 {dimension_numbers = #tpu.dot_dimension_numbers<[1], [0], [0], [1], [0, 0, 1, 1], [], []>} : vector<256x256xbf16>, vector<256x128xbf16>, vector<256x128xf32> -> vector<256x128xf32>
    %c6 = arith.constant 6 : index
    %51 = memref.load %arg1[%c6] : memref<11xf32, #tpu.memory_space<smem>>
    %52 = vector.broadcast %51 : f32 to vector<256x128xf32>
    %53 = arith.mulf %52, %50 : vector<256x128xf32>
    %54 = arith.addf %48, %53 : vector<256x128xf32>
    %55 = arith.truncf %50 : vector<256x128xf32> to vector<256x128xbf16>
    %cst_20 = arith.constant dense<0.000000e+00> : vector<256x128xf32>
    %56 = tpu.matmul %15, %55, %cst_20 {dimension_numbers = #tpu.dot_dimension_numbers<[1], [0], [0], [1], [0, 0, 1, 1], [], []>} : vector<256x256xbf16>, vector<256x128xbf16>, vector<256x128xf32> -> vector<256x128xf32>
    %c7 = arith.constant 7 : index
    %57 = memref.load %arg1[%c7] : memref<11xf32, #tpu.memory_space<smem>>
    %58 = vector.broadcast %57 : f32 to vector<256x128xf32>
    %59 = arith.mulf %58, %56 : vector<256x128xf32>
    %60 = arith.addf %54, %59 : vector<256x128xf32>
    %61 = arith.truncf %56 : vector<256x128xf32> to vector<256x128xbf16>
    %cst_21 = arith.constant dense<0.000000e+00> : vector<256x128xf32>
    %62 = tpu.matmul %15, %61, %cst_21 {dimension_numbers = #tpu.dot_dimension_numbers<[1], [0], [0], [1], [0, 0, 1, 1], [], []>} : vector<256x256xbf16>, vector<256x128xbf16>, vector<256x128xf32> -> vector<256x128xf32>
    %c8 = arith.constant 8 : index
    %63 = memref.load %arg1[%c8] : memref<11xf32, #tpu.memory_space<smem>>
    %64 = vector.broadcast %63 : f32 to vector<256x128xf32>
    %65 = arith.mulf %64, %62 : vector<256x128xf32>
    %66 = arith.addf %60, %65 : vector<256x128xf32>
    %67 = arith.truncf %62 : vector<256x128xf32> to vector<256x128xbf16>
    %cst_22 = arith.constant dense<0.000000e+00> : vector<256x128xf32>
    %68 = tpu.matmul %15, %67, %cst_22 {dimension_numbers = #tpu.dot_dimension_numbers<[1], [0], [0], [1], [0, 0, 1, 1], [], []>} : vector<256x256xbf16>, vector<256x128xbf16>, vector<256x128xf32> -> vector<256x128xf32>
    %c9 = arith.constant 9 : index
    %69 = memref.load %arg1[%c9] : memref<11xf32, #tpu.memory_space<smem>>
    %70 = vector.broadcast %69 : f32 to vector<256x128xf32>
    %71 = arith.mulf %70, %68 : vector<256x128xf32>
    %72 = arith.addf %66, %71 : vector<256x128xf32>
    %73 = arith.truncf %68 : vector<256x128xf32> to vector<256x128xbf16>
    %cst_23 = arith.constant dense<0.000000e+00> : vector<256x128xf32>
    %74 = tpu.matmul %15, %73, %cst_23 {dimension_numbers = #tpu.dot_dimension_numbers<[1], [0], [0], [1], [0, 0, 1, 1], [], []>} : vector<256x256xbf16>, vector<256x128xbf16>, vector<256x128xf32> -> vector<256x128xf32>
    %c10 = arith.constant 10 : index
    %75 = memref.load %arg1[%c10] : memref<11xf32, #tpu.memory_space<smem>>
    %76 = vector.broadcast %75 : f32 to vector<256x128xf32>
    %77 = arith.mulf %76, %74 : vector<256x128xf32>
    %78 = arith.addf %72, %77 : vector<256x128xf32>
    %79 = tpu.iota {dimensions = array<i32: 1>} : vector<256x128xi32>
    %c16_i32 = arith.constant 16 : i32
    %80 = vector.broadcast %c16_i32 : i32 to vector<256x128xi32>
    %81 = arith.cmpi slt, %79, %80 : vector<256x128xi32>
    %cst_24 = arith.constant 0xFF800000 : f32
    %82 = vector.broadcast %cst_24 : f32 to vector<256x128xf32>
    %83 = arith.select %81, %78, %82 : vector<256x128xi1>, vector<256x128xf32>
    %cst_25 = arith.constant dense<0xFF800000> : vector<256xf32>
    %84 = vector.multi_reduction <maximumf>, %83, %cst_25 [1] : vector<256x128xf32> to vector<256xf32>
    %85 = vector.shape_cast %84 : vector<256xf32> to vector<256x1xf32>
    %86 = vector.broadcast %85 : vector<256x1xf32> to vector<256x128xf32>
    %87 = arith.subf %78, %86 : vector<256x128xf32>
    %88 = math.exp %87 : vector<256x128xf32>
    %cst_26 = arith.constant 0.000000e+00 : f32
    %89 = vector.broadcast %cst_26 : f32 to vector<256x128xf32>
    %90 = arith.select %81, %88, %89 : vector<256x128xi1>, vector<256x128xf32>
    %cst_27 = arith.constant dense<0.000000e+00> : vector<256xf32>
    %91 = vector.multi_reduction <add>, %90, %cst_27 [1] : vector<256x128xf32> to vector<256xf32>
    %92 = vector.shape_cast %91 : vector<256xf32> to vector<256x1xf32>
    %93 = math.log %92 : vector<256x1xf32>
    %94 = vector.broadcast %85 : vector<256x1xf32> to vector<256x128xf32>
    %95 = arith.subf %78, %94 : vector<256x128xf32>
    %96 = vector.broadcast %93 : vector<256x1xf32> to vector<256x128xf32>
    %97 = arith.subf %95, %96 : vector<256x128xf32>
    %c0_28 = arith.constant 0 : index
    %c0_29 = arith.constant 0 : index
    %98 = vector.load %arg8[%c0_28, %c0_29] : memref<256x128xf32, #tpu.memory_space<vmem>>, vector<256x128xf32>
    tpu.vector_store %arg8[%c0_28, %c0_29], %97 {strides = array<i32>} : memref<256x128xf32, #tpu.memory_space<vmem>>, vector<256x128xf32>,
    return
  }
  func.func @transform_0(%arg0: i32) -> i32 {
    %c0_i32 = arith.constant 0 : i32
    %c0_i32_0 = arith.constant 0 : i32
    return %c0_i32 : i32
  }
  func.func @transform_1(%arg0: i32) -> (i32, i32) {
    %c0_i32 = arith.constant 0 : i32
    %c0_i32_0 = arith.constant 0 : i32
    %c0_i32_1 = arith.constant 0 : i32
    return %c0_i32, %c0_i32_0 : i32, i32
  }
  func.func @transform_2(%arg0: i32) -> (i32, i32) {
    %c0_i32 = arith.constant 0 : i32
    %c0_i32_0 = arith.constant 0 : i32
    %c0_i32_1 = arith.constant 0 : i32
    return %c0_i32, %c0_i32_0 : i32, i32
  }
  func.func @transform_3(%arg0: i32) -> (i32, i32) {
    %c0_i32 = arith.constant 0 : i32
    %c0_i32_0 = arith.constant 0 : i32
    %c0_i32_1 = arith.constant 0 : i32
    return %c0_i32, %c0_i32_0 : i32, i32
  }
  func.func @transform_4(%arg0: i32) -> (i32, i32) {
    %c0_i32 = arith.constant 0 : i32
    %c0_i32_0 = arith.constant 0 : i32
    %c0_i32_1 = arith.constant 0 : i32
    return %c0_i32, %c0_i32_0 : i32, i32
  }
  func.func @transform_5(%arg0: i32) -> (i32, i32) {
    %c0_i32 = arith.constant 0 : i32
    %c0_i32_0 = arith.constant 0 : i32
    %c0_i32_1 = arith.constant 0 : i32
    return %c0_i32, %c0_i32_0 : i32, i32
  }
  func.func @transform_6(%arg0: i32) -> (i32, i32) {
    %c0_i32 = arith.constant 0 : i32
    %c0_i32_0 = arith.constant 0 : i32
    %c0_i32_1 = arith.constant 0 : i32
    return %c0_i32, %c0_i32_0 : i32, i32
  }
  func.func @transform_7(%arg0: i32) -> (i32, i32) {
    %c0_i32 = arith.constant 0 : i32
    %c0_i32_0 = arith.constant 0 : i32
    %c0_i32_1 = arith.constant 0 : i32
    return %c0_i32, %c0_i32_0 : i32, i32
  }
}

</mosaic_0001>

<llo_original>
// kernel: tpu_custom_call.1
$region0: #{tpu_custom_call.1}
  #allocation0 [shape = 'u32[]', space=smem, size = 0x4, offset = 0x4, fixed_abs, tag = 'smem constant byte address 0x4 - core index']
  #allocation1 [shape = 'u32[144,128]{1,0:T(1,128)}', space=vmem, size = 0x12000, scoped, tag = 'internal scratch']
  %s0 = inlined_call_operand.vmem [shape: f32[11], index: 0, kind: input, shape index: {}]
  %s1 = inlined_call_operand.vmem [shape: bf16[256,64], index: 1, kind: input, shape index: {}]
  %s2 = inlined_call_operand.vmem [shape: bf16[64,128], index: 2, kind: input, shape index: {}]
  %s3 = inlined_call_operand.vmem [shape: f32[1,128], index: 3, kind: input, shape index: {}]
  %s4 = inlined_call_operand.vmem [shape: bf16[128,128], index: 4, kind: input, shape index: {}]
  %s5 = inlined_call_operand.vmem [shape: f32[1,128], index: 5, kind: input, shape index: {}]
  %s6 = inlined_call_operand.hbm [shape: bf16[256,256], index: 6, kind: input, shape index: {}]
  %s7 = inlined_call_operand.hbm [shape: f32[256,128], index: 7, kind: output, shape index: {}]
  %s8 = sld [smem:[#allocation0]]
  $region46: #{tpu_custom_call.1} parent=0
    _
  %s10 = ssub.s32 1, %s8
  %s11 = scalar_select 0, %s10, %s8
  $region1: #{tpu_custom_call.1} parent=0
    #allocation2 [shape = 'u8[512]{0}', space=smem, size = 0x200, scoped, tag = 'input window, operand 0, single buffered']
    #allocation3 [shape = 's32[1]{0}', space=sflag, size = 0x4, scoped, tag = 'scoped memory for tpu_custom_call.1']
    #allocation4 [shape = 's32[1]{0}', space=sflag, size = 0x4, scoped, tag = 'scoped memory for tpu_custom_call.1']
    #allocation5 [shape = 's32[1]{0}', space=sflag, size = 0x4, scoped, tag = 'scoped memory for tpu_custom_call.1']
    #allocation6 [shape = 'u8[131072]{0}', space=vmem, size = 0x20000, scoped, tag = 'input window, operand 6, single buffered']
    #allocation7 [shape = 'u8[131072]{0}', space=vmem, size = 0x20000, scoped, tag = 'output window, operand 0, single buffered']
    %12 = vsyncpa [#allocation5], 0
    %13 = vsyncpa [#allocation3], 0
    %14 = vsyncpa [#allocation4], 0
    // Predicated region
    $region2: #{tpu_custom_call.1} parent=1 // pred_check
      _
    $region3: #{tpu_custom_call.1} parent=1 // pred_check_branch
      %16 = sbr.rel (0) target = $region5
    $region4: #{tpu_custom_call.1} parent=1 // pred_region
      %s18 = ssub.s32 16, 16
      %19 = vsyncadd [#allocation5], %s18
      %s21 = sshll.u32 %s0, 4
      %s22 = int_to_ptr.vmem [resolvable:$true] %s21
      %24 = dma.vmem_to_smem %s22, 16, [#allocation2], [#allocation5]
    $region5: #{tpu_custom_call.1} parent=1 // pred_fallthru
      _
    // Predicated region
    $region6: #{tpu_custom_call.1} parent=1 // pred_check
      _
    $region7: #{tpu_custom_call.1} parent=1 // pred_check_branch
      %26 = sbr.rel (0) target = $region9
    $region8: #{tpu_custom_call.1} parent=1 // pred_region
      _
    $region9: #{tpu_custom_call.1} parent=1 // pred_fallthru
      _
    // Predicated region
    $region10: #{tpu_custom_call.1} parent=1 // pred_check
      _
    $region11: #{tpu_custom_call.1} parent=1 // pred_check_branch
      %28 = sbr.rel (0) target = $region13
    $region12: #{tpu_custom_call.1} parent=1 // pred_region
      _
    $region13: #{tpu_custom_call.1} parent=1 // pred_fallthru
      _
    // Predicated region
    $region14: #{tpu_custom_call.1} parent=1 // pred_check
      _
    $region15: #{tpu_custom_call.1} parent=1 // pred_check_branch
      %30 = sbr.rel (0) target = $region17
    $region16: #{tpu_custom_call.1} parent=1 // pred_region
      _
    $region17: #{tpu_custom_call.1} parent=1 // pred_fallthru
      _
    // Predicated region
    $region18: #{tpu_custom_call.1} parent=1 // pred_check
      _
    $region19: #{tpu_custom_call.1} parent=1 // pred_check_branch
      %32 = sbr.rel (0) target = $region21
    $region20: #{tpu_custom_call.1} parent=1 // pred_region
      _
    $region21: #{tpu_custom_call.1} parent=1 // pred_fallthru
      _
    // Predicated region
    $region22: #{tpu_custom_call.1} parent=1 // pred_check
      _
    $region23: #{tpu_custom_call.1} parent=1 // pred_check_branch
      %34 = sbr.rel (0) target = $region25
    $region24: #{tpu_custom_call.1} parent=1 // pred_region
      _
    $region25: #{tpu_custom_call.1} parent=1 // pred_fallthru
      _
    // Predicated region
    $region26: #{tpu_custom_call.1} parent=1 // pred_check
      _
    $region27: #{tpu_custom_call.1} parent=1 // pred_check_branch
      %36 = sbr.rel (0) target = $region29
    $region28: #{tpu_custom_call.1} parent=1 // pred_region
      %s38 = ssub.s32 4096, 4096
      %39 = vsyncadd [#allocation3], %s38
      %s40 = sshll.u32 [#allocation6], 4
      %s41 = int_to_ptr.vmem [resolvable:$true] %s40
      %46 = dma.hbm_to_vmem [thread:$0]  %s6, 4096, %s41, [#allocation3], 128, 128, 8
    $region29: #{tpu_custom_call.1} parent=1 // pred_fallthru
      _
    // Predicated region
    $region30: #{tpu_custom_call.1} parent=1 // pred_check
      _
    $region31: #{tpu_custom_call.1} parent=1 // pred_check_branch
      %48 = sbr.rel (0) target = $region33
    $region32: #{tpu_custom_call.1} parent=1 // pred_region
      %49 = dma.done [#allocation5], 16
    $region33: #{tpu_custom_call.1} parent=1 // pred_fallthru
      _
    // Predicated region
    $region34: #{tpu_custom_call.1} parent=1 // pred_check
      _
    $region35: #{tpu_custom_call.1} parent=1 // pred_check_branch
      %51 = sbr.rel (0) target = $region37
    $region36: #{tpu_custom_call.1} parent=1 // pred_region
      %52 = dma.done [#allocation3], 4096
    $region37: #{tpu_custom_call.1} parent=1 // pred_fallthru
      _
    %53 = sfence
    %v55 = vld [vmem:[%s1] sm:$0xf]
    %v56 = vld [vmem:[%s1 + $0x4] sm:$0xf]
    %v57 = vld [vmem:[%s1 + $0x8] sm:$0xf]
    %v58 = vld [vmem:[%s1 + $0xc] sm:$0xf]
    %v59 = vld [vmem:[%s1 + $0x10] sm:$0xf]
    %v60 = vld [vmem:[%s1 + $0x14] sm:$0xf]
    %v61 = vld [vmem:[%s1 + $0x18] sm:$0xf]
    %v62 = vld [vmem:[%s1 + $0x1c] sm:$0xf]
    %v63 = vld [vmem:[%s1 + $0x20] sm:$0xf]
    %v64 = vld [vmem:[%s1 + $0x24] sm:$0xf]
    %v65 = vld [vmem:[%s1 + $0x28] sm:$0xf]
    %v66 = vld [vmem:[%s1 + $0x2c] sm:$0xf]
    %v67 = vld [vmem:[%s1 + $0x30] sm:$0xf]
    %v68 = vld [vmem:[%s1 + $0x34] sm:$0xf]
    %v69 = vld [vmem:[%s1 + $0x38] sm:$0xf]
    %v70 = vld [vmem:[%s1 + $0x3c] sm:$0xf]
    %v71 = vld [vmem:[%s1 + $0x40] sm:$0xf]
    %v72 = vld [vmem:[%s1 + $0x44] sm:$0xf]
    %v73 = vld [vmem:[%s1 + $0x48] sm:$0xf]
    %v74 = vld [vmem:[%s1 + $0x4c] sm:$0xf]
    %v75 = vld [vmem:[%s1 + $0x50] sm:$0xf]
    %v76 = vld [vmem:[%s1 + $0x54] sm:$0xf]
    %v77 = vld [vmem:[%s1 + $0x58] sm:$0xf]
    %v78 = vld [vmem:[%s1 + $0x5c] sm:$0xf]
    %v79 = vld [vmem:[%s1 + $0x60] sm:$0xf]
    %v80 = vld [vmem:[%s1 + $0x64] sm:$0xf]
    %v81 = vld [vmem:[%s1 + $0x68] sm:$0xf]
    %v82 = vld [vmem:[%s1 + $0x6c] sm:$0xf]
    %v83 = vld [vmem:[%s1 + $0x70] sm:$0xf]
    %v84 = vld [vmem:[%s1 + $0x74] sm:$0xf]
    %v85 = vld [vmem:[%s1 + $0x78] sm:$0xf]
    %v86 = vld [vmem:[%s1 + $0x7c] sm:$0xf]
    %v87 = vld [vmem:[%s2] sm:$0xf]
    %v88 = vld [vmem:[%s2 + $0x4] sm:$0xf]
    %v89 = vld [vmem:[%s2 + $0x8] sm:$0xf]
    %v90 = vld [vmem:[%s2 + $0xc] sm:$0xf]
    %v91 = vld [vmem:[%s2 + $0x10] sm:$0xf]
    %v92 = vld [vmem:[%s2 + $0x14] sm:$0xf]
    %v93 = vld [vmem:[%s2 + $0x18] sm:$0xf]
    %v94 = vld [vmem:[%s2 + $0x1c] sm:$0xf]
    %v95 = vld [vmem:[%s3] sm:$0x1]
    %v97 = vlaneseq
    %v98 = vshrl.u32 %v97, 7
    %v99 = vsub.s32 0, %v98
    %v100 = vrot.slane %v95, %v99
    %v134 = vunpack.c.l.b16 %v55
    %v135 = vunpack.c.l.b16 %v56
    %v136 = vunpack.c.l.b16 %v57
    %v137 = vunpack.c.l.b16 %v58
    %v138 = vunpack.c.l.b16 %v59
    %v139 = vunpack.c.l.b16 %v60
    %v140 = vunpack.c.l.b16 %v61
    %v141 = vunpack.c.l.b16 %v62
    %v142 = vunpack.c.l.b16 %v63
    %v143 = vunpack.c.l.b16 %v64
    %v144 = vunpack.c.l.b16 %v65
    %v145 = vunpack.c.l.b16 %v66
    %v146 = vunpack.c.l.b16 %v67
    %v147 = vunpack.c.l.b16 %v68
    %v148 = vunpack.c.l.b16 %v69
    %v149 = vunpack.c.l.b16 %v70
    %v150 = vunpack.c.l.b16 %v71
    %v151 = vunpack.c.l.b16 %v72
    %v152 = vunpack.c.l.b16 %v73
    %v153 = vunpack.c.l.b16 %v74
    %v154 = vunpack.c.l.b16 %v75
    %v155 = vunpack.c.l.b16 %v76
    %v156 = vunpack.c.l.b16 %v77
    %v157 = vunpack.c.l.b16 %v78
    %v158 = vunpack.c.l.b16 %v79
    %v159 = vunpack.c.l.b16 %v80
    %v160 = vunpack.c.l.b16 %v81
    %v161 = vunpack.c.l.b16 %v82
    %v162 = vunpack.c.l.b16 %v83
    %v163 = vunpack.c.l.b16 %v84
    %v164 = vunpack.c.l.b16 %v85
    %v165 = vunpack.c.l.b16 %v86
    %v166 = vpack.c.b16 %v135, %v134
    %v167 = vpack.c.b16 %v137, %v136
    %v168 = vpack.c.b16 %v139, %v138
    %v169 = vpack.c.b16 %v141, %v140
    %v170 = vpack.c.b16 %v143, %v142
    %v171 = vpack.c.b16 %v145, %v144
    %v172 = vpack.c.b16 %v147, %v146
    %v173 = vpack.c.b16 %v149, %v148
    %v174 = vpack.c.b16 %v151, %v150
    %v175 = vpack.c.b16 %v153, %v152
    %v176 = vpack.c.b16 %v155, %v154
    %v177 = vpack.c.b16 %v157, %v156
    %v178 = vpack.c.b16 %v159, %v158
    %v179 = vpack.c.b16 %v161, %v160
    %v180 = vpack.c.b16 %v163, %v162
    %v181 = vpack.c.b16 %v165, %v164
    %v190 = vunpack.c.l.b16 %v87
    %v191 = vunpack.c.l.b16 %v88
    %v192 = vunpack.c.l.b16 %v89
    %v193 = vunpack.c.l.b16 %v90
    %v194 = vunpack.c.l.b16 %v91
    %v195 = vunpack.c.l.b16 %v92
    %v196 = vunpack.c.l.b16 %v93
    %v197 = vunpack.c.l.b16 %v94
    %v198 = vpack.c.b16 %v191, %v190
    %v199 = vpack.c.b16 %v193, %v192
    %v200 = vpack.c.b16 %v195, %v194
    %v201 = vpack.c.b16 %v197, %v196
    %vm206 = vcmask 523264
    %v208 = vsel %vm206, %v166, 0
    %v211 = vsel %vm206, %v167, 0
    %v214 = vsel %vm206, %v168, 0
    %v217 = vsel %vm206, %v169, 0
    %v220 = vsel %vm206, %v170, 0
    %v223 = vsel %vm206, %v171, 0
    %v226 = vsel %vm206, %v172, 0
    %v229 = vsel %vm206, %v173, 0
    %v232 = vsel %vm206, %v174, 0
    %v235 = vsel %vm206, %v175, 0
    %v238 = vsel %vm206, %v176, 0
    %v241 = vsel %vm206, %v177, 0
    %v244 = vsel %vm206, %v178, 0
    %v247 = vsel %vm206, %v179, 0
    %v250 = vsel %vm206, %v180, 0
    %v253 = vsel %vm206, %v181, 0
    %255 = vmatprep.subr.bf16.mxu0 0
    %256 = vmatpush1.bf16.msra.mxu0 %v198
    %257 = vmatprep.subr.bf16.mxu0 0
    %258 = vmatpush1.bf16.msra.mxu0 %v199
    %259 = vmatprep.subr.bf16.mxu0 0
    %260 = vmatpush1.bf16.msra.mxu0 %v200
    %261 = vmatprep.subr.bf16.mxu0 0
    %262 = vmatpush1.bf16.msra.mxu0 %v201
    %263 = vmatprep.subr.bf16.mxu0 0
    %264 = vmatpush1.bf16.msra.mxu0 0
    %265 = vmatprep.subr.bf16.mxu0 0
    %266 = vmatpush1.bf16.msra.mxu0 0
    %267 = vmatprep.subr.bf16.mxu0 0
    %268 = vmatpush1.bf16.msra.mxu0 0
    %269 = vmatprep.subr.bf16.mxu0 0
    %270 = vmatpush1.bf16.msra.mxu0 0
    %271 = vmatprep.subr.bf16.mxu0 0
    %272 = vmatpush1.bf16.msra.mxu0 0
    %273 = vmatprep.subr.bf16.mxu0 0
    %274 = vmatpush1.bf16.msra.mxu0 0
    %275 = vmatprep.subr.bf16.mxu0 0
    %276 = vmatpush1.bf16.msra.mxu0 0
    %277 = vmatprep.subr.bf16.mxu0 0
    %278 = vmatpush1.bf16.msra.mxu0 0
    %279 = vmatprep.subr.bf16.mxu0 0
    %280 = vmatpush1.bf16.msra.mxu0 0
    %281 = vmatprep.subr.bf16.mxu0 0
    %282 = vmatpush1.bf16.msra.mxu0 0
    %283 = vmatprep.subr.bf16.mxu0 0
    %284 = vmatpush1.bf16.msra.mxu0 0
    %285 = vmatprep.subr.bf16.mxu0 0
    %286 = vmatpush1.bf16.msra.mxu0 0
    %287 = vmatprep.mubr.bf16.mxu0 0
    %288 = vmatmul.mubr.bf16.gmra.mrb[0].mxu0 %v208
    %v289 = vpop.f32.mrb[0].mxu0
    %v290 = vadd.f32 %v100, %v289
    %v291 = vpop.f32.mrb[0].mxu0
    %v292 = vpop.f32.mrb[0].mxu0
    %v293 = vadd.f32 %v100, %v292
    %v294 = vpop.f32.mrb[0].mxu0
    %295 = vmatprep.mubr.bf16.mxu0 0
    %296 = vmatmul.mubr.bf16.gmra.mrb[0].mxu0 %v211
    %v297 = vpop.f32.mrb[0].mxu0
    %v298 = vadd.f32 %v100, %v297
    %v299 = vpop.f32.mrb[0].mxu0
    %v300 = vpop.f32.mrb[0].mxu0
    %v301 = vadd.f32 %v100, %v300
    %v302 = vpop.f32.mrb[0].mxu0
    %303 = vmatprep.mubr.bf16.mxu0 0
    %304 = vmatmul.mubr.bf16.gmra.mrb[0].mxu0 %v214
    %v305 = vpop.f32.mrb[0].mxu0
    %v306 = vadd.f32 %v100, %v305
    %v307 = vpop.f32.mrb[0].mxu0
    %v308 = vpop.f32.mrb[0].mxu0
    %v309 = vadd.f32 %v100, %v308
    %v310 = vpop.f32.mrb[0].mxu0
    %311 = vmatprep.mubr.bf16.mxu0 0
    %312 = vmatmul.mubr.bf16.gmra.mrb[0].mxu0 %v217
    %v313 = vpop.f32.mrb[0].mxu0
    %v314 = vadd.f32 %v100, %v313
    %v315 = vpop.f32.mrb[0].mxu0
    %v316 = vpop.f32.mrb[0].mxu0
    %v317 = vadd.f32 %v100, %v316
    %v318 = vpop.f32.mrb[0].mxu0
    %319 = vmatprep.mubr.bf16.mxu0 0
    %320 = vmatmul.mubr.bf16.gmra.mrb[0].mxu0 %v220
    %v321 = vpop.f32.mrb[0].mxu0
    %v322 = vadd.f32 %v100, %v321
    %v323 = vpop.f32.mrb[0].mxu0
    %v324 = vpop.f32.mrb[0].mxu0
    %v325 = vadd.f32 %v100, %v324
    %v326 = vpop.f32.mrb[0].mxu0
    %327 = vmatprep.mubr.bf16.mxu0 0
    %328 = vmatmul.mubr.bf16.gmra.mrb[0].mxu0 %v223
    %v329 = vpop.f32.mrb[0].mxu0
    %v330 = vadd.f32 %v100, %v329
    %v331 = vpop.f32.mrb[0].mxu0
    %v332 = vpop.f32.mrb[0].mxu0
    %v333 = vadd.f32 %v100, %v332
    %v334 = vpop.f32.mrb[0].mxu0
    %335 = vmatprep.mubr.bf16.mxu0 0
    %336 = vmatmul.mubr.bf16.gmra.mrb[0].mxu0 %v226
    %v337 = vpop.f32.mrb[0].mxu0
    %v338 = vadd.f32 %v100, %v337
    %v339 = vpop.f32.mrb[0].mxu0
    %v340 = vpop.f32.mrb[0].mxu0
    %v341 = vadd.f32 %v100, %v340
    %v342 = vpop.f32.mrb[0].mxu0
    %343 = vmatprep.mubr.bf16.mxu0 0
    %344 = vmatmul.mubr.bf16.gmra.mrb[0].mxu0 %v229
    %v345 = vpop.f32.mrb[0].mxu0
    %v346 = vadd.f32 %v100, %v345
    %v347 = vpop.f32.mrb[0].mxu0
    %v348 = vpop.f32.mrb[0].mxu0
    %v349 = vadd.f32 %v100, %v348
    %v350 = vpop.f32.mrb[0].mxu0
    %351 = vmatprep.mubr.bf16.mxu0 0
    %352 = vmatmul.mubr.bf16.gmra.mrb[0].mxu0 %v232
    %v353 = vpop.f32.mrb[0].mxu0
    %v354 = vadd.f32 %v100, %v353
    %v355 = vpop.f32.mrb[0].mxu0
    %v356 = vpop.f32.mrb[0].mxu0
    %v357 = vadd.f32 %v100, %v356
    %v358 = vpop.f32.mrb[0].mxu0
    %359 = vmatprep.mubr.bf16.mxu0 0
    %360 = vmatmul.mubr.bf16.gmra.mrb[0].mxu0 %v235
    %v361 = vpop.f32.mrb[0].mxu0
    %v362 = vadd.f32 %v100, %v361
    %v363 = vpop.f32.mrb[0].mxu0
    %v364 = vpop.f32.mrb[0].mxu0
    %v365 = vadd.f32 %v100, %v364
    %v366 = vpop.f32.mrb[0].mxu0
    %367 = vmatprep.mubr.bf16.mxu0 0
    %368 = vmatmul.mubr.bf16.gmra.mrb[0].mxu0 %v238
    %v369 = vpop.f32.mrb[0].mxu0
    %v370 = vadd.f32 %v100, %v369
    %v371 = vpop.f32.mrb[0].mxu0
    %v372 = vpop.f32.mrb[0].mxu0
    %v373 = vadd.f32 %v100, %v372
    %v374 = vpop.f32.mrb[0].mxu0
    %375 = vmatprep.mubr.bf16.mxu0 0
    %376 = vmatmul.mubr.bf16.gmra.mrb[0].mxu0 %v241
    %v377 = vpop.f32.mrb[0].mxu0
    %v378 = vadd.f32 %v100, %v377
    %v379 = vpop.f32.mrb[0].mxu0
    %v380 = vpop.f32.mrb[0].mxu0
    %v381 = vadd.f32 %v100, %v380
    %v382 = vpop.f32.mrb[0].mxu0
    %383 = vmatprep.mubr.bf16.mxu0 0
    %384 = vmatmul.mubr.bf16.gmra.mrb[0].mxu0 %v244
    %v385 = vpop.f32.mrb[0].mxu0
    %v386 = vadd.f32 %v100, %v385
    %v387 = vpop.f32.mrb[0].mxu0
    %v388 = vpop.f32.mrb[0].mxu0
    %v389 = vadd.f32 %v100, %v388
    %v390 = vpop.f32.mrb[0].mxu0
    %391 = vmatprep.mubr.bf16.mxu0 0
    %392 = vmatmul.mubr.bf16.gmra.mrb[0].mxu0 %v247
    %v393 = vpop.f32.mrb[0].mxu0
    %v394 = vadd.f32 %v100, %v393
    %v395 = vpop.f32.mrb[0].mxu0
    %v396 = vpop.f32.mrb[0].mxu0
    %v397 = vadd.f32 %v100, %v396
    %v398 = vpop.f32.mrb[0].mxu0
    %399 = vmatprep.mubr.bf16.mxu0 0
    %400 = vmatmul.mubr.bf16.gmra.mrb[0].mxu0 %v250
    %v401 = vpop.f32.mrb[0].mxu0
    %v402 = vadd.f32 %v100, %v401
    %v403 = vpop.f32.mrb[0].mxu0
    %v404 = vpop.f32.mrb[0].mxu0
    %v405 = vadd.f32 %v100, %v404
    %v406 = vpop.f32.mrb[0].mxu0
    %407 = vmatprep.mubr.bf16.mxu0 0
    %408 = vmatmul.mubr.bf16.gmra.mrb[0].mxu0 %v253
    %v409 = vpop.f32.mrb[0].mxu0
    %v410 = vadd.f32 %v100, %v409
    %v411 = vpop.f32.mrb[0].mxu0
    %v412 = vpop.f32.mrb[0].mxu0
    %v413 = vadd.f32 %v100, %v412
    %v414 = vpop.f32.mrb[0].mxu0
    %415 = vdwg.mxu0
    %v416 = vmax.f32 %v290, 0.0
    %v417 = vmax.f32 %v293, 0.0
    %v418 = vmax.f32 %v298, 0.0
    %v419 = vmax.f32 %v301, 0.0
    %v420 = vmax.f32 %v306, 0.0
    %v421 = vmax.f32 %v309, 0.0
    %v422 = vmax.f32 %v314, 0.0
    %v423 = vmax.f32 %v317, 0.0
    %v424 = vmax.f32 %v322, 0.0
    %v425 = vmax.f32 %v325, 0.0
    %v426 = vmax.f32 %v330, 0.0
    %v427 = vmax.f32 %v333, 0.0
    %v428 = vmax.f32 %v338, 0.0
    %v429 = vmax.f32 %v341, 0.0
    %v430 = vmax.f32 %v346, 0.0
    %v431 = vmax.f32 %v349, 0.0
    %v432 = vmax.f32 %v354, 0.0
    %v433 = vmax.f32 %v357, 0.0
    %v434 = vmax.f32 %v362, 0.0
    %v435 = vmax.f32 %v365, 0.0
    %v436 = vmax.f32 %v370, 0.0
    %v437 = vmax.f32 %v373, 0.0
    %v438 = vmax.f32 %v378, 0.0
    %v439 = vmax.f32 %v381, 0.0
    %v440 = vmax.f32 %v386, 0.0
    %v441 = vmax.f32 %v389, 0.0
    %v442 = vmax.f32 %v394, 0.0
    %v443 = vmax.f32 %v397, 0.0
    %v444 = vmax.f32 %v402, 0.0
    %v445 = vmax.f32 %v405, 0.0
    %v446 = vmax.f32 %v410, 0.0
    %v447 = vmax.f32 %v413, 0.0
    %v448 = vpack.c.bf16 %v417, %v416
    %v449 = vpack.c.bf16 %v419, %v418
    %v450 = vpack.c.bf16 %v421, %v420
    %v451 = vpack.c.bf16 %v423, %v422
    %v452 = vpack.c.bf16 %v425, %v424
    %v453 = vpack.c.bf16 %v427, %v426
    %v454 = vpack.c.bf16 %v429, %v428
    %v455 = vpack.c.bf16 %v431, %v430
    %v456 = vpack.c.bf16 %v433, %v432
    %v457 = vpack.c.bf16 %v435, %v434
    %v458 = vpack.c.bf16 %v437, %v436
    %v459 = vpack.c.bf16 %v439, %v438
    %v460 = vpack.c.bf16 %v441, %v440
    %v461 = vpack.c.bf16 %v443, %v442
    %v462 = vpack.c.bf16 %v445, %v444
    %v463 = vpack.c.bf16 %v447, %v446
    %v464 = vld [vmem:[%s4] sm:$0xf]
    %v465 = vld [vmem:[%s4 + $0x4] sm:$0xf]
    %v466 = vld [vmem:[%s4 + $0x8] sm:$0xf]
    %v467 = vld [vmem:[%s4 + $0xc] sm:$0xf]
    %v468 = vld [vmem:[%s4 + $0x10] sm:$0xf]
    %v469 = vld [vmem:[%s4 + $0x14] sm:$0xf]
    %v470 = vld [vmem:[%s4 + $0x18] sm:$0xf]
    %v471 = vld [vmem:[%s4 + $0x1c] sm:$0xf]
    %v472 = vld [vmem:[%s4 + $0x20] sm:$0xf]
    %v473 = vld [vmem:[%s4 + $0x24] sm:$0xf]
    %v474 = vld [vmem:[%s4 + $0x28] sm:$0xf]
    %v475 = vld [vmem:[%s4 + $0x2c] sm:$0xf]
    %v476 = vld [vmem:[%s4 + $0x30] sm:$0xf]
    %v477 = vld [vmem:[%s4 + $0x34] sm:$0xf]
    %v478 = vld [vmem:[%s4 + $0x38] sm:$0xf]
    %v479 = vld [vmem:[%s4 + $0x3c] sm:$0xf]
    %v480 = vld [vmem:[%s5] sm:$0x1]
    %v482 = vlaneseq
    %v483 = vshrl.u32 %v482, 7
    %v484 = vsub.s32 0, %v483
    %v485 = vrot.slane %v480, %v484
    %v503 = vunpack.c.l.b16 %v464
    %v504 = vunpack.c.l.b16 %v465
    %v505 = vunpack.c.l.b16 %v466
    %v506 = vunpack.c.l.b16 %v467
    %v507 = vunpack.c.l.b16 %v468
    %v508 = vunpack.c.l.b16 %v469
    %v509 = vunpack.c.l.b16 %v470
    %v510 = vunpack.c.l.b16 %v471
    %v511 = vunpack.c.l.b16 %v472
    %v512 = vunpack.c.l.b16 %v473
    %v513 = vunpack.c.l.b16 %v474
    %v514 = vunpack.c.l.b16 %v475
    %v515 = vunpack.c.l.b16 %v476
    %v516 = vunpack.c.l.b16 %v477
    %v517 = vunpack.c.l.b16 %v478
    %v518 = vunpack.c.l.b16 %v479
    %v519 = vpack.c.b16 %v504, %v503
    %v520 = vpack.c.b16 %v506, %v505
    %v521 = vpack.c.b16 %v508, %v507
    %v522 = vpack.c.b16 %v510, %v509
    %v523 = vpack.c.b16 %v512, %v511
    %v524 = vpack.c.b16 %v514, %v513
    %v525 = vpack.c.b16 %v516, %v515
    %v526 = vpack.c.b16 %v518, %v517
    %535 = vmatprep.subr.bf16.mxu0 0
    %536 = vmatpush1.bf16.msra.mxu0 %v519
    %537 = vmatprep.subr.bf16.mxu0 0
    %538 = vmatpush1.bf16.msra.mxu0 %v520
    %539 = vmatprep.subr.bf16.mxu0 0
    %540 = vmatpush1.bf16.msra.mxu0 %v521
    %541 = vmatprep.subr.bf16.mxu0 0
    %542 = vmatpush1.bf16.msra.mxu0 %v522
    %543 = vmatprep.subr.bf16.mxu0 0
    %544 = vmatpush1.bf16.msra.mxu0 %v523
    %545 = vmatprep.subr.bf16.mxu0 0
    %546 = vmatpush1.bf16.msra.mxu0 %v524
    %547 = vmatprep.subr.bf16.mxu0 0
    %548 = vmatpush1.bf16.msra.mxu0 %v525
    %549 = vmatprep.subr.bf16.mxu0 0
    %550 = vmatpush1.bf16.msra.mxu0 %v526
    %551 = vmatprep.subr.bf16.mxu0 0
    %552 = vmatpush1.bf16.msra.mxu0 0
    %553 = vmatprep.subr.bf16.mxu0 0
    %554 = vmatpush1.bf16.msra.mxu0 0
    %555 = vmatprep.subr.bf16.mxu0 0
    %556 = vmatpush1.bf16.msra.mxu0 0
    %557 = vmatprep.subr.bf16.mxu0 0
    %558 = vmatpush1.bf16.msra.mxu0 0
    %559 = vmatprep.subr.bf16.mxu0 0
    %560 = vmatpush1.bf16.msra.mxu0 0
    %561 = vmatprep.subr.bf16.mxu0 0
    %562 = vmatpush1.bf16.msra.mxu0 0
    %563 = vmatprep.subr.bf16.mxu0 0
    %564 = vmatpush1.bf16.msra.mxu0 0
    %565 = vmatprep.subr.bf16.mxu0 0
    %566 = vmatpush1.bf16.msra.mxu0 0
    %567 = vmatprep.mubr.bf16.mxu0 0
    %568 = vmatmul.mubr.bf16.gmra.mrb[0].mxu0 %v448
    %v569 = vpop.f32.mrb[0].mxu0
    %v570 = vadd.f32 %v485, %v569
    %v571 = vpop.f32.mrb[0].mxu0
    %v572 = vpop.f32.mrb[0].mxu0
    %v573 = vadd.f32 %v485, %v572
    %v574 = vpop.f32.mrb[0].mxu0
    %575 = vmatprep.mubr.bf16.mxu0 0
    %576 = vmatmul.mubr.bf16.gmra.mrb[0].mxu0 %v449
    %v577 = vpop.f32.mrb[0].mxu0
    %v578 = vadd.f32 %v485, %v577
    %v579 = vpop.f32.mrb[0].mxu0
    %v580 = vpop.f32.mrb[0].mxu0
    %v581 = vadd.f32 %v485, %v580
    %v582 = vpop.f32.mrb[0].mxu0
    %583 = vmatprep.mubr.bf16.mxu0 0
    %584 = vmatmul.mubr.bf16.gmra.mrb[0].mxu0 %v450
    %v585 = vpop.f32.mrb[0].mxu0
    %v586 = vadd.f32 %v485, %v585
    %v587 = vpop.f32.mrb[0].mxu0
    %v588 = vpop.f32.mrb[0].mxu0
    %v589 = vadd.f32 %v485, %v588
    %v590 = vpop.f32.mrb[0].mxu0
    %591 = vmatprep.mubr.bf16.mxu0 0
    %592 = vmatmul.mubr.bf16.gmra.mrb[0].mxu0 %v451
    %v593 = vpop.f32.mrb[0].mxu0
    %v594 = vadd.f32 %v485, %v593
    %v595 = vpop.f32.mrb[0].mxu0
    %v596 = vpop.f32.mrb[0].mxu0
    %v597 = vadd.f32 %v485, %v596
    %v598 = vpop.f32.mrb[0].mxu0
    %599 = vmatprep.mubr.bf16.mxu0 0
    %600 = vmatmul.mubr.bf16.gmra.mrb[0].mxu0 %v452
    %v601 = vpop.f32.mrb[0].mxu0
    %v602 = vadd.f32 %v485, %v601
    %v603 = vpop.f32.mrb[0].mxu0
    %v604 = vpop.f32.mrb[0].mxu0
    %v605 = vadd.f32 %v485, %v604
    %v606 = vpop.f32.mrb[0].mxu0
    %607 = vmatprep.mubr.bf16.mxu0 0
    %608 = vmatmul.mubr.bf16.gmra.mrb[0].mxu0 %v453
    %v609 = vpop.f32.mrb[0].mxu0
    %v610 = vadd.f32 %v485, %v609
    %v611 = vpop.f32.mrb[0].mxu0
    %v612 = vpop.f32.mrb[0].mxu0
    %v613 = vadd.f32 %v485, %v612
    %v614 = vpop.f32.mrb[0].mxu0
    %615 = vmatprep.mubr.bf16.mxu0 0
    %616 = vmatmul.mubr.bf16.gmra.mrb[0].mxu0 %v454
    %v617 = vpop.f32.mrb[0].mxu0
    %v618 = vadd.f32 %v485, %v617
    %v619 = vpop.f32.mrb[0].mxu0
    %v620 = vpop.f32.mrb[0].mxu0
    %v621 = vadd.f32 %v485, %v620
    %v622 = vpop.f32.mrb[0].mxu0
    %623 = vmatprep.mubr.bf16.mxu0 0
    %624 = vmatmul.mubr.bf16.gmra.mrb[0].mxu0 %v455
    %v625 = vpop.f32.mrb[0].mxu0
    %v626 = vadd.f32 %v485, %v625
    %v627 = vpop.f32.mrb[0].mxu0
    %v628 = vpop.f32.mrb[0].mxu0
    %v629 = vadd.f32 %v485, %v628
    %v630 = vpop.f32.mrb[0].mxu0
    %631 = vmatprep.mubr.bf16.mxu0 0
    %632 = vmatmul.mubr.bf16.gmra.mrb[0].mxu0 %v456
    %v633 = vpop.f32.mrb[0].mxu0
    %v634 = vadd.f32 %v485, %v633
    %v635 = vpop.f32.mrb[0].mxu0
    %v636 = vpop.f32.mrb[0].mxu0
    %v637 = vadd.f32 %v485, %v636
    %v638 = vpop.f32.mrb[0].mxu0
    %639 = vmatprep.mubr.bf16.mxu0 0
    %640 = vmatmul.mubr.bf16.gmra.mrb[0].mxu0 %v457
    %v641 = vpop.f32.mrb[0].mxu0
    %v642 = vadd.f32 %v485, %v641
    %v643 = vpop.f32.mrb[0].mxu0
    %v644 = vpop.f32.mrb[0].mxu0
    %v645 = vadd.f32 %v485, %v644
    %v646 = vpop.f32.mrb[0].mxu0
    %647 = vmatprep.mubr.bf16.mxu0 0
    %648 = vmatmul.mubr.bf16.gmra.mrb[0].mxu0 %v458
    %v649 = vpop.f32.mrb[0].mxu0
    %v650 = vadd.f32 %v485, %v649
    %v651 = vpop.f32.mrb[0].mxu0
    %v652 = vpop.f32.mrb[0].mxu0
    %v653 = vadd.f32 %v485, %v652
    %v654 = vpop.f32.mrb[0].mxu0
    %655 = vmatprep.mubr.bf16.mxu0 0
    %656 = vmatmul.mubr.bf16.gmra.mrb[0].mxu0 %v459
    %v657 = vpop.f32.mrb[0].mxu0
    %v658 = vadd.f32 %v485, %v657
    %v659 = vpop.f32.mrb[0].mxu0
    %v660 = vpop.f32.mrb[0].mxu0
    %v661 = vadd.f32 %v485, %v660
    %v662 = vpop.f32.mrb[0].mxu0
    %663 = vmatprep.mubr.bf16.mxu0 0
    %664 = vmatmul.mubr.bf16.gmra.mrb[0].mxu0 %v460
    %v665 = vpop.f32.mrb[0].mxu0
    %v666 = vadd.f32 %v485, %v665
    %v667 = vpop.f32.mrb[0].mxu0
    %v668 = vpop.f32.mrb[0].mxu0
    %v669 = vadd.f32 %v485, %v668
    %v670 = vpop.f32.mrb[0].mxu0
    %671 = vmatprep.mubr.bf16.mxu0 0
    %672 = vmatmul.mubr.bf16.gmra.mrb[0].mxu0 %v461
    %v673 = vpop.f32.mrb[0].mxu0
    %v674 = vadd.f32 %v485, %v673
    %v675 = vpop.f32.mrb[0].mxu0
    %v676 = vpop.f32.mrb[0].mxu0
    %v677 = vadd.f32 %v485, %v676
    %v678 = vpop.f32.mrb[0].mxu0
    %679 = vmatprep.mubr.bf16.mxu0 0
    %680 = vmatmul.mubr.bf16.gmra.mrb[0].mxu0 %v462
    %v681 = vpop.f32.mrb[0].mxu0
    %v682 = vadd.f32 %v485, %v681
    %v683 = vpop.f32.mrb[0].mxu0
    %v684 = vpop.f32.mrb[0].mxu0
    %v685 = vadd.f32 %v485, %v684
    %v686 = vpop.f32.mrb[0].mxu0
    %687 = vmatprep.mubr.bf16.mxu0 0
    %688 = vmatmul.mubr.bf16.gmra.mrb[0].mxu0 %v463
    %v689 = vpop.f32.mrb[0].mxu0
    %v690 = vadd.f32 %v485, %v689
    %v691 = vpop.f32.mrb[0].mxu0
    %v692 = vpop.f32.mrb[0].mxu0
    %v693 = vadd.f32 %v485, %v692
    %v694 = vpop.f32.mrb[0].mxu0
    %695 = vdwg.mxu0
    %v696 = vpack.c.bf16 %v573, %v570
    %v697 = vpack.c.bf16 %v581, %v578
    %v698 = vpack.c.bf16 %v589, %v586
    %v699 = vpack.c.bf16 %v597, %v594
    %v700 = vpack.c.bf16 %v605, %v602
    %v701 = vpack.c.bf16 %v613, %v610
    %v702 = vpack.c.bf16 %v621, %v618
    %v703 = vpack.c.bf16 %v629, %v626
    %v704 = vpack.c.bf16 %v637, %v634
    %v705 = vpack.c.bf16 %v645, %v642
    %v706 = vpack.c.bf16 %v653, %v650
    %v707 = vpack.c.bf16 %v661, %v658
    %v708 = vpack.c.bf16 %v669, %v666
    %v709 = vpack.c.bf16 %v677, %v674
    %v710 = vpack.c.bf16 %v685, %v682
    %v711 = vpack.c.bf16 %v693, %v690
    %v712 = vld [vmem:[#allocation6] sm:$0xff]
    %v713 = vld [vmem:[#allocation6 + $0x8] sm:$0xff]
    %v714 = vld [vmem:[#allocation6 + $0x10] sm:$0xff]
    %v715 = vld [vmem:[#allocation6 + $0x18] sm:$0xff]
    %v716 = vld [vmem:[#allocation6 + $0x20] sm:$0xff]
    %v717 = vld [vmem:[#allocation6 + $0x28] sm:$0xff]
    %v718 = vld [vmem:[#allocation6 + $0x30] sm:$0xff]
    %v719 = vld [vmem:[#allocation6 + $0x38] sm:$0xff]
    %v720 = vld [vmem:[#allocation6 + $0x40] sm:$0xff]
    %v721 = vld [vmem:[#allocation6 + $0x48] sm:$0xff]
    %v722 = vld [vmem:[#allocation6 + $0x50] sm:$0xff]
    %v723 = vld [vmem:[#allocation6 + $0x58] sm:$0xff]
    %v724 = vld [vmem:[#allocation6 + $0x60] sm:$0xff]
    %v725 = vld [vmem:[#allocation6 + $0x68] sm:$0xff]
    %v726 = vld [vmem:[#allocation6 + $0x70] sm:$0xff]
    %v727 = vld [vmem:[#allocation6 + $0x78] sm:$0xff]
    %v728 = vld [vmem:[#allocation6 + $0x80] sm:$0xff]
    %v729 = vld [vmem:[#allocation6 + $0x88] sm:$0xff]
    %v730 = vld [vmem:[#allocation6 + $0x90] sm:$0xff]
    %v731 = vld [vmem:[#allocation6 + $0x98] sm:$0xff]
    %v732 = vld [vmem:[#allocation6 + $0xa0] sm:$0xff]
    %v733 = vld [vmem:[#allocation6 + $0xa8] sm:$0xff]
    %v734 = vld [vmem:[#allocation6 + $0xb0] sm:$0xff]
    %v735 = vld [vmem:[#allocation6 + $0xb8] sm:$0xff]
    %v736 = vld [vmem:[#allocation6 + $0xc0] sm:$0xff]
    %v737 = vld [vmem:[#allocation6 + $0xc8] sm:$0xff]
    %v738 = vld [vmem:[#allocation6 + $0xd0] sm:$0xff]
    %v739 = vld [vmem:[#allocation6 + $0xd8] sm:$0xff]
    %v740 = vld [vmem:[#allocation6 + $0xe0] sm:$0xff]
    %v741 = vld [vmem:[#allocation6 + $0xe8] sm:$0xff]
    %v742 = vld [vmem:[#allocation6 + $0xf0] sm:$0xff]
    %v743 = vld [vmem:[#allocation6 + $0xf8] sm:$0xff]
    %s744 = sld [smem:[#allocation2]]
    %v745 = vunpack.c.l.bf16 %v696
    %v746 = vunpack.c.h.bf16 %v696
    %v747 = vunpack.c.l.bf16 %v697
    %v748 = vunpack.c.h.bf16 %v697
    %v749 = vunpack.c.l.bf16 %v698
    %v750 = vunpack.c.h.bf16 %v698
    %v751 = vunpack.c.l.bf16 %v699
    %v752 = vunpack.c.h.bf16 %v699
    %v753 = vunpack.c.l.bf16 %v700
    %v754 = vunpack.c.h.bf16 %v700
    %v755 = vunpack.c.l.bf16 %v701
    %v756 = vunpack.c.h.bf16 %v701
    %v757 = vunpack.c.l.bf16 %v702
    %v758 = vunpack.c.h.bf16 %v702
    %v759 = vunpack.c.l.bf16 %v703
    %v760 = vunpack.c.h.bf16 %v703
    %v761 = vunpack.c.l.bf16 %v704
    %v762 = vunpack.c.h.bf16 %v704
    %v763 = vunpack.c.l.bf16 %v705
    %v764 = vunpack.c.h.bf16 %v705
    %v765 = vunpack.c.l.bf16 %v706
    %v766 = vunpack.c.h.bf16 %v706
    %v767 = vunpack.c.l.bf16 %v707
    %v768 = vunpack.c.h.bf16 %v707
    %v769 = vunpack.c.l.bf16 %v708
    %v770 = vunpack.c.h.bf16 %v708
    %v771 = vunpack.c.l.bf16 %v709
    %v772 = vunpack.c.h.bf16 %v709
    %v773 = vunpack.c.l.bf16 %v710
    %v774 = vunpack.c.h.bf16 %v710
    %v775 = vunpack.c.l.bf16 %v711
    %v776 = vunpack.c.h.bf16 %v711
    %v777 = vstv %s744
    %v778 = vmul.f32 %v777, %v745
    %v779 = vmul.f32 %v777, %v746
    %v780 = vmul.f32 %v777, %v747
    %v781 = vmul.f32 %v777, %v748
    %v782 = vmul.f32 %v777, %v749
    %v783 = vmul.f32 %v777, %v750
    %v784 = vmul.f32 %v777, %v751
    %v785 = vmul.f32 %v777, %v752
    %v786 = vmul.f32 %v777, %v753
    %v787 = vmul.f32 %v777, %v754
    %v788 = vmul.f32 %v777, %v755
    %v789 = vmul.f32 %v777, %v756
    %v790 = vmul.f32 %v777, %v757
    %v791 = vmul.f32 %v777, %v758
    %v792 = vmul.f32 %v777, %v759
    %v793 = vmul.f32 %v777, %v760
    %v794 = vmul.f32 %v777, %v761
    %v795 = vmul.f32 %v777, %v762
    %v796 = vmul.f32 %v777, %v763
    %v797 = vmul.f32 %v777, %v764
    %v798 = vmul.f32 %v777, %v765
    %v799 = vmul.f32 %v777, %v766
    %v800 = vmul.f32 %v777, %v767
    %v801 = vmul.f32 %v777, %v768
    %v802 = vmul.f32 %v777, %v769
    %v803 = vmul.f32 %v777, %v770
    %v804 = vmul.f32 %v777, %v771
    %v805 = vmul.f32 %v777, %v772
    %v806 = vmul.f32 %v777, %v773
    %v807 = vmul.f32 %v777, %v774
    %v808 = vmul.f32 %v777, %v775
    %v809 = vmul.f32 %v777, %v776
    %v842 = vunpack.c.l.b16 %v712
    %v843 = vunpack.c.h.b16 %v712
    %v844 = vunpack.c.l.b16 %v713
    %v845 = vunpack.c.h.b16 %v713
    %v846 = vunpack.c.l.b16 %v714
    %v847 = vunpack.c.h.b16 %v714
    %v848 = vunpack.c.l.b16 %v715
    %v849 = vunpack.c.h.b16 %v715
    %v850 = vunpack.c.l.b16 %v716
    %v851 = vunpack.c.h.b16 %v716
    %v852 = vunpack.c.l.b16 %v717
    %v853 = vunpack.c.h.b16 %v717
    %v854 = vunpack.c.l.b16 %v718
    %v855 = vunpack.c.h.b16 %v718
    %v856 = vunpack.c.l.b16 %v719
    %v857 = vunpack.c.h.b16 %v719
    %v858 = vunpack.c.l.b16 %v720
    %v859 = vunpack.c.h.b16 %v720
    %v860 = vunpack.c.l.b16 %v721
    %v861 = vunpack.c.h.b16 %v721
    %v862 = vunpack.c.l.b16 %v722
    %v863 = vunpack.c.h.b16 %v722
    %v864 = vunpack.c.l.b16 %v723
    %v865 = vunpack.c.h.b16 %v723
    %v866 = vunpack.c.l.b16 %v724
    %v867 = vunpack.c.h.b16 %v724
    %v868 = vunpack.c.l.b16 %v725
    %v869 = vunpack.c.h.b16 %v725
    %v870 = vunpack.c.l.b16 %v726
    %v871 = vunpack.c.h.b16 %v726
    %v872 = vunpack.c.l.b16 %v727
    %v873 = vunpack.c.h.b16 %v727
    %v874 = vunpack.c.l.b16 %v728
    %v875 = vunpack.c.h.b16 %v728
    %v876 = vunpack.c.l.b16 %v729
    %v877 = vunpack.c.h.b16 %v729
    %v878 = vunpack.c.l.b16 %v730
    %v879 = vunpack.c.h.b16 %v730
    %v880 = vunpack.c.l.b16 %v731
    %v881 = vunpack.c.h.b16 %v731
    %v882 = vunpack.c.l.b16 %v732
    %v883 = vunpack.c.h.b16 %v732
    %v884 = vunpack.c.l.b16 %v733
    %v885 = vunpack.c.h.b16 %v733
    %v886 = vunpack.c.l.b16 %v734
    %v887 = vunpack.c.h.b16 %v734
    %v888 = vunpack.c.l.b16 %v735
    %v889 = vunpack.c.h.b16 %v735
    %v890 = vunpack.c.l.b16 %v736
    %v891 = vunpack.c.h.b16 %v736
    %v892 = vunpack.c.l.b16 %v737
    %v893 = vunpack.c.h.b16 %v737
    %v894 = vunpack.c.l.b16 %v738
    %v895 = vunpack.c.h.b16 %v738
    %v896 = vunpack.c.l.b16 %v739
    %v897 = vunpack.c.h.b16 %v739
    %v898 = vunpack.c.l.b16 %v740
    %v899 = vunpack.c.h.b16 %v740
    %v900 = vunpack.c.l.b16 %v741
    %v901 = vunpack.c.h.b16 %v741
    %v902 = vunpack.c.l.b16 %v742
    %v903 = vunpack.c.h.b16 %v742
    %v904 = vunpack.c.l.b16 %v743
    %v905 = vunpack.c.h.b16 %v743
    %v906 = vpack.c.b16 %v844, %v842
    %v907 = vpack.c.b16 %v845, %v843
    %v908 = vpack.c.b16 %v848, %v846
    %v909 = vpack.c.b16 %v849, %v847
    %v910 = vpack.c.b16 %v852, %v850
    %v911 = vpack.c.b16 %v853, %v851
    %v912 = vpack.c.b16 %v856, %v854
    %v913 = vpack.c.b16 %v857, %v855
    %v914 = vpack.c.b16 %v860, %v858
    %v915 = vpack.c.b16 %v861, %v859
    %v916 = vpack.c.b16 %v864, %v862
    %v917 = vpack.c.b16 %v865, %v863
    %v918 = vpack.c.b16 %v868, %v866
    %v919 = vpack.c.b16 %v869, %v867
    %v920 = vpack.c.b16 %v872, %v870
    %v921 = vpack.c.b16 %v873, %v871
    %v922 = vpack.c.b16 %v876, %v874
    %v923 = vpack.c.b16 %v877, %v875
    %v924 = vpack.c.b16 %v880, %v878
    %v925 = vpack.c.b16 %v881, %v879
    %v926 = vpack.c.b16 %v884, %v882
    %v927 = vpack.c.b16 %v885, %v883
    %v928 = vpack.c.b16 %v888, %v886
    %v929 = vpack.c.b16 %v889, %v887
    %v930 = vpack.c.b16 %v892, %v890
    %v931 = vpack.c.b16 %v893, %v891
    %v932 = vpack.c.b16 %v896, %v894
    %v933 = vpack.c.b16 %v897, %v895
    %v934 = vpack.c.b16 %v900, %v898
    %v935 = vpack.c.b16 %v901, %v899
    %v936 = vpack.c.b16 %v904, %v902
    %v937 = vpack.c.b16 %v905, %v903
    %970 = vmatprep.subr.bf16.mxu0 0
    %971 = vmatpush1.bf16.msra.mxu0 %v696
    %972 = vmatprep.subr.bf16.mxu0 0
    %973 = vmatpush1.bf16.msra.mxu0 %v697
    %974 = vmatprep.subr.bf16.mxu0 0
    %975 = vmatpush1.bf16.msra.mxu0 %v698
    %976 = vmatprep.subr.bf16.mxu0 0
    %977 = vmatpush1.bf16.msra.mxu0 %v699
    %978 = vmatprep.subr.bf16.mxu0 0
    %979 = vmatpush1.bf16.msra.mxu0 %v700
    %980 = vmatprep.subr.bf16.mxu0 0
    %981 = vmatpush1.bf16.msra.mxu0 %v701
    %982 = vmatprep.subr.bf16.mxu0 0
    %983 = vmatpush1.bf16.msra.mxu0 %v702
    %984 = vmatprep.subr.bf16.mxu0 0
    %985 = vmatpush1.bf16.msra.mxu0 %v703
    %986 = vmatprep.subr.bf16.mxu0 0
    %987 = vmatpush1.bf16.msra.mxu0 %v704
    %988 = vmatprep.subr.bf16.mxu0 0
    %989 = vmatpush1.bf16.msra.mxu0 %v705
    %990 = vmatprep.subr.bf16.mxu0 0
    %991 = vmatpush1.bf16.msra.mxu0 %v706
    %992 = vmatprep.subr.bf16.mxu0 0
    %993 = vmatpush1.bf16.msra.mxu0 %v707
    %994 = vmatprep.subr.bf16.mxu0 0
    %995 = vmatpush1.bf16.msra.mxu0 %v708
    %996 = vmatprep.subr.bf16.mxu0 0
    %997 = vmatpush1.bf16.msra.mxu0 %v709
    %998 = vmatprep.subr.bf16.mxu0 0
    %999 = vmatpush1.bf16.msra.mxu0 %v710
    %1000 = vmatprep.subr.bf16.mxu0 0
    %1001 = vmatpush1.bf16.msra.mxu0 %v711
    %1002 = vmatprep.mubr.bf16.mxu0 %v907
    %1003 = vmatmul.mubr.bf16.gmra.mrb[0].mxu0 %v906
    %v1004 = vpop.f32.mrb[0].mxu0
    %v1005 = vadd.f32 0.0, %v1004
    %v1006 = vpop.f32.mrb[0].mxu0
    %v1007 = vpop.f32.mrb[0].mxu0
    %v1008 = vadd.f32 0.0, %v1007
    %v1009 = vpop.f32.mrb[0].mxu0
    %1010 = vmatprep.mubr.bf16.mxu0 %v909
    %1011 = vmatmul.mubr.bf16.gmra.mrb[0].mxu0 %v908
    %v1012 = vpop.f32.mrb[0].mxu0
    %v1013 = vadd.f32 0.0, %v1012
    %v1014 = vpop.f32.mrb[0].mxu0
    %v1015 = vpop.f32.mrb[0].mxu0
    %v1016 = vadd.f32 0.0, %v1015
    %v1017 = vpop.f32.mrb[0].mxu0
    %1018 = vmatprep.mubr.bf16.mxu0 %v911
    %1019 = vmatmul.mubr.bf16.gmra.mrb[0].mxu0 %v910
    %v1020 = vpop.f32.mrb[0].mxu0
    %v1021 = vadd.f32 0.0, %v1020
    %v1022 = vpop.f32.mrb[0].mxu0
    %v1023 = vpop.f32.mrb[0].mxu0
    %v1024 = vadd.f32 0.0, %v1023
    %v1025 = vpop.f32.mrb[0].mxu0
    %1026 = vmatprep.mubr.bf16.mxu0 %v913
    %1027 = vmatmul.mubr.bf16.gmra.mrb[0].mxu0 %v912
    %v1028 = vpop.f32.mrb[0].mxu0
    %v1029 = vadd.f32 0.0, %v1028
    %v1030 = vpop.f32.mrb[0].mxu0
    %v1031 = vpop.f32.mrb[0].mxu0
    %v1032 = vadd.f32 0.0, %v1031
    %v1033 = vpop.f32.mrb[0].mxu0
    %1034 = vmatprep.mubr.bf16.mxu0 %v915
    %1035 = vmatmul.mubr.bf16.gmra.mrb[0].mxu0 %v914
    %v1036 = vpop.f32.mrb[0].mxu0
    %v1037 = vadd.f32 0.0, %v1036
    %v1038 = vpop.f32.mrb[0].mxu0
    %v1039 = vpop.f32.mrb[0].mxu0
    %v1040 = vadd.f32 0.0, %v1039
    %v1041 = vpop.f32.mrb[0].mxu0
    %1042 = vmatprep.mubr.bf16.mxu0 %v917
    %1043 = vmatmul.mubr.bf16.gmra.mrb[0].mxu0 %v916
    %v1044 = vpop.f32.mrb[0].mxu0
    %v1045 = vadd.f32 0.0, %v1044
    %v1046 = vpop.f32.mrb[0].mxu0
    %v1047 = vpop.f32.mrb[0].mxu0
    %v1048 = vadd.f32 0.0, %v1047
    %v1049 = vpop.f32.mrb[0].mxu0
    %1050 = vmatprep.mubr.bf16.mxu0 %v919
    %1051 = vmatmul.mubr.bf16.gmra.mrb[0].mxu0 %v918
    %v1052 = vpop.f32.mrb[0].mxu0
    %v1053 = vadd.f32 0.0, %v1052
    %v1054 = vpop.f32.mrb[0].mxu0
    %v1055 = vpop.f32.mrb[0].mxu0
    %v1056 = vadd.f32 0.0, %v1055
    %v1057 = vpop.f32.mrb[0].mxu0
    %1058 = vmatprep.mubr.bf16.mxu0 %v921
    %1059 = vmatmul.mubr.bf16.gmra.mrb[0].mxu0 %v920
    %v1060 = vpop.f32.mrb[0].mxu0
    %v1061 = vadd.f32 0.0, %v1060
    %v1062 = vpop.f32.mrb[0].mxu0
    %v1063 = vpop.f32.mrb[0].mxu0
    %v1064 = vadd.f32 0.0, %v1063
    %v1065 = vpop.f32.mrb[0].mxu0
    %1066 = vmatprep.mubr.bf16.mxu0 %v923
    %1067 = vmatmul.mubr.bf16.gmra.mrb[0].mxu0 %v922
    %v1068 = vpop.f32.mrb[0].mxu0
    %v1069 = vadd.f32 0.0, %v1068
    %v1070 = vpop.f32.mrb[0].mxu0
    %v1071 = vpop.f32.mrb[0].mxu0
    %v1072 = vadd.f32 0.0, %v1071
    %v1073 = vpop.f32.mrb[0].mxu0
    %1074 = vmatprep.mubr.bf16.mxu0 %v925
    %1075 = vmatmul.mubr.bf16.gmra.mrb[0].mxu0 %v924
    %v1076 = vpop.f32.mrb[0].mxu0
    %v1077 = vadd.f32 0.0, %v1076
    %v1078 = vpop.f32.mrb[0].mxu0
    %v1079 = vpop.f32.mrb[0].mxu0
    %v1080 = vadd.f32 0.0, %v1079
    %v1081 = vpop.f32.mrb[0].mxu0
    %1082 = vmatprep.mubr.bf16.mxu0 %v927
    %1083 = vmatmul.mubr.bf16.gmra.mrb[0].mxu0 %v926
    %v1084 = vpop.f32.mrb[0].mxu0
    %v1085 = vadd.f32 0.0, %v1084
    %v1086 = vpop.f32.mrb[0].mxu0
    %v1087 = vpop.f32.mrb[0].mxu0
    %v1088 = vadd.f32 0.0, %v1087
    %v1089 = vpop.f32.mrb[0].mxu0
    %1090 = vmatprep.mubr.bf16.mxu0 %v929
    %1091 = vmatmul.mubr.bf16.gmra.mrb[0].mxu0 %v928
    %v1092 = vpop.f32.mrb[0].mxu0
    %v1093 = vadd.f32 0.0, %v1092
    %v1094 = vpop.f32.mrb[0].mxu0
    %v1095 = vpop.f32.mrb[0].mxu0
    %v1096 = vadd.f32 0.0, %v1095
    %v1097 = vpop.f32.mrb[0].mxu0
    %1098 = vmatprep.mubr.bf16.mxu0 %v931
    %1099 = vmatmul.mubr.bf16.gmra.mrb[0].mxu0 %v930
    %v1100 = vpop.f32.mrb[0].mxu0
    %v1101 = vadd.f32 0.0, %v1100
    %v1102 = vpop.f32.mrb[0].mxu0
    %v1103 = vpop.f32.mrb[0].mxu0
    %v1104 = vadd.f32 0.0, %v1103
    %v1105 = vpop.f32.mrb[0].mxu0
    %1106 = vmatprep.mubr.bf16.mxu0 %v933
    %1107 = vmatmul.mubr.bf16.gmra.mrb[0].mxu0 %v932
    %v1108 = vpop.f32.mrb[0].mxu0
    %v1109 = vadd.f32 0.0, %v1108
    %v1110 = vpop.f32.mrb[0].mxu0
    %v1111 = vpop.f32.mrb[0].mxu0
    %v1112 = vadd.f32 0.0, %v1111
    %v1113 = vpop.f32.mrb[0].mxu0
    %1114 = vmatprep.mubr.bf16.mxu0 %v935
    %1115 = vmatmul.mubr.bf16.gmra.mrb[0].mxu0 %v934
    %v1116 = vpop.f32.mrb[0].mxu0
    %v1117 = vadd.f32 0.0, %v1116
    %v1118 = vpop.f32.mrb[0].mxu0
    %v1119 = vpop.f32.mrb[0].mxu0
    %v1120 = vadd.f32 0.0, %v1119
    %v1121 = vpop.f32.mrb[0].mxu0
    %1122 = vmatprep.mubr.bf16.mxu0 %v937
    %1123 = vmatmul.mubr.bf16.gmra.mrb[0].mxu0 %v936
    %v1124 = vpop.f32.mrb[0].mxu0
    %v1125 = vadd.f32 0.0, %v1124
    %v1126 = vpop.f32.mrb[0].mxu0
    %v1127 = vpop.f32.mrb[0].mxu0
    %v1128 = vadd.f32 0.0, %v1127
    %v1129 = vpop.f32.mrb[0].mxu0
    %1130 = vdwg.mxu0
    %s1131 = sld [smem:[#allocation2 + $0x1]]
    %v1132 = vstv %s1131
    %v1133 = vmul.f32 %v1132, %v1005
    %v1134 = vmul.f32 %v1132, %v1008
    %v1135 = vmul.f32 %v1132, %v1013
    %v1136 = vmul.f32 %v1132, %v1016
    %v1137 = vmul.f32 %v1132, %v1021
    %v1138 = vmul.f32 %v1132, %v1024
    %v1139 = vmul.f32 %v1132, %v1029
    %v1140 = vmul.f32 %v1132, %v1032
    %v1141 = vmul.f32 %v1132, %v1037
    %v1142 = vmul.f32 %v1132, %v1040
    %v1143 = vmul.f32 %v1132, %v1045
    %v1144 = vmul.f32 %v1132, %v1048
    %v1145 = vmul.f32 %v1132, %v1053
    %v1146 = vmul.f32 %v1132, %v1056
    %v1147 = vmul.f32 %v1132, %v1061
    %v1148 = vmul.f32 %v1132, %v1064
    %v1149 = vmul.f32 %v1132, %v1069
    %v1150 = vmul.f32 %v1132, %v1072
    %v1151 = vmul.f32 %v1132, %v1077
    %v1152 = vmul.f32 %v1132, %v1080
    %v1153 = vmul.f32 %v1132, %v1085
    %v1154 = vmul.f32 %v1132, %v1088
    %v1155 = vmul.f32 %v1132, %v1093
    %v1156 = vmul.f32 %v1132, %v1096
    %v1157 = vmul.f32 %v1132, %v1101
    %v1158 = vmul.f32 %v1132, %v1104
    %v1159 = vmul.f32 %v1132, %v1109
    %v1160 = vmul.f32 %v1132, %v1112
    %v1161 = vmul.f32 %v1132, %v1117
    %v1162 = vmul.f32 %v1132, %v1120
    %v1163 = vmul.f32 %v1132, %v1125
    %v1164 = vmul.f32 %v1132, %v1128
    %v1165 = vadd.f32 %v778, %v1133
    %v1166 = vadd.f32 %v779, %v1134
    %v1167 = vadd.f32 %v780, %v1135
    %v1168 = vadd.f32 %v781, %v1136
    %v1169 = vadd.f32 %v782, %v1137
    %v1170 = vadd.f32 %v783, %v1138
    %v1171 = vadd.f32 %v784, %v1139
    %v1172 = vadd.f32 %v785, %v1140
    %v1173 = vadd.f32 %v786, %v1141
    %v1174 = vadd.f32 %v787, %v1142
    %v1175 = vadd.f32 %v788, %v1143
    %v1176 = vadd.f32 %v789, %v1144
    %v1177 = vadd.f32 %v790, %v1145
    %v1178 = vadd.f32 %v791, %v1146
    %v1179 = vadd.f32 %v792, %v1147
    %v1180 = vadd.f32 %v793, %v1148
    %v1181 = vadd.f32 %v794, %v1149
    %v1182 = vadd.f32 %v795, %v1150
    %v1183 = vadd.f32 %v796, %v1151
    %v1184 = vadd.f32 %v797, %v1152
    %v1185 = vadd.f32 %v798, %v1153
    %v1186 = vadd.f32 %v799, %v1154
    %v1187 = vadd.f32 %v800, %v1155
    %v1188 = vadd.f32 %v801, %v1156
    %v1189 = vadd.f32 %v802, %v1157
    %v1190 = vadd.f32 %v803, %v1158
    %v1191 = vadd.f32 %v804, %v1159
    %v1192 = vadd.f32 %v805, %v1160
    %v1193 = vadd.f32 %v806, %v1161
    %v1194 = vadd.f32 %v807, %v1162
    %v1195 = vadd.f32 %v808, %v1163
    %v1196 = vadd.f32 %v809, %v1164
    %v1197 = vpack.c.bf16 %v1008, %v1005
    %v1198 = vpack.c.bf16 %v1016, %v1013
    %v1199 = vpack.c.bf16 %v1024, %v1021
    %v1200 = vpack.c.bf16 %v1032, %v1029
    %v1201 = vpack.c.bf16 %v1040, %v1037
    %v1202 = vpack.c.bf16 %v1048, %v1045
    %v1203 = vpack.c.bf16 %v1056, %v1053
    %v1204 = vpack.c.bf16 %v1064, %v1061
    %v1205 = vpack.c.bf16 %v1072, %v1069
    %v1206 = vpack.c.bf16 %v1080, %v1077
    %v1207 = vpack.c.bf16 %v1088, %v1085
    %v1208 = vpack.c.bf16 %v1096, %v1093
    %v1209 = vpack.c.bf16 %v1104, %v1101
    %v1210 = vpack.c.bf16 %v1112, %v1109
    %v1211 = vpack.c.bf16 %v1120, %v1117
    %v1212 = vpack.c.bf16 %v1128, %v1125
    %1213 = vmatprep.subr.bf16.mxu0 0
    %1214 = vmatpush1.bf16.msra.mxu0 %v1197
    %1215 = vmatprep.subr.bf16.mxu0 0
    %1216 = vmatpush1.bf16.msra.mxu0 %v1198
    %1217 = vmatprep.subr.bf16.mxu0 0
    %1218 = vmatpush1.bf16.msra.mxu0 %v1199
    %1219 = vmatprep.subr.bf16.mxu0 0
    %1220 = vmatpush1.bf16.msra.mxu0 %v1200
    %1221 = vmatprep.subr.bf16.mxu0 0
    %1222 = vmatpush1.bf16.msra.mxu0 %v1201
    %1223 = vmatprep.subr.bf16.mxu0 0
    %1224 = vmatpush1.bf16.msra.mxu0 %v1202
    %1225 = vmatprep.subr.bf16.mxu0 0
    %1226 = vmatpush1.bf16.msra.mxu0 %v1203
    %1227 = vmatprep.subr.bf16.mxu0 0
    %1228 = vmatpush1.bf16.msra.mxu0 %v1204
    %1229 = vmatprep.subr.bf16.mxu0 0
    %1230 = vmatpush1.bf16.msra.mxu0 %v1205
    %1231 = vmatprep.subr.bf16.mxu0 0
    %1232 = vmatpush1.bf16.msra.mxu0 %v1206
    %1233 = vmatprep.subr.bf16.mxu0 0
    %1234 = vmatpush1.bf16.msra.mxu0 %v1207
    %1235 = vmatprep.subr.bf16.mxu0 0
    %1236 = vmatpush1.bf16.msra.mxu0 %v1208
    %1237 = vmatprep.subr.bf16.mxu0 0
    %1238 = vmatpush1.bf16.msra.mxu0 %v1209
    %1239 = vmatprep.subr.bf16.mxu0 0
    %1240 = vmatpush1.bf16.msra.mxu0 %v1210
    %1241 = vmatprep.subr.bf16.mxu0 0
    %1242 = vmatpush1.bf16.msra.mxu0 %v1211
    %1243 = vmatprep.subr.bf16.mxu0 0
    %1244 = vmatpush1.bf16.msra.mxu0 %v1212
    %1245 = vmatprep.mubr.bf16.mxu0 %v907
    %1246 = vmatmul.mubr.bf16.gmra.mrb[0].mxu0 %v906
    %v1247 = vpop.f32.mrb[0].mxu0
    %v1248 = vadd.f32 0.0, %v1247
    %v1249 = vpop.f32.mrb[0].mxu0
    %v1250 = vpop.f32.mrb[0].mxu0
    %v1251 = vadd.f32 0.0, %v1250
    %v1252 = vpop.f32.mrb[0].mxu0
    %1253 = vmatprep.mubr.bf16.mxu0 %v909
    %1254 = vmatmul.mubr.bf16.gmra.mrb[0].mxu0 %v908
    %v1255 = vpop.f32.mrb[0].mxu0
    %v1256 = vadd.f32 0.0, %v1255
    %v1257 = vpop.f32.mrb[0].mxu0
    %v1258 = vpop.f32.mrb[0].mxu0
    %v1259 = vadd.f32 0.0, %v1258
    %v1260 = vpop.f32.mrb[0].mxu0
    %1261 = vmatprep.mubr.bf16.mxu0 %v911
    %1262 = vmatmul.mubr.bf16.gmra.mrb[0].mxu0 %v910
    %v1263 = vpop.f32.mrb[0].mxu0
    %v1264 = vadd.f32 0.0, %v1263
    %v1265 = vpop.f32.mrb[0].mxu0
    %v1266 = vpop.f32.mrb[0].mxu0
    %v1267 = vadd.f32 0.0, %v1266
    %v1268 = vpop.f32.mrb[0].mxu0
    %1269 = vmatprep.mubr.bf16.mxu0 %v913
    %1270 = vmatmul.mubr.bf16.gmra.mrb[0].mxu0 %v912
    %v1271 = vpop.f32.mrb[0].mxu0
    %v1272 = vadd.f32 0.0, %v1271
    %v1273 = vpop.f32.mrb[0].mxu0
    %v1274 = vpop.f32.mrb[0].mxu0
    %v1275 = vadd.f32 0.0, %v1274
    %v1276 = vpop.f32.mrb[0].mxu0
    %1277 = vmatprep.mubr.bf16.mxu0 %v915
    %1278 = vmatmul.mubr.bf16.gmra.mrb[0].mxu0 %v914
    %v1279 = vpop.f32.mrb[0].mxu0
    %v1280 = vadd.f32 0.0, %v1279
    %v1281 = vpop.f32.mrb[0].mxu0
    %v1282 = vpop.f32.mrb[0].mxu0
    %v1283 = vadd.f32 0.0, %v1282
    %v1284 = vpop.f32.mrb[0].mxu0
    %1285 = vmatprep.mubr.bf16.mxu0 %v917
    %1286 = vmatmul.mubr.bf16.gmra.mrb[0].mxu0 %v916
    %v1287 = vpop.f32.mrb[0].mxu0
    %v1288 = vadd.f32 0.0, %v1287
    %v1289 = vpop.f32.mrb[0].mxu0
    %v1290 = vpop.f32.mrb[0].mxu0
    %v1291 = vadd.f32 0.0, %v1290
    %v1292 = vpop.f32.mrb[0].mxu0
    %1293 = vmatprep.mubr.bf16.mxu0 %v919
    %1294 = vmatmul.mubr.bf16.gmra.mrb[0].mxu0 %v918
    %v1295 = vpop.f32.mrb[0].mxu0
    %v1296 = vadd.f32 0.0, %v1295
    %v1297 = vpop.f32.mrb[0].mxu0
    %v1298 = vpop.f32.mrb[0].mxu0
    %v1299 = vadd.f32 0.0, %v1298
    %v1300 = vpop.f32.mrb[0].mxu0
    %1301 = vmatprep.mubr.bf16.mxu0 %v921
    %1302 = vmatmul.mubr.bf16.gmra.mrb[0].mxu0 %v920
    %v1303 = vpop.f32.mrb[0].mxu0
    %v1304 = vadd.f32 0.0, %v1303
    %v1305 = vpop.f32.mrb[0].mxu0
    %v1306 = vpop.f32.mrb[0].mxu0
    %v1307 = vadd.f32 0.0, %v1306
    %v1308 = vpop.f32.mrb[0].mxu0
    %1309 = vmatprep.mubr.bf16.mxu0 %v923
    %1310 = vmatmul.mubr.bf16.gmra.mrb[0].mxu0 %v922
    %v1311 = vpop.f32.mrb[0].mxu0
    %v1312 = vadd.f32 0.0, %v1311
    %v1313 = vpop.f32.mrb[0].mxu0
    %v1314 = vpop.f32.mrb[0].mxu0
    %v1315 = vadd.f32 0.0, %v1314
    %v1316 = vpop.f32.mrb[0].mxu0
    %1317 = vmatprep.mubr.bf16.mxu0 %v925
    %1318 = vmatmul.mubr.bf16.gmra.mrb[0].mxu0 %v924
    %v1319 = vpop.f32.mrb[0].mxu0
    %v1320 = vadd.f32 0.0, %v1319
    %v1321 = vpop.f32.mrb[0].mxu0
    %v1322 = vpop.f32.mrb[0].mxu0
    %v1323 = vadd.f32 0.0, %v1322
    %v1324 = vpop.f32.mrb[0].mxu0
    %1325 = vmatprep.mubr.bf16.mxu0 %v927
    %1326 = vmatmul.mubr.bf16.gmra.mrb[0].mxu0 %v926
    %v1327 = vpop.f32.mrb[0].mxu0
    %v1328 = vadd.f32 0.0, %v1327
    %v1329 = vpop.f32.mrb[0].mxu0
    %v1330 = vpop.f32.mrb[0].mxu0
    %v1331 = vadd.f32 0.0, %v1330
    %v1332 = vpop.f32.mrb[0].mxu0
    %1333 = vmatprep.mubr.bf16.mxu0 %v929
    %1334 = vmatmul.mubr.bf16.gmra.mrb[0].mxu0 %v928
    %v1335 = vpop.f32.mrb[0].mxu0
    %v1336 = vadd.f32 0.0, %v1335
    %v1337 = vpop.f32.mrb[0].mxu0
    %v1338 = vpop.f32.mrb[0].mxu0
    %v1339 = vadd.f32 0.0, %v1338
    %v1340 = vpop.f32.mrb[0].mxu0
    %1341 = vmatprep.mubr.bf16.mxu0 %v931
    %1342 = vmatmul.mubr.bf16.gmra.mrb[0].mxu0 %v930
    %v1343 = vpop.f32.mrb[0].mxu0
    %v1344 = vadd.f32 0.0, %v1343
    %v1345 = vpop.f32.mrb[0].mxu0
    %v1346 = vpop.f32.mrb[0].mxu0
    %v1347 = vadd.f32 0.0, %v1346
    %v1348 = vpop.f32.mrb[0].mxu0
    %1349 = vmatprep.mubr.bf16.mxu0 %v933
    %1350 = vmatmul.mubr.bf16.gmra.mrb[0].mxu0 %v932
    %v1351 = vpop.f32.mrb[0].mxu0
    %v1352 = vadd.f32 0.0, %v1351
    %v1353 = vpop.f32.mrb[0].mxu0
    %v1354 = vpop.f32.mrb[0].mxu0
    %v1355 = vadd.f32 0.0, %v1354
    %v1356 = vpop.f32.mrb[0].mxu0
    %1357 = vmatprep.mubr.bf16.mxu0 %v935
    %1358 = vmatmul.mubr.bf16.gmra.mrb[0].mxu0 %v934
    %v1359 = vpop.f32.mrb[0].mxu0
    %v1360 = vadd.f32 0.0, %v1359
    %v1361 = vpop.f32.mrb[0].mxu0
    %v1362 = vpop.f32.mrb[0].mxu0
    %v1363 = vadd.f32 0.0, %v1362
    %v1364 = vpop.f32.mrb[0].mxu0
    %1365 = vmatprep.mubr.bf16.mxu0 %v937
    %1366 = vmatmul.mubr.bf16.gmra.mrb[0].mxu0 %v936
    %v1367 = vpop.f32.mrb[0].mxu0
    %v1368 = vadd.f32 0.0, %v1367
    %v1369 = vpop.f32.mrb[0].mxu0
    %v1370 = vpop.f32.mrb[0].mxu0
    %v1371 = vadd.f32 0.0, %v1370
    %v1372 = vpop.f32.mrb[0].mxu0
    %1373 = vdwg.mxu0
    %s1374 = sld [smem:[#allocation2 + $0x2]]
    %v1375 = vstv %s1374
    %v1376 = vmul.f32 %v1375, %v1248
    %v1377 = vmul.f32 %v1375, %v1251
    %v1378 = vmul.f32 %v1375, %v1256
    %v1379 = vmul.f32 %v1375, %v1259
    %v1380 = vmul.f32 %v1375, %v1264
    %v1381 = vmul.f32 %v1375, %v1267
    %v1382 = vmul.f32 %v1375, %v1272
    %v1383 = vmul.f32 %v1375, %v1275
    %v1384 = vmul.f32 %v1375, %v1280
    %v1385 = vmul.f32 %v1375, %v1283
    %v1386 = vmul.f32 %v1375, %v1288
    %v1387 = vmul.f32 %v1375, %v1291
    %v1388 = vmul.f32 %v1375, %v1296
    %v1389 = vmul.f32 %v1375, %v1299
    %v1390 = vmul.f32 %v1375, %v1304
    %v1391 = vmul.f32 %v1375, %v1307
    %v1392 = vmul.f32 %v1375, %v1312
    %v1393 = vmul.f32 %v1375, %v1315
    %v1394 = vmul.f32 %v1375, %v1320
    %v1395 = vmul.f32 %v1375, %v1323
    %v1396 = vmul.f32 %v1375, %v1328
    %v1397 = vmul.f32 %v1375, %v1331
    %v1398 = vmul.f32 %v1375, %v1336
    %v1399 = vmul.f32 %v1375, %v1339
    %v1400 = vmul.f32 %v1375, %v1344
    %v1401 = vmul.f32 %v1375, %v1347
    %v1402 = vmul.f32 %v1375, %v1352
    %v1403 = vmul.f32 %v1375, %v1355
    %v1404 = vmul.f32 %v1375, %v1360
    %v1405 = vmul.f32 %v1375, %v1363
    %v1406 = vmul.f32 %v1375, %v1368
    %v1407 = vmul.f32 %v1375, %v1371
    %v1408 = vadd.f32 %v1165, %v1376
    %v1409 = vadd.f32 %v1166, %v1377
    %v1410 = vadd.f32 %v1167, %v1378
    %v1411 = vadd.f32 %v1168, %v1379
    %v1412 = vadd.f32 %v1169, %v1380
    %v1413 = vadd.f32 %v1170, %v1381
    %v1414 = vadd.f32 %v1171, %v1382
    %v1415 = vadd.f32 %v1172, %v1383
    %v1416 = vadd.f32 %v1173, %v1384
    %v1417 = vadd.f32 %v1174, %v1385
    %v1418 = vadd.f32 %v1175, %v1386
    %v1419 = vadd.f32 %v1176, %v1387
    %v1420 = vadd.f32 %v1177, %v1388
    %v1421 = vadd.f32 %v1178, %v1389
    %v1422 = vadd.f32 %v1179, %v1390
    %v1423 = vadd.f32 %v1180, %v1391
    %v1424 = vadd.f32 %v1181, %v1392
    %v1425 = vadd.f32 %v1182, %v1393
    %v1426 = vadd.f32 %v1183, %v1394
    %v1427 = vadd.f32 %v1184, %v1395
    %v1428 = vadd.f32 %v1185, %v1396
    %v1429 = vadd.f32 %v1186, %v1397
    %v1430 = vadd.f32 %v1187, %v1398
    %v1431 = vadd.f32 %v1188, %v1399
    %v1432 = vadd.f32 %v1189, %v1400
    %v1433 = vadd.f32 %v1190, %v1401
    %v1434 = vadd.f32 %v1191, %v1402
    %v1435 = vadd.f32 %v1192, %v1403
    %v1436 = vadd.f32 %v1193, %v1404
    %v1437 = vadd.f32 %v1194, %v1405
    %v1438 = vadd.f32 %v1195, %v1406
    %v1439 = vadd.f32 %v1196, %v1407
    %v1440 = vpack.c.bf16 %v1251, %v1248
    %v1441 = vpack.c.bf16 %v1259, %v1256
    %v1442 = vpack.c.bf16 %v1267, %v1264
    %v1443 = vpack.c.bf16 %v1275, %v1272
    %v1444 = vpack.c.bf16 %v1283, %v1280
    %v1445 = vpack.c.bf16 %v1291, %v1288
    %v1446 = vpack.c.bf16 %v1299, %v1296
    %v1447 = vpack.c.bf16 %v1307, %v1304
    %v1448 = vpack.c.bf16 %v1315, %v1312
    %v1449 = vpack.c.bf16 %v1323, %v1320
    %v1450 = vpack.c.bf16 %v1331, %v1328
    %v1451 = vpack.c.bf16 %v1339, %v1336
    %v1452 = vpack.c.bf16 %v1347, %v1344
    %v1453 = vpack.c.bf16 %v1355, %v1352
    %v1454 = vpack.c.bf16 %v1363, %v1360
    %v1455 = vpack.c.bf16 %v1371, %v1368
    %1456 = vmatprep.subr.bf16.mxu0 0
    %1457 = vmatpush1.bf16.msra.mxu0 %v1440
    %1458 = vmatprep.subr.bf16.mxu0 0
    %1459 = vmatpush1.bf16.msra.mxu0 %v1441
    %1460 = vmatprep.subr.bf16.mxu0 0
    %1461 = vmatpush1.bf16.msra.mxu0 %v1442
    %1462 = vmatprep.subr.bf16.mxu0 0
    %1463 = vmatpush1.bf16.msra.mxu0 %v1443
    %1464 = vmatprep.subr.bf16.mxu0 0
    %1465 = vmatpush1.bf16.msra.mxu0 %v1444
    %1466 = vmatprep.subr.bf16.mxu0 0
    %1467 = vmatpush1.bf16.msra.mxu0 %v1445
    %1468 = vmatprep.subr.bf16.mxu0 0
    %1469 = vmatpush1.bf16.msra.mxu0 %v1446
    %1470 = vmatprep.subr.bf16.mxu0 0
    %1471 = vmatpush1.bf16.msra.mxu0 %v1447
    %1472 = vmatprep.subr.bf16.mxu0 0
    %1473 = vmatpush1.bf16.msra.mxu0 %v1448
    %1474 = vmatprep.subr.bf16.mxu0 0
    %1475 = vmatpush1.bf16.msra.mxu0 %v1449
    %1476 = vmatprep.subr.bf16.mxu0 0
    %1477 = vmatpush1.bf16.msra.mxu0 %v1450
    %1478 = vmatprep.subr.bf16.mxu0 0
    %1479 = vmatpush1.bf16.msra.mxu0 %v1451
    %1480 = vmatprep.subr.bf16.mxu0 0
    %1481 = vmatpush1.bf16.msra.mxu0 %v1452
    %1482 = vmatprep.subr.bf16.mxu0 0
    %1483 = vmatpush1.bf16.msra.mxu0 %v1453
    %1484 = vmatprep.subr.bf16.mxu0 0
    %1485 = vmatpush1.bf16.msra.mxu0 %v1454
    %1486 = vmatprep.subr.bf16.mxu0 0
    %1487 = vmatpush1.bf16.msra.mxu0 %v1455
    %1488 = vmatprep.mubr.bf16.mxu0 %v907
    %1489 = vmatmul.mubr.bf16.gmra.mrb[0].mxu0 %v906
    %v1490 = vpop.f32.mrb[0].mxu0
    %v1491 = vadd.f32 0.0, %v1490
    %v1492 = vpop.f32.mrb[0].mxu0
    %v1493 = vpop.f32.mrb[0].mxu0
    %v1494 = vadd.f32 0.0, %v1493
    %v1495 = vpop.f32.mrb[0].mxu0
    %1496 = vmatprep.mubr.bf16.mxu0 %v909
    %1497 = vmatmul.mubr.bf16.gmra.mrb[0].mxu0 %v908
    %v1498 = vpop.f32.mrb[0].mxu0
    %v1499 = vadd.f32 0.0, %v1498
    %v1500 = vpop.f32.mrb[0].mxu0
    %v1501 = vpop.f32.mrb[0].mxu0
    %v1502 = vadd.f32 0.0, %v1501
    %v1503 = vpop.f32.mrb[0].mxu0
    %1504 = vmatprep.mubr.bf16.mxu0 %v911
    %1505 = vmatmul.mubr.bf16.gmra.mrb[0].mxu0 %v910
    %v1506 = vpop.f32.mrb[0].mxu0
    %v1507 = vadd.f32 0.0, %v1506
    %v1508 = vpop.f32.mrb[0].mxu0
    %v1509 = vpop.f32.mrb[0].mxu0
    %v1510 = vadd.f32 0.0, %v1509
    %v1511 = vpop.f32.mrb[0].mxu0
    %1512 = vmatprep.mubr.bf16.mxu0 %v913
    %1513 = vmatmul.mubr.bf16.gmra.mrb[0].mxu0 %v912
    %v1514 = vpop.f32.mrb[0].mxu0
    %v1515 = vadd.f32 0.0, %v1514
    %v1516 = vpop.f32.mrb[0].mxu0
    %v1517 = vpop.f32.mrb[0].mxu0
    %v1518 = vadd.f32 0.0, %v1517
    %v1519 = vpop.f32.mrb[0].mxu0
    %1520 = vmatprep.mubr.bf16.mxu0 %v915
    %1521 = vmatmul.mubr.bf16.gmra.mrb[0].mxu0 %v914
    %v1522 = vpop.f32.mrb[0].mxu0
    %v1523 = vadd.f32 0.0, %v1522
    %v1524 = vpop.f32.mrb[0].mxu0
    %v1525 = vpop.f32.mrb[0].mxu0
    %v1526 = vadd.f32 0.0, %v1525
    %v1527 = vpop.f32.mrb[0].mxu0
    %1528 = vmatprep.mubr.bf16.mxu0 %v917
    %1529 = vmatmul.mubr.bf16.gmra.mrb[0].mxu0 %v916
    %v1530 = vpop.f32.mrb[0].mxu0
    %v1531 = vadd.f32 0.0, %v1530
    %v1532 = vpop.f32.mrb[0].mxu0
    %v1533 = vpop.f32.mrb[0].mxu0
    %v1534 = vadd.f32 0.0, %v1533
    %v1535 = vpop.f32.mrb[0].mxu0
    %1536 = vmatprep.mubr.bf16.mxu0 %v919
    %1537 = vmatmul.mubr.bf16.gmra.mrb[0].mxu0 %v918
    %v1538 = vpop.f32.mrb[0].mxu0
    %v1539 = vadd.f32 0.0, %v1538
    %v1540 = vpop.f32.mrb[0].mxu0
    %v1541 = vpop.f32.mrb[0].mxu0
    %v1542 = vadd.f32 0.0, %v1541
    %v1543 = vpop.f32.mrb[0].mxu0
    %1544 = vmatprep.mubr.bf16.mxu0 %v921
    %1545 = vmatmul.mubr.bf16.gmra.mrb[0].mxu0 %v920
    %v1546 = vpop.f32.mrb[0].mxu0
    %v1547 = vadd.f32 0.0, %v1546
    %v1548 = vpop.f32.mrb[0].mxu0
    %v1549 = vpop.f32.mrb[0].mxu0
    %v1550 = vadd.f32 0.0, %v1549
    %v1551 = vpop.f32.mrb[0].mxu0
    %1552 = vmatprep.mubr.bf16.mxu0 %v923
    %1553 = vmatmul.mubr.bf16.gmra.mrb[0].mxu0 %v922
    %v1554 = vpop.f32.mrb[0].mxu0
    %v1555 = vadd.f32 0.0, %v1554
    %v1556 = vpop.f32.mrb[0].mxu0
    %v1557 = vpop.f32.mrb[0].mxu0
    %v1558 = vadd.f32 0.0, %v1557
    %v1559 = vpop.f32.mrb[0].mxu0
    %1560 = vmatprep.mubr.bf16.mxu0 %v925
    %1561 = vmatmul.mubr.bf16.gmra.mrb[0].mxu0 %v924
    %v1562 = vpop.f32.mrb[0].mxu0
    %v1563 = vadd.f32 0.0, %v1562
    %v1564 = vpop.f32.mrb[0].mxu0
    %v1565 = vpop.f32.mrb[0].mxu0
    %v1566 = vadd.f32 0.0, %v1565
    %v1567 = vpop.f32.mrb[0].mxu0
    %1568 = vmatprep.mubr.bf16.mxu0 %v927
    %1569 = vmatmul.mubr.bf16.gmra.mrb[0].mxu0 %v926
    %v1570 = vpop.f32.mrb[0].mxu0
    %v1571 = vadd.f32 0.0, %v1570
    %v1572 = vpop.f32.mrb[0].mxu0
    %v1573 = vpop.f32.mrb[0].mxu0
    %v1574 = vadd.f32 0.0, %v1573
    %v1575 = vpop.f32.mrb[0].mxu0
    %1576 = vmatprep.mubr.bf16.mxu0 %v929
    %1577 = vmatmul.mubr.bf16.gmra.mrb[0].mxu0 %v928
    %v1578 = vpop.f32.mrb[0].mxu0
    %v1579 = vadd.f32 0.0, %v1578
    %v1580 = vpop.f32.mrb[0].mxu0
    %v1581 = vpop.f32.mrb[0].mxu0
    %v1582 = vadd.f32 0.0, %v1581
    %v1583 = vpop.f32.mrb[0].mxu0
    %1584 = vmatprep.mubr.bf16.mxu0 %v931
    %1585 = vmatmul.mubr.bf16.gmra.mrb[0].mxu0 %v930
    %v1586 = vpop.f32.mrb[0].mxu0
    %v1587 = vadd.f32 0.0, %v1586
    %v1588 = vpop.f32.mrb[0].mxu0
    %v1589 = vpop.f32.mrb[0].mxu0
    %v1590 = vadd.f32 0.0, %v1589
    %v1591 = vpop.f32.mrb[0].mxu0
    %1592 = vmatprep.mubr.bf16.mxu0 %v933
    %1593 = vmatmul.mubr.bf16.gmra.mrb[0].mxu0 %v932
    %v1594 = vpop.f32.mrb[0].mxu0
    %v1595 = vadd.f32 0.0, %v1594
    %v1596 = vpop.f32.mrb[0].mxu0
    %v1597 = vpop.f32.mrb[0].mxu0
    %v1598 = vadd.f32 0.0, %v1597
    %v1599 = vpop.f32.mrb[0].mxu0
    %1600 = vmatprep.mubr.bf16.mxu0 %v935
    %1601 = vmatmul.mubr.bf16.gmra.mrb[0].mxu0 %v934
    %v1602 = vpop.f32.mrb[0].mxu0
    %v1603 = vadd.f32 0.0, %v1602
    %v1604 = vpop.f32.mrb[0].mxu0
    %v1605 = vpop.f32.mrb[0].mxu0
    %v1606 = vadd.f32 0.0, %v1605
    %v1607 = vpop.f32.mrb[0].mxu0
    %1608 = vmatprep.mubr.bf16.mxu0 %v937
    %1609 = vmatmul.mubr.bf16.gmra.mrb[0].mxu0 %v936
    %v1610 = vpop.f32.mrb[0].mxu0
    %v1611 = vadd.f32 0.0, %v1610
    %v1612 = vpop.f32.mrb[0].mxu0
    %v1613 = vpop.f32.mrb[0].mxu0
    %v1614 = vadd.f32 0.0, %v1613
    %v1615 = vpop.f32.mrb[0].mxu0
    %1616 = vdwg.mxu0
    %s1617 = sld [smem:[#allocation2 + $0x3]]
    %v1618 = vstv %s1617
    %v1619 = vmul.f32 %v1618, %v1491
    %v1620 = vmul.f32 %v1618, %v1494
    %v1621 = vmul.f32 %v1618, %v1499
    %v1622 = vmul.f32 %v1618, %v1502
    %v1623 = vmul.f32 %v1618, %v1507
    %v1624 = vmul.f32 %v1618, %v1510
    %v1625 = vmul.f32 %v1618, %v1515
    %v1626 = vmul.f32 %v1618, %v1518
    %v1627 = vmul.f32 %v1618, %v1523
    %v1628 = vmul.f32 %v1618, %v1526
    %v1629 = vmul.f32 %v1618, %v1531
    %v1630 = vmul.f32 %v1618, %v1534
    %v1631 = vmul.f32 %v1618, %v1539
    %v1632 = vmul.f32 %v1618, %v1542
    %v1633 = vmul.f32 %v1618, %v1547
    %v1634 = vmul.f32 %v1618, %v1550
    %v1635 = vmul.f32 %v1618, %v1555
    %v1636 = vmul.f32 %v1618, %v1558
    %v1637 = vmul.f32 %v1618, %v1563
    %v1638 = vmul.f32 %v1618, %v1566
    %v1639 = vmul.f32 %v1618, %v1571
    %v1640 = vmul.f32 %v1618, %v1574
    %v1641 = vmul.f32 %v1618, %v1579
    %v1642 = vmul.f32 %v1618, %v1582
    %v1643 = vmul.f32 %v1618, %v1587
    %v1644 = vmul.f32 %v1618, %v1590
    %v1645 = vmul.f32 %v1618, %v1595
    %v1646 = vmul.f32 %v1618, %v1598
    %v1647 = vmul.f32 %v1618, %v1603
    %v1648 = vmul.f32 %v1618, %v1606
    %v1649 = vmul.f32 %v1618, %v1611
    %v1650 = vmul.f32 %v1618, %v1614
    %v1651 = vadd.f32 %v1408, %v1619
    %v1652 = vadd.f32 %v1409, %v1620
    %v1653 = vadd.f32 %v1410, %v1621
    %v1654 = vadd.f32 %v1411, %v1622
    %v1655 = vadd.f32 %v1412, %v1623
    %v1656 = vadd.f32 %v1413, %v1624
    %v1657 = vadd.f32 %v1414, %v1625
    %v1658 = vadd.f32 %v1415, %v1626
    %v1659 = vadd.f32 %v1416, %v1627
    %v1660 = vadd.f32 %v1417, %v1628
    %v1661 = vadd.f32 %v1418, %v1629
    %v1662 = vadd.f32 %v1419, %v1630
    %v1663 = vadd.f32 %v1420, %v1631
    %v1664 = vadd.f32 %v1421, %v1632
    %v1665 = vadd.f32 %v1422, %v1633
    %v1666 = vadd.f32 %v1423, %v1634
    %v1667 = vadd.f32 %v1424, %v1635
    %v1668 = vadd.f32 %v1425, %v1636
    %v1669 = vadd.f32 %v1426, %v1637
    %v1670 = vadd.f32 %v1427, %v1638
    %v1671 = vadd.f32 %v1428, %v1639
    %v1672 = vadd.f32 %v1429, %v1640
    %v1673 = vadd.f32 %v1430, %v1641
    %v1674 = vadd.f32 %v1431, %v1642
    %v1675 = vadd.f32 %v1432, %v1643
    %v1676 = vadd.f32 %v1433, %v1644
    %v1677 = vadd.f32 %v1434, %v1645
    %v1678 = vadd.f32 %v1435, %v1646
    %v1679 = vadd.f32 %v1436, %v1647
    %v1680 = vadd.f32 %v1437, %v1648
    %v1681 = vadd.f32 %v1438, %v1649
    %v1682 = vadd.f32 %v1439, %v1650
    %v1683 = vpack.c.bf16 %v1494, %v1491
    %v1684 = vpack.c.bf16 %v1502, %v1499
    %v1685 = vpack.c.bf16 %v1510, %v1507
    %v1686 = vpack.c.bf16 %v1518, %v1515
    %v1687 = vpack.c.bf16 %v1526, %v1523
    %v1688 = vpack.c.bf16 %v1534, %v1531
    %v1689 = vpack.c.bf16 %v1542, %v1539
    %v1690 = vpack.c.bf16 %v1550, %v1547
    %v1691 = vpack.c.bf16 %v1558, %v1555
    %v1692 = vpack.c.bf16 %v1566, %v1563
    %v1693 = vpack.c.bf16 %v1574, %v1571
    %v1694 = vpack.c.bf16 %v1582, %v1579
    %v1695 = vpack.c.bf16 %v1590, %v1587
    %v1696 = vpack.c.bf16 %v1598, %v1595
    %v1697 = vpack.c.bf16 %v1606, %v1603
    %v1698 = vpack.c.bf16 %v1614, %v1611
    %1699 = vmatprep.subr.bf16.mxu0 0
    %1700 = vmatpush1.bf16.msra.mxu0 %v1683
    %1701 = vmatprep.subr.bf16.mxu0 0
    %1702 = vmatpush1.bf16.msra.mxu0 %v1684
    %1703 = vmatprep.subr.bf16.mxu0 0
    %1704 = vmatpush1.bf16.msra.mxu0 %v1685
    %1705 = vmatprep.subr.bf16.mxu0 0
    %1706 = vmatpush1.bf16.msra.mxu0 %v1686
    %1707 = vmatprep.subr.bf16.mxu0 0
    %1708 = vmatpush1.bf16.msra.mxu0 %v1687
    %1709 = vmatprep.subr.bf16.mxu0 0
    %1710 = vmatpush1.bf16.msra.mxu0 %v1688
    %1711 = vmatprep.subr.bf16.mxu0 0
    %1712 = vmatpush1.bf16.msra.mxu0 %v1689
    %1713 = vmatprep.subr.bf16.mxu0 0
    %1714 = vmatpush1.bf16.msra.mxu0 %v1690
    %1715 = vmatprep.subr.bf16.mxu0 0
    %1716 = vmatpush1.bf16.msra.mxu0 %v1691
    %1717 = vmatprep.subr.bf16.mxu0 0
    %1718 = vmatpush1.bf16.msra.mxu0 %v1692
    %1719 = vmatprep.subr.bf16.mxu0 0
    %1720 = vmatpush1.bf16.msra.mxu0 %v1693
    %1721 = vmatprep.subr.bf16.mxu0 0
    %1722 = vmatpush1.bf16.msra.mxu0 %v1694
    %1723 = vmatprep.subr.bf16.mxu0 0
    %1724 = vmatpush1.bf16.msra.mxu0 %v1695
    %1725 = vmatprep.subr.bf16.mxu0 0
    %1726 = vmatpush1.bf16.msra.mxu0 %v1696
    %1727 = vmatprep.subr.bf16.mxu0 0
    %1728 = vmatpush1.bf16.msra.mxu0 %v1697
    %1729 = vmatprep.subr.bf16.mxu0 0
    %1730 = vmatpush1.bf16.msra.mxu0 %v1698
    %1731 = vmatprep.mubr.bf16.mxu0 %v907
    %1732 = vmatmul.mubr.bf16.gmra.mrb[0].mxu0 %v906
    %v1733 = vpop.f32.mrb[0].mxu0
    %v1734 = vadd.f32 0.0, %v1733
    %v1735 = vpop.f32.mrb[0].mxu0
    %v1736 = vpop.f32.mrb[0].mxu0
    %v1737 = vadd.f32 0.0, %v1736
    %v1738 = vpop.f32.mrb[0].mxu0
    %1739 = vmatprep.mubr.bf16.mxu0 %v909
    %1740 = vmatmul.mubr.bf16.gmra.mrb[0].mxu0 %v908
    %v1741 = vpop.f32.mrb[0].mxu0
    %v1742 = vadd.f32 0.0, %v1741
    %v1743 = vpop.f32.mrb[0].mxu0
    %v1744 = vpop.f32.mrb[0].mxu0
    %v1745 = vadd.f32 0.0, %v1744
    %v1746 = vpop.f32.mrb[0].mxu0
    %1747 = vmatprep.mubr.bf16.mxu0 %v911
    %1748 = vmatmul.mubr.bf16.gmra.mrb[0].mxu0 %v910
    %v1749 = vpop.f32.mrb[0].mxu0
    %v1750 = vadd.f32 0.0, %v1749
    %v1751 = vpop.f32.mrb[0].mxu0
    %v1752 = vpop.f32.mrb[0].mxu0
    %v1753 = vadd.f32 0.0, %v1752
    %v1754 = vpop.f32.mrb[0].mxu0
    %1755 = vmatprep.mubr.bf16.mxu0 %v913
    %1756 = vmatmul.mubr.bf16.gmra.mrb[0].mxu0 %v912
    %v1757 = vpop.f32.mrb[0].mxu0
    %v1758 = vadd.f32 0.0, %v1757
    %v1759 = vpop.f32.mrb[0].mxu0
    %v1760 = vpop.f32.mrb[0].mxu0
    %v1761 = vadd.f32 0.0, %v1760
    %v1762 = vpop.f32.mrb[0].mxu0
    %1763 = vmatprep.mubr.bf16.mxu0 %v915
    %1764 = vmatmul.mubr.bf16.gmra.mrb[0].mxu0 %v914
    %v1765 = vpop.f32.mrb[0].mxu0
    %v1766 = vadd.f32 0.0, %v1765
    %v1767 = vpop.f32.mrb[0].mxu0
    %v1768 = vpop.f32.mrb[0].mxu0
    %v1769 = vadd.f32 0.0, %v1768
    %v1770 = vpop.f32.mrb[0].mxu0
    %1771 = vmatprep.mubr.bf16.mxu0 %v917
    %1772 = vmatmul.mubr.bf16.gmra.mrb[0].mxu0 %v916
    %v1773 = vpop.f32.mrb[0].mxu0
    %v1774 = vadd.f32 0.0, %v1773
    %v1775 = vpop.f32.mrb[0].mxu0
    %v1776 = vpop.f32.mrb[0].mxu0
    %v1777 = vadd.f32 0.0, %v1776
    %v1778 = vpop.f32.mrb[0].mxu0
    %1779 = vmatprep.mubr.bf16.mxu0 %v919
    %1780 = vmatmul.mubr.bf16.gmra.mrb[0].mxu0 %v918
    %v1781 = vpop.f32.mrb[0].mxu0
    %v1782 = vadd.f32 0.0, %v1781
    %v1783 = vpop.f32.mrb[0].mxu0
    %v1784 = vpop.f32.mrb[0].mxu0
    %v1785 = vadd.f32 0.0, %v1784
    %v1786 = vpop.f32.mrb[0].mxu0
    %1787 = vmatprep.mubr.bf16.mxu0 %v921
    %1788 = vmatmul.mubr.bf16.gmra.mrb[0].mxu0 %v920
    %v1789 = vpop.f32.mrb[0].mxu0
    %v1790 = vadd.f32 0.0, %v1789
    %v1791 = vpop.f32.mrb[0].mxu0
    %v1792 = vpop.f32.mrb[0].mxu0
    %v1793 = vadd.f32 0.0, %v1792
    %v1794 = vpop.f32.mrb[0].mxu0
    %1795 = vmatprep.mubr.bf16.mxu0 %v923
    %1796 = vmatmul.mubr.bf16.gmra.mrb[0].mxu0 %v922
    %v1797 = vpop.f32.mrb[0].mxu0
    %v1798 = vadd.f32 0.0, %v1797
    %v1799 = vpop.f32.mrb[0].mxu0
    %v1800 = vpop.f32.mrb[0].mxu0
    %v1801 = vadd.f32 0.0, %v1800
    %v1802 = vpop.f32.mrb[0].mxu0
    %1803 = vmatprep.mubr.bf16.mxu0 %v925
    %1804 = vmatmul.mubr.bf16.gmra.mrb[0].mxu0 %v924
    %v1805 = vpop.f32.mrb[0].mxu0
    %v1806 = vadd.f32 0.0, %v1805
    %v1807 = vpop.f32.mrb[0].mxu0
    %v1808 = vpop.f32.mrb[0].mxu0
    %v1809 = vadd.f32 0.0, %v1808
    %v1810 = vpop.f32.mrb[0].mxu0
    %1811 = vmatprep.mubr.bf16.mxu0 %v927
    %1812 = vmatmul.mubr.bf16.gmra.mrb[0].mxu0 %v926
    %v1813 = vpop.f32.mrb[0].mxu0
    %v1814 = vadd.f32 0.0, %v1813
    %v1815 = vpop.f32.mrb[0].mxu0
    %v1816 = vpop.f32.mrb[0].mxu0
    %v1817 = vadd.f32 0.0, %v1816
    %v1818 = vpop.f32.mrb[0].mxu0
    %1819 = vmatprep.mubr.bf16.mxu0 %v929
    %1820 = vmatmul.mubr.bf16.gmra.mrb[0].mxu0 %v928
    %v1821 = vpop.f32.mrb[0].mxu0
    %v1822 = vadd.f32 0.0, %v1821
    %v1823 = vpop.f32.mrb[0].mxu0
    %v1824 = vpop.f32.mrb[0].mxu0
    %v1825 = vadd.f32 0.0, %v1824
    %v1826 = vpop.f32.mrb[0].mxu0
    %1827 = vmatprep.mubr.bf16.mxu0 %v931
    %1828 = vmatmul.mubr.bf16.gmra.mrb[0].mxu0 %v930
    %v1829 = vpop.f32.mrb[0].mxu0
    %v1830 = vadd.f32 0.0, %v1829
    %v1831 = vpop.f32.mrb[0].mxu0
    %v1832 = vpop.f32.mrb[0].mxu0
    %v1833 = vadd.f32 0.0, %v1832
    %v1834 = vpop.f32.mrb[0].mxu0
    %1835 = vmatprep.mubr.bf16.mxu0 %v933
    %1836 = vmatmul.mubr.bf16.gmra.mrb[0].mxu0 %v932
    %v1837 = vpop.f32.mrb[0].mxu0
    %v1838 = vadd.f32 0.0, %v1837
    %v1839 = vpop.f32.mrb[0].mxu0
    %v1840 = vpop.f32.mrb[0].mxu0
    %v1841 = vadd.f32 0.0, %v1840
    %v1842 = vpop.f32.mrb[0].mxu0
    %1843 = vmatprep.mubr.bf16.mxu0 %v935
    %1844 = vmatmul.mubr.bf16.gmra.mrb[0].mxu0 %v934
    %v1845 = vpop.f32.mrb[0].mxu0
    %v1846 = vadd.f32 0.0, %v1845
    %v1847 = vpop.f32.mrb[0].mxu0
    %v1848 = vpop.f32.mrb[0].mxu0
    %v1849 = vadd.f32 0.0, %v1848
    %v1850 = vpop.f32.mrb[0].mxu0
    %1851 = vmatprep.mubr.bf16.mxu0 %v937
    %1852 = vmatmul.mubr.bf16.gmra.mrb[0].mxu0 %v936
    %v1853 = vpop.f32.mrb[0].mxu0
    %v1854 = vadd.f32 0.0, %v1853
    %v1855 = vpop.f32.mrb[0].mxu0
    %v1856 = vpop.f32.mrb[0].mxu0
    %v1857 = vadd.f32 0.0, %v1856
    %v1858 = vpop.f32.mrb[0].mxu0
    %1859 = vdwg.mxu0
    %s1860 = sld [smem:[#allocation2 + $0x4]]
    %v1861 = vstv %s1860
    %v1862 = vmul.f32 %v1861, %v1734
    %v1863 = vmul.f32 %v1861, %v1737
    %v1864 = vmul.f32 %v1861, %v1742
    %v1865 = vmul.f32 %v1861, %v1745
    %v1866 = vmul.f32 %v1861, %v1750
    %v1867 = vmul.f32 %v1861, %v1753
    %v1868 = vmul.f32 %v1861, %v1758
    %v1869 = vmul.f32 %v1861, %v1761
    %v1870 = vmul.f32 %v1861, %v1766
    %v1871 = vmul.f32 %v1861, %v1769
    %v1872 = vmul.f32 %v1861, %v1774
    %v1873 = vmul.f32 %v1861, %v1777
    %v1874 = vmul.f32 %v1861, %v1782
    %v1875 = vmul.f32 %v1861, %v1785
    %v1876 = vmul.f32 %v1861, %v1790
    %v1877 = vmul.f32 %v1861, %v1793
    %v1878 = vmul.f32 %v1861, %v1798
    %v1879 = vmul.f32 %v1861, %v1801
    %v1880 = vmul.f32 %v1861, %v1806
    %v1881 = vmul.f32 %v1861, %v1809
    %v1882 = vmul.f32 %v1861, %v1814
    %v1883 = vmul.f32 %v1861, %v1817
    %v1884 = vmul.f32 %v1861, %v1822
    %v1885 = vmul.f32 %v1861, %v1825
    %v1886 = vmul.f32 %v1861, %v1830
    %v1887 = vmul.f32 %v1861, %v1833
    %v1888 = vmul.f32 %v1861, %v1838
    %v1889 = vmul.f32 %v1861, %v1841
    %v1890 = vmul.f32 %v1861, %v1846
    %v1891 = vmul.f32 %v1861, %v1849
    %v1892 = vmul.f32 %v1861, %v1854
    %v1893 = vmul.f32 %v1861, %v1857
    %v1894 = vadd.f32 %v1651, %v1862
    %v1895 = vadd.f32 %v1652, %v1863
    %v1896 = vadd.f32 %v1653, %v1864
    %v1897 = vadd.f32 %v1654, %v1865
    %v1898 = vadd.f32 %v1655, %v1866
    %v1899 = vadd.f32 %v1656, %v1867
    %v1900 = vadd.f32 %v1657, %v1868
    %v1901 = vadd.f32 %v1658, %v1869
    %v1902 = vadd.f32 %v1659, %v1870
    %v1903 = vadd.f32 %v1660, %v1871
    %v1904 = vadd.f32 %v1661, %v1872
    %v1905 = vadd.f32 %v1662, %v1873
    %v1906 = vadd.f32 %v1663, %v1874
    %v1907 = vadd.f32 %v1664, %v1875
    %v1908 = vadd.f32 %v1665, %v1876
    %v1909 = vadd.f32 %v1666, %v1877
    %v1910 = vadd.f32 %v1667, %v1878
    %v1911 = vadd.f32 %v1668, %v1879
    %v1912 = vadd.f32 %v1669, %v1880
    %v1913 = vadd.f32 %v1670, %v1881
    %v1914 = vadd.f32 %v1671, %v1882
    %v1915 = vadd.f32 %v1672, %v1883
    %v1916 = vadd.f32 %v1673, %v1884
    %v1917 = vadd.f32 %v1674, %v1885
    %v1918 = vadd.f32 %v1675, %v1886
    %v1919 = vadd.f32 %v1676, %v1887
    %v1920 = vadd.f32 %v1677, %v1888
    %v1921 = vadd.f32 %v1678, %v1889
    %v1922 = vadd.f32 %v1679, %v1890
    %v1923 = vadd.f32 %v1680, %v1891
    %v1924 = vadd.f32 %v1681, %v1892
    %v1925 = vadd.f32 %v1682, %v1893
    %v1926 = vpack.c.bf16 %v1737, %v1734
    %v1927 = vpack.c.bf16 %v1745, %v1742
    %v1928 = vpack.c.bf16 %v1753, %v1750
    %v1929 = vpack.c.bf16 %v1761, %v1758
    %v1930 = vpack.c.bf16 %v1769, %v1766
    %v1931 = vpack.c.bf16 %v1777, %v1774
    %v1932 = vpack.c.bf16 %v1785, %v1782
    %v1933 = vpack.c.bf16 %v1793, %v1790
    %v1934 = vpack.c.bf16 %v1801, %v1798
    %v1935 = vpack.c.bf16 %v1809, %v1806
    %v1936 = vpack.c.bf16 %v1817, %v1814
    %v1937 = vpack.c.bf16 %v1825, %v1822
    %v1938 = vpack.c.bf16 %v1833, %v1830
    %v1939 = vpack.c.bf16 %v1841, %v1838
    %v1940 = vpack.c.bf16 %v1849, %v1846
    %v1941 = vpack.c.bf16 %v1857, %v1854
    %1942 = vmatprep.subr.bf16.mxu0 0
    %1943 = vmatpush1.bf16.msra.mxu0 %v1926
    %1944 = vmatprep.subr.bf16.mxu0 0
    %1945 = vmatpush1.bf16.msra.mxu0 %v1927
    %1946 = vmatprep.subr.bf16.mxu0 0
    %1947 = vmatpush1.bf16.msra.mxu0 %v1928
    %1948 = vmatprep.subr.bf16.mxu0 0
    %1949 = vmatpush1.bf16.msra.mxu0 %v1929
    %1950 = vmatprep.subr.bf16.mxu0 0
    %1951 = vmatpush1.bf16.msra.mxu0 %v1930
    %1952 = vmatprep.subr.bf16.mxu0 0
    %1953 = vmatpush1.bf16.msra.mxu0 %v1931
    %1954 = vmatprep.subr.bf16.mxu0 0
    %1955 = vmatpush1.bf16.msra.mxu0 %v1932
    %1956 = vmatprep.subr.bf16.mxu0 0
    %1957 = vmatpush1.bf16.msra.mxu0 %v1933
    %1958 = vmatprep.subr.bf16.mxu0 0
    %1959 = vmatpush1.bf16.msra.mxu0 %v1934
    %1960 = vmatprep.subr.bf16.mxu0 0
    %1961 = vmatpush1.bf16.msra.mxu0 %v1935
    %1962 = vmatprep.subr.bf16.mxu0 0
    %1963 = vmatpush1.bf16.msra.mxu0 %v1936
    %1964 = vmatprep.subr.bf16.mxu0 0
    %1965 = vmatpush1.bf16.msra.mxu0 %v1937
    %1966 = vmatprep.subr.bf16.mxu0 0
    %1967 = vmatpush1.bf16.msra.mxu0 %v1938
    %1968 = vmatprep.subr.bf16.mxu0 0
    %1969 = vmatpush1.bf16.msra.mxu0 %v1939
    %1970 = vmatprep.subr.bf16.mxu0 0
    %1971 = vmatpush1.bf16.msra.mxu0 %v1940
    %1972 = vmatprep.subr.bf16.mxu0 0
    %1973 = vmatpush1.bf16.msra.mxu0 %v1941
    %1974 = vmatprep.mubr.bf16.mxu0 %v907
    %1975 = vmatmul.mubr.bf16.gmra.mrb[0].mxu0 %v906
    %v1976 = vpop.f32.mrb[0].mxu0
    %v1977 = vadd.f32 0.0, %v1976
    %v1978 = vpop.f32.mrb[0].mxu0
    %v1979 = vpop.f32.mrb[0].mxu0
    %v1980 = vadd.f32 0.0, %v1979
    %v1981 = vpop.f32.mrb[0].mxu0
    %1982 = vmatprep.mubr.bf16.mxu0 %v909
    %1983 = vmatmul.mubr.bf16.gmra.mrb[0].mxu0 %v908
    %v1984 = vpop.f32.mrb[0].mxu0
    %v1985 = vadd.f32 0.0, %v1984
    %v1986 = vpop.f32.mrb[0].mxu0
    %v1987 = vpop.f32.mrb[0].mxu0
    %v1988 = vadd.f32 0.0, %v1987
    %v1989 = vpop.f32.mrb[0].mxu0
    %1990 = vmatprep.mubr.bf16.mxu0 %v911
    %1991 = vmatmul.mubr.bf16.gmra.mrb[0].mxu0 %v910
    %v1992 = vpop.f32.mrb[0].mxu0
    %v1993 = vadd.f32 0.0, %v1992
    %v1994 = vpop.f32.mrb[0].mxu0
    %v1995 = vpop.f32.mrb[0].mxu0
    %v1996 = vadd.f32 0.0, %v1995
    %v1997 = vpop.f32.mrb[0].mxu0
    %1998 = vmatprep.mubr.bf16.mxu0 %v913
    %1999 = vmatmul.mubr.bf16.gmra.mrb[0].mxu0 %v912
    %v2000 = vpop.f32.mrb[0].mxu0
    %v2001 = vadd.f32 0.0, %v2000
    %v2002 = vpop.f32.mrb[0].mxu0
    %v2003 = vpop.f32.mrb[0].mxu0
    %v2004 = vadd.f32 0.0, %v2003
    %v2005 = vpop.f32.mrb[0].mxu0
    %2006 = vmatprep.mubr.bf16.mxu0 %v915
    %2007 = vmatmul.mubr.bf16.gmra.mrb[0].mxu0 %v914
    %v2008 = vpop.f32.mrb[0].mxu0
    %v2009 = vadd.f32 0.0, %v2008
    %v2010 = vpop.f32.mrb[0].mxu0
    %v2011 = vpop.f32.mrb[0].mxu0
    %v2012 = vadd.f32 0.0, %v2011
    %v2013 = vpop.f32.mrb[0].mxu0
    %2014 = vmatprep.mubr.bf16.mxu0 %v917
    %2015 = vmatmul.mubr.bf16.gmra.mrb[0].mxu0 %v916
    %v2016 = vpop.f32.mrb[0].mxu0
    %v2017 = vadd.f32 0.0, %v2016
    %v2018 = vpop.f32.mrb[0].mxu0
    %v2019 = vpop.f32.mrb[0].mxu0
    %v2020 = vadd.f32 0.0, %v2019
    %v2021 = vpop.f32.mrb[0].mxu0
    %2022 = vmatprep.mubr.bf16.mxu0 %v919
    %2023 = vmatmul.mubr.bf16.gmra.mrb[0].mxu0 %v918
    %v2024 = vpop.f32.mrb[0].mxu0
    %v2025 = vadd.f32 0.0, %v2024
    %v2026 = vpop.f32.mrb[0].mxu0
    %v2027 = vpop.f32.mrb[0].mxu0
    %v2028 = vadd.f32 0.0, %v2027
    %v2029 = vpop.f32.mrb[0].mxu0
    %2030 = vmatprep.mubr.bf16.mxu0 %v921
    %2031 = vmatmul.mubr.bf16.gmra.mrb[0].mxu0 %v920
    %v2032 = vpop.f32.mrb[0].mxu0
    %v2033 = vadd.f32 0.0, %v2032
    %v2034 = vpop.f32.mrb[0].mxu0
    %v2035 = vpop.f32.mrb[0].mxu0
    %v2036 = vadd.f32 0.0, %v2035
    %v2037 = vpop.f32.mrb[0].mxu0
    %2038 = vmatprep.mubr.bf16.mxu0 %v923
    %2039 = vmatmul.mubr.bf16.gmra.mrb[0].mxu0 %v922
    %v2040 = vpop.f32.mrb[0].mxu0
    %v2041 = vadd.f32 0.0, %v2040
    %v2042 = vpop.f32.mrb[0].mxu0
    %v2043 = vpop.f32.mrb[0].mxu0
    %v2044 = vadd.f32 0.0, %v2043
    %v2045 = vpop.f32.mrb[0].mxu0
    %2046 = vmatprep.mubr.bf16.mxu0 %v925
    %2047 = vmatmul.mubr.bf16.gmra.mrb[0].mxu0 %v924
    %v2048 = vpop.f32.mrb[0].mxu0
    %v2049 = vadd.f32 0.0, %v2048
    %v2050 = vpop.f32.mrb[0].mxu0
    %v2051 = vpop.f32.mrb[0].mxu0
    %v2052 = vadd.f32 0.0, %v2051
    %v2053 = vpop.f32.mrb[0].mxu0
    %2054 = vmatprep.mubr.bf16.mxu0 %v927
    %2055 = vmatmul.mubr.bf16.gmra.mrb[0].mxu0 %v926
    %v2056 = vpop.f32.mrb[0].mxu0
    %v2057 = vadd.f32 0.0, %v2056
    %v2058 = vpop.f32.mrb[0].mxu0
    %v2059 = vpop.f32.mrb[0].mxu0
    %v2060 = vadd.f32 0.0, %v2059
    %v2061 = vpop.f32.mrb[0].mxu0
    %2062 = vmatprep.mubr.bf16.mxu0 %v929
    %2063 = vmatmul.mubr.bf16.gmra.mrb[0].mxu0 %v928
    %v2064 = vpop.f32.mrb[0].mxu0
    %v2065 = vadd.f32 0.0, %v2064
    %v2066 = vpop.f32.mrb[0].mxu0
    %v2067 = vpop.f32.mrb[0].mxu0
    %v2068 = vadd.f32 0.0, %v2067
    %v2069 = vpop.f32.mrb[0].mxu0
    %2070 = vmatprep.mubr.bf16.mxu0 %v931
    %2071 = vmatmul.mubr.bf16.gmra.mrb[0].mxu0 %v930
    %v2072 = vpop.f32.mrb[0].mxu0
    %v2073 = vadd.f32 0.0, %v2072
    %v2074 = vpop.f32.mrb[0].mxu0
    %v2075 = vpop.f32.mrb[0].mxu0
    %v2076 = vadd.f32 0.0, %v2075
    %v2077 = vpop.f32.mrb[0].mxu0
    %2078 = vmatprep.mubr.bf16.mxu0 %v933
    %2079 = vmatmul.mubr.bf16.gmra.mrb[0].mxu0 %v932
    %v2080 = vpop.f32.mrb[0].mxu0
    %v2081 = vadd.f32 0.0, %v2080
    %v2082 = vpop.f32.mrb[0].mxu0
    %v2083 = vpop.f32.mrb[0].mxu0
    %v2084 = vadd.f32 0.0, %v2083
    %v2085 = vpop.f32.mrb[0].mxu0
    %2086 = vmatprep.mubr.bf16.mxu0 %v935
    %2087 = vmatmul.mubr.bf16.gmra.mrb[0].mxu0 %v934
    %v2088 = vpop.f32.mrb[0].mxu0
    %v2089 = vadd.f32 0.0, %v2088
    %v2090 = vpop.f32.mrb[0].mxu0
    %v2091 = vpop.f32.mrb[0].mxu0
    %v2092 = vadd.f32 0.0, %v2091
    %v2093 = vpop.f32.mrb[0].mxu0
    %2094 = vmatprep.mubr.bf16.mxu0 %v937
    %2095 = vmatmul.mubr.bf16.gmra.mrb[0].mxu0 %v936
    %v2096 = vpop.f32.mrb[0].mxu0
    %v2097 = vadd.f32 0.0, %v2096
    %v2098 = vpop.f32.mrb[0].mxu0
    %v2099 = vpop.f32.mrb[0].mxu0
    %v2100 = vadd.f32 0.0, %v2099
    %v2101 = vpop.f32.mrb[0].mxu0
    %2102 = vdwg.mxu0
    %s2103 = sld [smem:[#allocation2 + $0x5]]
    %v2104 = vstv %s2103
    %v2105 = vmul.f32 %v2104, %v1977
    %v2106 = vmul.f32 %v2104, %v1980
    %v2107 = vmul.f32 %v2104, %v1985
    %v2108 = vmul.f32 %v2104, %v1988
    %v2109 = vmul.f32 %v2104, %v1993
    %v2110 = vmul.f32 %v2104, %v1996
    %v2111 = vmul.f32 %v2104, %v2001
    %v2112 = vmul.f32 %v2104, %v2004
    %v2113 = vmul.f32 %v2104, %v2009
    %v2114 = vmul.f32 %v2104, %v2012
    %v2115 = vmul.f32 %v2104, %v2017
    %v2116 = vmul.f32 %v2104, %v2020
    %v2117 = vmul.f32 %v2104, %v2025
    %v2118 = vmul.f32 %v2104, %v2028
    %v2119 = vmul.f32 %v2104, %v2033
    %v2120 = vmul.f32 %v2104, %v2036
    %v2121 = vmul.f32 %v2104, %v2041
    %v2122 = vmul.f32 %v2104, %v2044
    %v2123 = vmul.f32 %v2104, %v2049
    %v2124 = vmul.f32 %v2104, %v2052
    %v2125 = vmul.f32 %v2104, %v2057
    %v2126 = vmul.f32 %v2104, %v2060
    %v2127 = vmul.f32 %v2104, %v2065
    %v2128 = vmul.f32 %v2104, %v2068
    %v2129 = vmul.f32 %v2104, %v2073
    %v2130 = vmul.f32 %v2104, %v2076
    %v2131 = vmul.f32 %v2104, %v2081
    %v2132 = vmul.f32 %v2104, %v2084
    %v2133 = vmul.f32 %v2104, %v2089
    %v2134 = vmul.f32 %v2104, %v2092
    %v2135 = vmul.f32 %v2104, %v2097
    %v2136 = vmul.f32 %v2104, %v2100
    %v2137 = vadd.f32 %v1894, %v2105
    %v2138 = vadd.f32 %v1895, %v2106
    %v2139 = vadd.f32 %v1896, %v2107
    %v2140 = vadd.f32 %v1897, %v2108
    %v2141 = vadd.f32 %v1898, %v2109
    %v2142 = vadd.f32 %v1899, %v2110
    %v2143 = vadd.f32 %v1900, %v2111
    %v2144 = vadd.f32 %v1901, %v2112
    %v2145 = vadd.f32 %v1902, %v2113
    %v2146 = vadd.f32 %v1903, %v2114
    %v2147 = vadd.f32 %v1904, %v2115
    %v2148 = vadd.f32 %v1905, %v2116
    %v2149 = vadd.f32 %v1906, %v2117
    %v2150 = vadd.f32 %v1907, %v2118
    %v2151 = vadd.f32 %v1908, %v2119
    %v2152 = vadd.f32 %v1909, %v2120
    %v2153 = vadd.f32 %v1910, %v2121
    %v2154 = vadd.f32 %v1911, %v2122
    %v2155 = vadd.f32 %v1912, %v2123
    %v2156 = vadd.f32 %v1913, %v2124
    %v2157 = vadd.f32 %v1914, %v2125
    %v2158 = vadd.f32 %v1915, %v2126
    %v2159 = vadd.f32 %v1916, %v2127
    %v2160 = vadd.f32 %v1917, %v2128
    %v2161 = vadd.f32 %v1918, %v2129
    %v2162 = vadd.f32 %v1919, %v2130
    %v2163 = vadd.f32 %v1920, %v2131
    %v2164 = vadd.f32 %v1921, %v2132
    %v2165 = vadd.f32 %v1922, %v2133
    %v2166 = vadd.f32 %v1923, %v2134
    %v2167 = vadd.f32 %v1924, %v2135
    %v2168 = vadd.f32 %v1925, %v2136
    %v2169 = vpack.c.bf16 %v1980, %v1977
    %v2170 = vpack.c.bf16 %v1988, %v1985
    %v2171 = vpack.c.bf16 %v1996, %v1993
    %v2172 = vpack.c.bf16 %v2004, %v2001
    %v2173 = vpack.c.bf16 %v2012, %v2009
    %v2174 = vpack.c.bf16 %v2020, %v2017
    %v2175 = vpack.c.bf16 %v2028, %v2025
    %v2176 = vpack.c.bf16 %v2036, %v2033
    %v2177 = vpack.c.bf16 %v2044, %v2041
    %v2178 = vpack.c.bf16 %v2052, %v2049
    %v2179 = vpack.c.bf16 %v2060, %v2057
    %v2180 = vpack.c.bf16 %v2068, %v2065
    %v2181 = vpack.c.bf16 %v2076, %v2073
    %v2182 = vpack.c.bf16 %v2084, %v2081
    %v2183 = vpack.c.bf16 %v2092, %v2089
    %v2184 = vpack.c.bf16 %v2100, %v2097
    %2185 = vmatprep.subr.bf16.mxu0 0
    %2186 = vmatpush1.bf16.msra.mxu0 %v2169
    %2187 = vmatprep.subr.bf16.mxu0 0
    %2188 = vmatpush1.bf16.msra.mxu0 %v2170
    %2189 = vmatprep.subr.bf16.mxu0 0
    %2190 = vmatpush1.bf16.msra.mxu0 %v2171
    %2191 = vmatprep.subr.bf16.mxu0 0
    %2192 = vmatpush1.bf16.msra.mxu0 %v2172
    %2193 = vmatprep.subr.bf16.mxu0 0
    %2194 = vmatpush1.bf16.msra.mxu0 %v2173
    %2195 = vmatprep.subr.bf16.mxu0 0
    %2196 = vmatpush1.bf16.msra.mxu0 %v2174
    %2197 = vmatprep.subr.bf16.mxu0 0
    %2198 = vmatpush1.bf16.msra.mxu0 %v2175
    %2199 = vmatprep.subr.bf16.mxu0 0
    %2200 = vmatpush1.bf16.msra.mxu0 %v2176
    %2201 = vmatprep.subr.bf16.mxu0 0
    %2202 = vmatpush1.bf16.msra.mxu0 %v2177
    %2203 = vmatprep.subr.bf16.mxu0 0
    %2204 = vmatpush1.bf16.msra.mxu0 %v2178
    %2205 = vmatprep.subr.bf16.mxu0 0
    %2206 = vmatpush1.bf16.msra.mxu0 %v2179
    %2207 = vmatprep.subr.bf16.mxu0 0
    %2208 = vmatpush1.bf16.msra.mxu0 %v2180
    %2209 = vmatprep.subr.bf16.mxu0 0
    %2210 = vmatpush1.bf16.msra.mxu0 %v2181
    %2211 = vmatprep.subr.bf16.mxu0 0
    %2212 = vmatpush1.bf16.msra.mxu0 %v2182
    %2213 = vmatprep.subr.bf16.mxu0 0
    %2214 = vmatpush1.bf16.msra.mxu0 %v2183
    %2215 = vmatprep.subr.bf16.mxu0 0
    %2216 = vmatpush1.bf16.msra.mxu0 %v2184
    %2217 = vmatprep.mubr.bf16.mxu0 %v907
    %2218 = vmatmul.mubr.bf16.gmra.mrb[0].mxu0 %v906
    %v2219 = vpop.f32.mrb[0].mxu0
    %v2220 = vadd.f32 0.0, %v2219
    %v2221 = vpop.f32.mrb[0].mxu0
    %v2222 = vpop.f32.mrb[0].mxu0
    %v2223 = vadd.f32 0.0, %v2222
    %v2224 = vpop.f32.mrb[0].mxu0
    %2225 = vmatprep.mubr.bf16.mxu0 %v909
    %2226 = vmatmul.mubr.bf16.gmra.mrb[0].mxu0 %v908
    %v2227 = vpop.f32.mrb[0].mxu0
    %v2228 = vadd.f32 0.0, %v2227
    %v2229 = vpop.f32.mrb[0].mxu0
    %v2230 = vpop.f32.mrb[0].mxu0
    %v2231 = vadd.f32 0.0, %v2230
    %v2232 = vpop.f32.mrb[0].mxu0
    %2233 = vmatprep.mubr.bf16.mxu0 %v911
    %2234 = vmatmul.mubr.bf16.gmra.mrb[0].mxu0 %v910
    %v2235 = vpop.f32.mrb[0].mxu0
    %v2236 = vadd.f32 0.0, %v2235
    %v2237 = vpop.f32.mrb[0].mxu0
    %v2238 = vpop.f32.mrb[0].mxu0
    %v2239 = vadd.f32 0.0, %v2238
    %v2240 = vpop.f32.mrb[0].mxu0
    %2241 = vmatprep.mubr.bf16.mxu0 %v913
    %2242 = vmatmul.mubr.bf16.gmra.mrb[0].mxu0 %v912
    %v2243 = vpop.f32.mrb[0].mxu0
    %v2244 = vadd.f32 0.0, %v2243
    %v2245 = vpop.f32.mrb[0].mxu0
    %v2246 = vpop.f32.mrb[0].mxu0
    %v2247 = vadd.f32 0.0, %v2246
    %v2248 = vpop.f32.mrb[0].mxu0
    %2249 = vmatprep.mubr.bf16.mxu0 %v915
    %2250 = vmatmul.mubr.bf16.gmra.mrb[0].mxu0 %v914
    %v2251 = vpop.f32.mrb[0].mxu0
    %v2252 = vadd.f32 0.0, %v2251
    %v2253 = vpop.f32.mrb[0].mxu0
    %v2254 = vpop.f32.mrb[0].mxu0
    %v2255 = vadd.f32 0.0, %v2254
    %v2256 = vpop.f32.mrb[0].mxu0
    %2257 = vmatprep.mubr.bf16.mxu0 %v917
    %2258 = vmatmul.mubr.bf16.gmra.mrb[0].mxu0 %v916
    %v2259 = vpop.f32.mrb[0].mxu0
    %v2260 = vadd.f32 0.0, %v2259
    %v2261 = vpop.f32.mrb[0].mxu0
    %v2262 = vpop.f32.mrb[0].mxu0
    %v2263 = vadd.f32 0.0, %v2262
    %v2264 = vpop.f32.mrb[0].mxu0
    %2265 = vmatprep.mubr.bf16.mxu0 %v919
    %2266 = vmatmul.mubr.bf16.gmra.mrb[0].mxu0 %v918
    %v2267 = vpop.f32.mrb[0].mxu0
    %v2268 = vadd.f32 0.0, %v2267
    %v2269 = vpop.f32.mrb[0].mxu0
    %v2270 = vpop.f32.mrb[0].mxu0
    %v2271 = vadd.f32 0.0, %v2270
    %v2272 = vpop.f32.mrb[0].mxu0
    %2273 = vmatprep.mubr.bf16.mxu0 %v921
    %2274 = vmatmul.mubr.bf16.gmra.mrb[0].mxu0 %v920
    %v2275 = vpop.f32.mrb[0].mxu0
    %v2276 = vadd.f32 0.0, %v2275
    %v2277 = vpop.f32.mrb[0].mxu0
    %v2278 = vpop.f32.mrb[0].mxu0
    %v2279 = vadd.f32 0.0, %v2278
    %v2280 = vpop.f32.mrb[0].mxu0
    %2281 = vmatprep.mubr.bf16.mxu0 %v923
    %2282 = vmatmul.mubr.bf16.gmra.mrb[0].mxu0 %v922
    %v2283 = vpop.f32.mrb[0].mxu0
    %v2284 = vadd.f32 0.0, %v2283
    %v2285 = vpop.f32.mrb[0].mxu0
    %v2286 = vpop.f32.mrb[0].mxu0
    %v2287 = vadd.f32 0.0, %v2286
    %v2288 = vpop.f32.mrb[0].mxu0
    %2289 = vmatprep.mubr.bf16.mxu0 %v925
    %2290 = vmatmul.mubr.bf16.gmra.mrb[0].mxu0 %v924
    %v2291 = vpop.f32.mrb[0].mxu0
    %v2292 = vadd.f32 0.0, %v2291
    %v2293 = vpop.f32.mrb[0].mxu0
    %v2294 = vpop.f32.mrb[0].mxu0
    %v2295 = vadd.f32 0.0, %v2294
    %v2296 = vpop.f32.mrb[0].mxu0
    %2297 = vmatprep.mubr.bf16.mxu0 %v927
    %2298 = vmatmul.mubr.bf16.gmra.mrb[0].mxu0 %v926
    %v2299 = vpop.f32.mrb[0].mxu0
    %v2300 = vadd.f32 0.0, %v2299
    %v2301 = vpop.f32.mrb[0].mxu0
    %v2302 = vpop.f32.mrb[0].mxu0
    %v2303 = vadd.f32 0.0, %v2302
    %v2304 = vpop.f32.mrb[0].mxu0
    %2305 = vmatprep.mubr.bf16.mxu0 %v929
    %2306 = vmatmul.mubr.bf16.gmra.mrb[0].mxu0 %v928
    %v2307 = vpop.f32.mrb[0].mxu0
    %v2308 = vadd.f32 0.0, %v2307
    %v2309 = vpop.f32.mrb[0].mxu0
    %v2310 = vpop.f32.mrb[0].mxu0
    %v2311 = vadd.f32 0.0, %v2310
    %v2312 = vpop.f32.mrb[0].mxu0
    %2313 = vmatprep.mubr.bf16.mxu0 %v931
    %2314 = vmatmul.mubr.bf16.gmra.mrb[0].mxu0 %v930
    %v2315 = vpop.f32.mrb[0].mxu0
    %v2316 = vadd.f32 0.0, %v2315
    %v2317 = vpop.f32.mrb[0].mxu0
    %v2318 = vpop.f32.mrb[0].mxu0
    %v2319 = vadd.f32 0.0, %v2318
    %v2320 = vpop.f32.mrb[0].mxu0
    %2321 = vmatprep.mubr.bf16.mxu0 %v933
    %2322 = vmatmul.mubr.bf16.gmra.mrb[0].mxu0 %v932
    %v2323 = vpop.f32.mrb[0].mxu0
    %v2324 = vadd.f32 0.0, %v2323
    %v2325 = vpop.f32.mrb[0].mxu0
    %v2326 = vpop.f32.mrb[0].mxu0
    %v2327 = vadd.f32 0.0, %v2326
    %v2328 = vpop.f32.mrb[0].mxu0
    %2329 = vmatprep.mubr.bf16.mxu0 %v935
    %2330 = vmatmul.mubr.bf16.gmra.mrb[0].mxu0 %v934
    %v2331 = vpop.f32.mrb[0].mxu0
    %v2332 = vadd.f32 0.0, %v2331
    %v2333 = vpop.f32.mrb[0].mxu0
    %v2334 = vpop.f32.mrb[0].mxu0
    %v2335 = vadd.f32 0.0, %v2334
    %v2336 = vpop.f32.mrb[0].mxu0
    %2337 = vmatprep.mubr.bf16.mxu0 %v937
    %2338 = vmatmul.mubr.bf16.gmra.mrb[0].mxu0 %v936
    %v2339 = vpop.f32.mrb[0].mxu0
    %v2340 = vadd.f32 0.0, %v2339
    %v2341 = vpop.f32.mrb[0].mxu0
    %v2342 = vpop.f32.mrb[0].mxu0
    %v2343 = vadd.f32 0.0, %v2342
    %v2344 = vpop.f32.mrb[0].mxu0
    %2345 = vdwg.mxu0
    %s2346 = sld [smem:[#allocation2 + $0x6]]
    %v2347 = vstv %s2346
    %v2348 = vmul.f32 %v2347, %v2220
    %v2349 = vmul.f32 %v2347, %v2223
    %v2350 = vmul.f32 %v2347, %v2228
    %v2351 = vmul.f32 %v2347, %v2231
    %v2352 = vmul.f32 %v2347, %v2236
    %v2353 = vmul.f32 %v2347, %v2239
    %v2354 = vmul.f32 %v2347, %v2244
    %v2355 = vmul.f32 %v2347, %v2247
    %v2356 = vmul.f32 %v2347, %v2252
    %v2357 = vmul.f32 %v2347, %v2255
    %v2358 = vmul.f32 %v2347, %v2260
    %v2359 = vmul.f32 %v2347, %v2263
    %v2360 = vmul.f32 %v2347, %v2268
    %v2361 = vmul.f32 %v2347, %v2271
    %v2362 = vmul.f32 %v2347, %v2276
    %v2363 = vmul.f32 %v2347, %v2279
    %v2364 = vmul.f32 %v2347, %v2284
    %v2365 = vmul.f32 %v2347, %v2287
    %v2366 = vmul.f32 %v2347, %v2292
    %v2367 = vmul.f32 %v2347, %v2295
    %v2368 = vmul.f32 %v2347, %v2300
    %v2369 = vmul.f32 %v2347, %v2303
    %v2370 = vmul.f32 %v2347, %v2308
    %v2371 = vmul.f32 %v2347, %v2311
    %v2372 = vmul.f32 %v2347, %v2316
    %v2373 = vmul.f32 %v2347, %v2319
    %v2374 = vmul.f32 %v2347, %v2324
    %v2375 = vmul.f32 %v2347, %v2327
    %v2376 = vmul.f32 %v2347, %v2332
    %v2377 = vmul.f32 %v2347, %v2335
    %v2378 = vmul.f32 %v2347, %v2340
    %v2379 = vmul.f32 %v2347, %v2343
    %v2380 = vadd.f32 %v2137, %v2348
    %v2381 = vadd.f32 %v2138, %v2349
    %v2382 = vadd.f32 %v2139, %v2350
    %v2383 = vadd.f32 %v2140, %v2351
    %v2384 = vadd.f32 %v2141, %v2352
    %v2385 = vadd.f32 %v2142, %v2353
    %v2386 = vadd.f32 %v2143, %v2354
    %v2387 = vadd.f32 %v2144, %v2355
    %v2388 = vadd.f32 %v2145, %v2356
    %v2389 = vadd.f32 %v2146, %v2357
    %v2390 = vadd.f32 %v2147, %v2358
    %v2391 = vadd.f32 %v2148, %v2359
    %v2392 = vadd.f32 %v2149, %v2360
    %v2393 = vadd.f32 %v2150, %v2361
    %v2394 = vadd.f32 %v2151, %v2362
    %v2395 = vadd.f32 %v2152, %v2363
    %v2396 = vadd.f32 %v2153, %v2364
    %v2397 = vadd.f32 %v2154, %v2365
    %v2398 = vadd.f32 %v2155, %v2366
    %v2399 = vadd.f32 %v2156, %v2367
    %v2400 = vadd.f32 %v2157, %v2368
    %v2401 = vadd.f32 %v2158, %v2369
    %v2402 = vadd.f32 %v2159, %v2370
    %v2403 = vadd.f32 %v2160, %v2371
    %v2404 = vadd.f32 %v2161, %v2372
    %v2405 = vadd.f32 %v2162, %v2373
    %v2406 = vadd.f32 %v2163, %v2374
    %v2407 = vadd.f32 %v2164, %v2375
    %v2408 = vadd.f32 %v2165, %v2376
    %v2409 = vadd.f32 %v2166, %v2377
    %v2410 = vadd.f32 %v2167, %v2378
    %v2411 = vadd.f32 %v2168, %v2379
    %v2412 = vpack.c.bf16 %v2223, %v2220
    %v2413 = vpack.c.bf16 %v2231, %v2228
    %v2414 = vpack.c.bf16 %v2239, %v2236
    %v2415 = vpack.c.bf16 %v2247, %v2244
    %v2416 = vpack.c.bf16 %v2255, %v2252
    %v2417 = vpack.c.bf16 %v2263, %v2260
    %v2418 = vpack.c.bf16 %v2271, %v2268
    %v2419 = vpack.c.bf16 %v2279, %v2276
    %v2420 = vpack.c.bf16 %v2287, %v2284
    %v2421 = vpack.c.bf16 %v2295, %v2292
    %v2422 = vpack.c.bf16 %v2303, %v2300
    %v2423 = vpack.c.bf16 %v2311, %v2308
    %v2424 = vpack.c.bf16 %v2319, %v2316
    %v2425 = vpack.c.bf16 %v2327, %v2324
    %v2426 = vpack.c.bf16 %v2335, %v2332
    %v2427 = vpack.c.bf16 %v2343, %v2340
    %2428 = vmatprep.subr.bf16.mxu0 0
    %2429 = vmatpush1.bf16.msra.mxu0 %v2412
    %2430 = vmatprep.subr.bf16.mxu0 0
    %2431 = vmatpush1.bf16.msra.mxu0 %v2413
    %2432 = vmatprep.subr.bf16.mxu0 0
    %2433 = vmatpush1.bf16.msra.mxu0 %v2414
    %2434 = vmatprep.subr.bf16.mxu0 0
    %2435 = vmatpush1.bf16.msra.mxu0 %v2415
    %2436 = vmatprep.subr.bf16.mxu0 0
    %2437 = vmatpush1.bf16.msra.mxu0 %v2416
    %2438 = vmatprep.subr.bf16.mxu0 0
    %2439 = vmatpush1.bf16.msra.mxu0 %v2417
    %2440 = vmatprep.subr.bf16.mxu0 0
    %2441 = vmatpush1.bf16.msra.mxu0 %v2418
    %2442 = vmatprep.subr.bf16.mxu0 0
    %2443 = vmatpush1.bf16.msra.mxu0 %v2419
    %2444 = vmatprep.subr.bf16.mxu0 0
    %2445 = vmatpush1.bf16.msra.mxu0 %v2420
    %2446 = vmatprep.subr.bf16.mxu0 0
    %2447 = vmatpush1.bf16.msra.mxu0 %v2421
    %2448 = vmatprep.subr.bf16.mxu0 0
    %2449 = vmatpush1.bf16.msra.mxu0 %v2422
    %2450 = vmatprep.subr.bf16.mxu0 0
    %2451 = vmatpush1.bf16.msra.mxu0 %v2423
    %2452 = vmatprep.subr.bf16.mxu0 0
    %2453 = vmatpush1.bf16.msra.mxu0 %v2424
    %2454 = vmatprep.subr.bf16.mxu0 0
    %2455 = vmatpush1.bf16.msra.mxu0 %v2425
    %2456 = vmatprep.subr.bf16.mxu0 0
    %2457 = vmatpush1.bf16.msra.mxu0 %v2426
    %2458 = vmatprep.subr.bf16.mxu0 0
    %2459 = vmatpush1.bf16.msra.mxu0 %v2427
    %2460 = vmatprep.mubr.bf16.mxu0 %v907
    %2461 = vmatmul.mubr.bf16.gmra.mrb[0].mxu0 %v906
    %v2462 = vpop.f32.mrb[0].mxu0
    %v2463 = vadd.f32 0.0, %v2462
    %v2464 = vpop.f32.mrb[0].mxu0
    %v2465 = vpop.f32.mrb[0].mxu0
    %v2466 = vadd.f32 0.0, %v2465
    %v2467 = vpop.f32.mrb[0].mxu0
    %2468 = vmatprep.mubr.bf16.mxu0 %v909
    %2469 = vmatmul.mubr.bf16.gmra.mrb[0].mxu0 %v908
    %v2470 = vpop.f32.mrb[0].mxu0
    %v2471 = vadd.f32 0.0, %v2470
    %v2472 = vpop.f32.mrb[0].mxu0
    %v2473 = vpop.f32.mrb[0].mxu0
    %v2474 = vadd.f32 0.0, %v2473
    %v2475 = vpop.f32.mrb[0].mxu0
    %2476 = vmatprep.mubr.bf16.mxu0 %v911
    %2477 = vmatmul.mubr.bf16.gmra.mrb[0].mxu0 %v910
    %v2478 = vpop.f32.mrb[0].mxu0
    %v2479 = vadd.f32 0.0, %v2478
    %v2480 = vpop.f32.mrb[0].mxu0
    %v2481 = vpop.f32.mrb[0].mxu0
    %v2482 = vadd.f32 0.0, %v2481
    %v2483 = vpop.f32.mrb[0].mxu0
    %2484 = vmatprep.mubr.bf16.mxu0 %v913
    %2485 = vmatmul.mubr.bf16.gmra.mrb[0].mxu0 %v912
    %v2486 = vpop.f32.mrb[0].mxu0
    %v2487 = vadd.f32 0.0, %v2486
    %v2488 = vpop.f32.mrb[0].mxu0
    %v2489 = vpop.f32.mrb[0].mxu0
    %v2490 = vadd.f32 0.0, %v2489
    %v2491 = vpop.f32.mrb[0].mxu0
    %2492 = vmatprep.mubr.bf16.mxu0 %v915
    %2493 = vmatmul.mubr.bf16.gmra.mrb[0].mxu0 %v914
    %v2494 = vpop.f32.mrb[0].mxu0
    %v2495 = vadd.f32 0.0, %v2494
    %v2496 = vpop.f32.mrb[0].mxu0
    %v2497 = vpop.f32.mrb[0].mxu0
    %v2498 = vadd.f32 0.0, %v2497
    %v2499 = vpop.f32.mrb[0].mxu0
    %2500 = vmatprep.mubr.bf16.mxu0 %v917
    %2501 = vmatmul.mubr.bf16.gmra.mrb[0].mxu0 %v916
    %v2502 = vpop.f32.mrb[0].mxu0
    %v2503 = vadd.f32 0.0, %v2502
    %v2504 = vpop.f32.mrb[0].mxu0
    %v2505 = vpop.f32.mrb[0].mxu0
    %v2506 = vadd.f32 0.0, %v2505
    %v2507 = vpop.f32.mrb[0].mxu0
    %2508 = vmatprep.mubr.bf16.mxu0 %v919
    %2509 = vmatmul.mubr.bf16.gmra.mrb[0].mxu0 %v918
    %v2510 = vpop.f32.mrb[0].mxu0
    %v2511 = vadd.f32 0.0, %v2510
    %v2512 = vpop.f32.mrb[0].mxu0
    %v2513 = vpop.f32.mrb[0].mxu0
    %v2514 = vadd.f32 0.0, %v2513
    %v2515 = vpop.f32.mrb[0].mxu0
    %2516 = vmatprep.mubr.bf16.mxu0 %v921
    %2517 = vmatmul.mubr.bf16.gmra.mrb[0].mxu0 %v920
    %v2518 = vpop.f32.mrb[0].mxu0
    %v2519 = vadd.f32 0.0, %v2518
    %v2520 = vpop.f32.mrb[0].mxu0
    %v2521 = vpop.f32.mrb[0].mxu0
    %v2522 = vadd.f32 0.0, %v2521
    %v2523 = vpop.f32.mrb[0].mxu0
    %2524 = vmatprep.mubr.bf16.mxu0 %v923
    %2525 = vmatmul.mubr.bf16.gmra.mrb[0].mxu0 %v922
    %v2526 = vpop.f32.mrb[0].mxu0
    %v2527 = vadd.f32 0.0, %v2526
    %v2528 = vpop.f32.mrb[0].mxu0
    %v2529 = vpop.f32.mrb[0].mxu0
    %v2530 = vadd.f32 0.0, %v2529
    %v2531 = vpop.f32.mrb[0].mxu0
    %2532 = vmatprep.mubr.bf16.mxu0 %v925
    %2533 = vmatmul.mubr.bf16.gmra.mrb[0].mxu0 %v924
    %v2534 = vpop.f32.mrb[0].mxu0
    %v2535 = vadd.f32 0.0, %v2534
    %v2536 = vpop.f32.mrb[0].mxu0
    %v2537 = vpop.f32.mrb[0].mxu0
    %v2538 = vadd.f32 0.0, %v2537
    %v2539 = vpop.f32.mrb[0].mxu0
    %2540 = vmatprep.mubr.bf16.mxu0 %v927
    %2541 = vmatmul.mubr.bf16.gmra.mrb[0].mxu0 %v926
    %v2542 = vpop.f32.mrb[0].mxu0
    %v2543 = vadd.f32 0.0, %v2542
    %v2544 = vpop.f32.mrb[0].mxu0
    %v2545 = vpop.f32.mrb[0].mxu0
    %v2546 = vadd.f32 0.0, %v2545
    %v2547 = vpop.f32.mrb[0].mxu0
    %2548 = vmatprep.mubr.bf16.mxu0 %v929
    %2549 = vmatmul.mubr.bf16.gmra.mrb[0].mxu0 %v928
    %v2550 = vpop.f32.mrb[0].mxu0
    %v2551 = vadd.f32 0.0, %v2550
    %v2552 = vpop.f32.mrb[0].mxu0
    %v2553 = vpop.f32.mrb[0].mxu0
    %v2554 = vadd.f32 0.0, %v2553
    %v2555 = vpop.f32.mrb[0].mxu0
    %2556 = vmatprep.mubr.bf16.mxu0 %v931
    %2557 = vmatmul.mubr.bf16.gmra.mrb[0].mxu0 %v930
    %v2558 = vpop.f32.mrb[0].mxu0
    %v2559 = vadd.f32 0.0, %v2558
    %v2560 = vpop.f32.mrb[0].mxu0
    %v2561 = vpop.f32.mrb[0].mxu0
    %v2562 = vadd.f32 0.0, %v2561
    %v2563 = vpop.f32.mrb[0].mxu0
    %2564 = vmatprep.mubr.bf16.mxu0 %v933
    %2565 = vmatmul.mubr.bf16.gmra.mrb[0].mxu0 %v932
    %v2566 = vpop.f32.mrb[0].mxu0
    %v2567 = vadd.f32 0.0, %v2566
    %v2568 = vpop.f32.mrb[0].mxu0
    %v2569 = vpop.f32.mrb[0].mxu0
    %v2570 = vadd.f32 0.0, %v2569
    %v2571 = vpop.f32.mrb[0].mxu0
    %2572 = vmatprep.mubr.bf16.mxu0 %v935
    %2573 = vmatmul.mubr.bf16.gmra.mrb[0].mxu0 %v934
    %v2574 = vpop.f32.mrb[0].mxu0
    %v2575 = vadd.f32 0.0, %v2574
    %v2576 = vpop.f32.mrb[0].mxu0
    %v2577 = vpop.f32.mrb[0].mxu0
    %v2578 = vadd.f32 0.0, %v2577
    %v2579 = vpop.f32.mrb[0].mxu0
    %2580 = vmatprep.mubr.bf16.mxu0 %v937
    %2581 = vmatmul.mubr.bf16.gmra.mrb[0].mxu0 %v936
    %v2582 = vpop.f32.mrb[0].mxu0
    %v2583 = vadd.f32 0.0, %v2582
    %v2584 = vpop.f32.mrb[0].mxu0
    %v2585 = vpop.f32.mrb[0].mxu0
    %v2586 = vadd.f32 0.0, %v2585
    %v2587 = vpop.f32.mrb[0].mxu0
    %2588 = vdwg.mxu0
    %s2589 = sld [smem:[#allocation2 + $0x7]]
    %v2590 = vstv %s2589
    %v2591 = vmul.f32 %v2590, %v2463
    %v2592 = vmul.f32 %v2590, %v2466
    %v2593 = vmul.f32 %v2590, %v2471
    %v2594 = vmul.f32 %v2590, %v2474
    %v2595 = vmul.f32 %v2590, %v2479
    %v2596 = vmul.f32 %v2590, %v2482
    %v2597 = vmul.f32 %v2590, %v2487
    %v2598 = vmul.f32 %v2590, %v2490
    %v2599 = vmul.f32 %v2590, %v2495
    %v2600 = vmul.f32 %v2590, %v2498
    %v2601 = vmul.f32 %v2590, %v2503
    %v2602 = vmul.f32 %v2590, %v2506
    %v2603 = vmul.f32 %v2590, %v2511
    %v2604 = vmul.f32 %v2590, %v2514
    %v2605 = vmul.f32 %v2590, %v2519
    %v2606 = vmul.f32 %v2590, %v2522
    %v2607 = vmul.f32 %v2590, %v2527
    %v2608 = vmul.f32 %v2590, %v2530
    %v2609 = vmul.f32 %v2590, %v2535
    %v2610 = vmul.f32 %v2590, %v2538
    %v2611 = vmul.f32 %v2590, %v2543
    %v2612 = vmul.f32 %v2590, %v2546
    %v2613 = vmul.f32 %v2590, %v2551
    %v2614 = vmul.f32 %v2590, %v2554
    %v2615 = vmul.f32 %v2590, %v2559
    %v2616 = vmul.f32 %v2590, %v2562
    %v2617 = vmul.f32 %v2590, %v2567
    %v2618 = vmul.f32 %v2590, %v2570
    %v2619 = vmul.f32 %v2590, %v2575
    %v2620 = vmul.f32 %v2590, %v2578
    %v2621 = vmul.f32 %v2590, %v2583
    %v2622 = vmul.f32 %v2590, %v2586
    %v2623 = vadd.f32 %v2380, %v2591
    %v2624 = vadd.f32 %v2381, %v2592
    %v2625 = vadd.f32 %v2382, %v2593
    %v2626 = vadd.f32 %v2383, %v2594
    %v2627 = vadd.f32 %v2384, %v2595
    %v2628 = vadd.f32 %v2385, %v2596
    %v2629 = vadd.f32 %v2386, %v2597
    %v2630 = vadd.f32 %v2387, %v2598
    %v2631 = vadd.f32 %v2388, %v2599
    %v2632 = vadd.f32 %v2389, %v2600
    %v2633 = vadd.f32 %v2390, %v2601
    %v2634 = vadd.f32 %v2391, %v2602
    %v2635 = vadd.f32 %v2392, %v2603
    %v2636 = vadd.f32 %v2393, %v2604
    %v2637 = vadd.f32 %v2394, %v2605
    %v2638 = vadd.f32 %v2395, %v2606
    %v2639 = vadd.f32 %v2396, %v2607
    %v2640 = vadd.f32 %v2397, %v2608
    %v2641 = vadd.f32 %v2398, %v2609
    %v2642 = vadd.f32 %v2399, %v2610
    %v2643 = vadd.f32 %v2400, %v2611
    %v2644 = vadd.f32 %v2401, %v2612
    %v2645 = vadd.f32 %v2402, %v2613
    %v2646 = vadd.f32 %v2403, %v2614
    %v2647 = vadd.f32 %v2404, %v2615
    %v2648 = vadd.f32 %v2405, %v2616
    %v2649 = vadd.f32 %v2406, %v2617
    %v2650 = vadd.f32 %v2407, %v2618
    %v2651 = vadd.f32 %v2408, %v2619
    %v2652 = vadd.f32 %v2409, %v2620
    %v2653 = vadd.f32 %v2410, %v2621
    %v2654 = vadd.f32 %v2411, %v2622
    %v2655 = vpack.c.bf16 %v2466, %v2463
    %v2656 = vpack.c.bf16 %v2474, %v2471
    %v2657 = vpack.c.bf16 %v2482, %v2479
    %v2658 = vpack.c.bf16 %v2490, %v2487
    %v2659 = vpack.c.bf16 %v2498, %v2495
    %v2660 = vpack.c.bf16 %v2506, %v2503
    %v2661 = vpack.c.bf16 %v2514, %v2511
    %v2662 = vpack.c.bf16 %v2522, %v2519
    %v2663 = vpack.c.bf16 %v2530, %v2527
    %v2664 = vpack.c.bf16 %v2538, %v2535
    %v2665 = vpack.c.bf16 %v2546, %v2543
    %v2666 = vpack.c.bf16 %v2554, %v2551
    %v2667 = vpack.c.bf16 %v2562, %v2559
    %v2668 = vpack.c.bf16 %v2570, %v2567
    %v2669 = vpack.c.bf16 %v2578, %v2575
    %v2670 = vpack.c.bf16 %v2586, %v2583
    %2671 = vmatprep.subr.bf16.mxu0 0
    %2672 = vmatpush1.bf16.msra.mxu0 %v2655
    %2673 = vmatprep.subr.bf16.mxu0 0
    %2674 = vmatpush1.bf16.msra.mxu0 %v2656
    %2675 = vmatprep.subr.bf16.mxu0 0
    %2676 = vmatpush1.bf16.msra.mxu0 %v2657
    %2677 = vmatprep.subr.bf16.mxu0 0
    %2678 = vmatpush1.bf16.msra.mxu0 %v2658
    %2679 = vmatprep.subr.bf16.mxu0 0
    %2680 = vmatpush1.bf16.msra.mxu0 %v2659
    %2681 = vmatprep.subr.bf16.mxu0 0
    %2682 = vmatpush1.bf16.msra.mxu0 %v2660
    %2683 = vmatprep.subr.bf16.mxu0 0
    %2684 = vmatpush1.bf16.msra.mxu0 %v2661
    %2685 = vmatprep.subr.bf16.mxu0 0
    %2686 = vmatpush1.bf16.msra.mxu0 %v2662
    %2687 = vmatprep.subr.bf16.mxu0 0
    %2688 = vmatpush1.bf16.msra.mxu0 %v2663
    %2689 = vmatprep.subr.bf16.mxu0 0
    %2690 = vmatpush1.bf16.msra.mxu0 %v2664
    %2691 = vmatprep.subr.bf16.mxu0 0
    %2692 = vmatpush1.bf16.msra.mxu0 %v2665
    %2693 = vmatprep.subr.bf16.mxu0 0
    %2694 = vmatpush1.bf16.msra.mxu0 %v2666
    %2695 = vmatprep.subr.bf16.mxu0 0
    %2696 = vmatpush1.bf16.msra.mxu0 %v2667
    %2697 = vmatprep.subr.bf16.mxu0 0
    %2698 = vmatpush1.bf16.msra.mxu0 %v2668
    %2699 = vmatprep.subr.bf16.mxu0 0
    %2700 = vmatpush1.bf16.msra.mxu0 %v2669
    %2701 = vmatprep.subr.bf16.mxu0 0
    %2702 = vmatpush1.bf16.msra.mxu0 %v2670
    %2703 = vmatprep.mubr.bf16.mxu0 %v907
    %2704 = vmatmul.mubr.bf16.gmra.mrb[0].mxu0 %v906
    %v2705 = vpop.f32.mrb[0].mxu0
    %v2706 = vadd.f32 0.0, %v2705
    %v2707 = vpop.f32.mrb[0].mxu0
    %v2708 = vpop.f32.mrb[0].mxu0
    %v2709 = vadd.f32 0.0, %v2708
    %v2710 = vpop.f32.mrb[0].mxu0
    %2711 = vmatprep.mubr.bf16.mxu0 %v909
    %2712 = vmatmul.mubr.bf16.gmra.mrb[0].mxu0 %v908
    %v2713 = vpop.f32.mrb[0].mxu0
    %v2714 = vadd.f32 0.0, %v2713
    %v2715 = vpop.f32.mrb[0].mxu0
    %v2716 = vpop.f32.mrb[0].mxu0
    %v2717 = vadd.f32 0.0, %v2716
    %v2718 = vpop.f32.mrb[0].mxu0
    %2719 = vmatprep.mubr.bf16.mxu0 %v911
    %2720 = vmatmul.mubr.bf16.gmra.mrb[0].mxu0 %v910
    %v2721 = vpop.f32.mrb[0].mxu0
    %v2722 = vadd.f32 0.0, %v2721
    %v2723 = vpop.f32.mrb[0].mxu0
    %v2724 = vpop.f32.mrb[0].mxu0
    %v2725 = vadd.f32 0.0, %v2724
    %v2726 = vpop.f32.mrb[0].mxu0
    %2727 = vmatprep.mubr.bf16.mxu0 %v913
    %2728 = vmatmul.mubr.bf16.gmra.mrb[0].mxu0 %v912
    %v2729 = vpop.f32.mrb[0].mxu0
    %v2730 = vadd.f32 0.0, %v2729
    %v2731 = vpop.f32.mrb[0].mxu0
    %v2732 = vpop.f32.mrb[0].mxu0
    %v2733 = vadd.f32 0.0, %v2732
    %v2734 = vpop.f32.mrb[0].mxu0
    %2735 = vmatprep.mubr.bf16.mxu0 %v915
    %2736 = vmatmul.mubr.bf16.gmra.mrb[0].mxu0 %v914
    %v2737 = vpop.f32.mrb[0].mxu0
    %v2738 = vadd.f32 0.0, %v2737
    %v2739 = vpop.f32.mrb[0].mxu0
    %v2740 = vpop.f32.mrb[0].mxu0
    %v2741 = vadd.f32 0.0, %v2740
    %v2742 = vpop.f32.mrb[0].mxu0
    %2743 = vmatprep.mubr.bf16.mxu0 %v917
    %2744 = vmatmul.mubr.bf16.gmra.mrb[0].mxu0 %v916
    %v2745 = vpop.f32.mrb[0].mxu0
    %v2746 = vadd.f32 0.0, %v2745
    %v2747 = vpop.f32.mrb[0].mxu0
    %v2748 = vpop.f32.mrb[0].mxu0
    %v2749 = vadd.f32 0.0, %v2748
    %v2750 = vpop.f32.mrb[0].mxu0
    %2751 = vmatprep.mubr.bf16.mxu0 %v919
    %2752 = vmatmul.mubr.bf16.gmra.mrb[0].mxu0 %v918
    %v2753 = vpop.f32.mrb[0].mxu0
    %v2754 = vadd.f32 0.0, %v2753
    %v2755 = vpop.f32.mrb[0].mxu0
    %v2756 = vpop.f32.mrb[0].mxu0
    %v2757 = vadd.f32 0.0, %v2756
    %v2758 = vpop.f32.mrb[0].mxu0
    %2759 = vmatprep.mubr.bf16.mxu0 %v921
    %2760 = vmatmul.mubr.bf16.gmra.mrb[0].mxu0 %v920
    %v2761 = vpop.f32.mrb[0].mxu0
    %v2762 = vadd.f32 0.0, %v2761
    %v2763 = vpop.f32.mrb[0].mxu0
    %v2764 = vpop.f32.mrb[0].mxu0
    %v2765 = vadd.f32 0.0, %v2764
    %v2766 = vpop.f32.mrb[0].mxu0
    %2767 = vmatprep.mubr.bf16.mxu0 %v923
    %2768 = vmatmul.mubr.bf16.gmra.mrb[0].mxu0 %v922
    %v2769 = vpop.f32.mrb[0].mxu0
    %v2770 = vadd.f32 0.0, %v2769
    %v2771 = vpop.f32.mrb[0].mxu0
    %v2772 = vpop.f32.mrb[0].mxu0
    %v2773 = vadd.f32 0.0, %v2772
    %v2774 = vpop.f32.mrb[0].mxu0
    %2775 = vmatprep.mubr.bf16.mxu0 %v925
    %2776 = vmatmul.mubr.bf16.gmra.mrb[0].mxu0 %v924
    %v2777 = vpop.f32.mrb[0].mxu0
    %v2778 = vadd.f32 0.0, %v2777
    %v2779 = vpop.f32.mrb[0].mxu0
    %v2780 = vpop.f32.mrb[0].mxu0
    %v2781 = vadd.f32 0.0, %v2780
    %v2782 = vpop.f32.mrb[0].mxu0
    %2783 = vmatprep.mubr.bf16.mxu0 %v927
    %2784 = vmatmul.mubr.bf16.gmra.mrb[0].mxu0 %v926
    %v2785 = vpop.f32.mrb[0].mxu0
    %v2786 = vadd.f32 0.0, %v2785
    %v2787 = vpop.f32.mrb[0].mxu0
    %v2788 = vpop.f32.mrb[0].mxu0
    %v2789 = vadd.f32 0.0, %v2788
    %v2790 = vpop.f32.mrb[0].mxu0
    %2791 = vmatprep.mubr.bf16.mxu0 %v929
    %2792 = vmatmul.mubr.bf16.gmra.mrb[0].mxu0 %v928
    %v2793 = vpop.f32.mrb[0].mxu0
    %v2794 = vadd.f32 0.0, %v2793
    %v2795 = vpop.f32.mrb[0].mxu0
    %v2796 = vpop.f32.mrb[0].mxu0
    %v2797 = vadd.f32 0.0, %v2796
    %v2798 = vpop.f32.mrb[0].mxu0
    %2799 = vmatprep.mubr.bf16.mxu0 %v931
    %2800 = vmatmul.mubr.bf16.gmra.mrb[0].mxu0 %v930
    %v2801 = vpop.f32.mrb[0].mxu0
    %v2802 = vadd.f32 0.0, %v2801
    %v2803 = vpop.f32.mrb[0].mxu0
    %v2804 = vpop.f32.mrb[0].mxu0
    %v2805 = vadd.f32 0.0, %v2804
    %v2806 = vpop.f32.mrb[0].mxu0
    %2807 = vmatprep.mubr.bf16.mxu0 %v933
    %2808 = vmatmul.mubr.bf16.gmra.mrb[0].mxu0 %v932
    %v2809 = vpop.f32.mrb[0].mxu0
    %v2810 = vadd.f32 0.0, %v2809
    %v2811 = vpop.f32.mrb[0].mxu0
    %v2812 = vpop.f32.mrb[0].mxu0
    %v2813 = vadd.f32 0.0, %v2812
    %v2814 = vpop.f32.mrb[0].mxu0
    %2815 = vmatprep.mubr.bf16.mxu0 %v935
    %2816 = vmatmul.mubr.bf16.gmra.mrb[0].mxu0 %v934
    %v2817 = vpop.f32.mrb[0].mxu0
    %v2818 = vadd.f32 0.0, %v2817
    %v2819 = vpop.f32.mrb[0].mxu0
    %v2820 = vpop.f32.mrb[0].mxu0
    %v2821 = vadd.f32 0.0, %v2820
    %v2822 = vpop.f32.mrb[0].mxu0
    %2823 = vmatprep.mubr.bf16.mxu0 %v937
    %2824 = vmatmul.mubr.bf16.gmra.mrb[0].mxu0 %v936
    %v2825 = vpop.f32.mrb[0].mxu0
    %v2826 = vadd.f32 0.0, %v2825
    %v2827 = vpop.f32.mrb[0].mxu0
    %v2828 = vpop.f32.mrb[0].mxu0
    %v2829 = vadd.f32 0.0, %v2828
    %v2830 = vpop.f32.mrb[0].mxu0
    %2831 = vdwg.mxu0
    %s2832 = sld [smem:[#allocation2 + $0x8]]
    %v2833 = vstv %s2832
    %v2834 = vmul.f32 %v2833, %v2706
    %v2835 = vmul.f32 %v2833, %v2709
    %v2836 = vmul.f32 %v2833, %v2714
    %v2837 = vmul.f32 %v2833, %v2717
    %v2838 = vmul.f32 %v2833, %v2722
    %v2839 = vmul.f32 %v2833, %v2725
    %v2840 = vmul.f32 %v2833, %v2730
    %v2841 = vmul.f32 %v2833, %v2733
    %v2842 = vmul.f32 %v2833, %v2738
    %v2843 = vmul.f32 %v2833, %v2741
    %v2844 = vmul.f32 %v2833, %v2746
    %v2845 = vmul.f32 %v2833, %v2749
    %v2846 = vmul.f32 %v2833, %v2754
    %v2847 = vmul.f32 %v2833, %v2757
    %v2848 = vmul.f32 %v2833, %v2762
    %v2849 = vmul.f32 %v2833, %v2765
    %v2850 = vmul.f32 %v2833, %v2770
    %v2851 = vmul.f32 %v2833, %v2773
    %v2852 = vmul.f32 %v2833, %v2778
    %v2853 = vmul.f32 %v2833, %v2781
    %v2854 = vmul.f32 %v2833, %v2786
    %v2855 = vmul.f32 %v2833, %v2789
    %v2856 = vmul.f32 %v2833, %v2794
    %v2857 = vmul.f32 %v2833, %v2797
    %v2858 = vmul.f32 %v2833, %v2802
    %v2859 = vmul.f32 %v2833, %v2805
    %v2860 = vmul.f32 %v2833, %v2810
    %v2861 = vmul.f32 %v2833, %v2813
    %v2862 = vmul.f32 %v2833, %v2818
    %v2863 = vmul.f32 %v2833, %v2821
    %v2864 = vmul.f32 %v2833, %v2826
    %v2865 = vmul.f32 %v2833, %v2829
    %v2866 = vadd.f32 %v2623, %v2834
    %v2867 = vadd.f32 %v2624, %v2835
    %v2868 = vadd.f32 %v2625, %v2836
    %v2869 = vadd.f32 %v2626, %v2837
    %v2870 = vadd.f32 %v2627, %v2838
    %v2871 = vadd.f32 %v2628, %v2839
    %v2872 = vadd.f32 %v2629, %v2840
    %v2873 = vadd.f32 %v2630, %v2841
    %v2874 = vadd.f32 %v2631, %v2842
    %v2875 = vadd.f32 %v2632, %v2843
    %v2876 = vadd.f32 %v2633, %v2844
    %v2877 = vadd.f32 %v2634, %v2845
    %v2878 = vadd.f32 %v2635, %v2846
    %v2879 = vadd.f32 %v2636, %v2847
    %v2880 = vadd.f32 %v2637, %v2848
    %v2881 = vadd.f32 %v2638, %v2849
    %v2882 = vadd.f32 %v2639, %v2850
    %v2883 = vadd.f32 %v2640, %v2851
    %v2884 = vadd.f32 %v2641, %v2852
    %v2885 = vadd.f32 %v2642, %v2853
    %v2886 = vadd.f32 %v2643, %v2854
    %v2887 = vadd.f32 %v2644, %v2855
    %v2888 = vadd.f32 %v2645, %v2856
    %v2889 = vadd.f32 %v2646, %v2857
    %v2890 = vadd.f32 %v2647, %v2858
    %v2891 = vadd.f32 %v2648, %v2859
    %v2892 = vadd.f32 %v2649, %v2860
    %v2893 = vadd.f32 %v2650, %v2861
    %v2894 = vadd.f32 %v2651, %v2862
    %v2895 = vadd.f32 %v2652, %v2863
    %v2896 = vadd.f32 %v2653, %v2864
    %v2897 = vadd.f32 %v2654, %v2865
    %v2898 = vpack.c.bf16 %v2709, %v2706
    %v2899 = vpack.c.bf16 %v2717, %v2714
    %v2900 = vpack.c.bf16 %v2725, %v2722
    %v2901 = vpack.c.bf16 %v2733, %v2730
    %v2902 = vpack.c.bf16 %v2741, %v2738
    %v2903 = vpack.c.bf16 %v2749, %v2746
    %v2904 = vpack.c.bf16 %v2757, %v2754
    %v2905 = vpack.c.bf16 %v2765, %v2762
    %v2906 = vpack.c.bf16 %v2773, %v2770
    %v2907 = vpack.c.bf16 %v2781, %v2778
    %v2908 = vpack.c.bf16 %v2789, %v2786
    %v2909 = vpack.c.bf16 %v2797, %v2794
    %v2910 = vpack.c.bf16 %v2805, %v2802
    %v2911 = vpack.c.bf16 %v2813, %v2810
    %v2912 = vpack.c.bf16 %v2821, %v2818
    %v2913 = vpack.c.bf16 %v2829, %v2826
    %2914 = vmatprep.subr.bf16.mxu0 0
    %2915 = vmatpush1.bf16.msra.mxu0 %v2898
    %2916 = vmatprep.subr.bf16.mxu0 0
    %2917 = vmatpush1.bf16.msra.mxu0 %v2899
    %2918 = vmatprep.subr.bf16.mxu0 0
    %2919 = vmatpush1.bf16.msra.mxu0 %v2900
    %2920 = vmatprep.subr.bf16.mxu0 0
    %2921 = vmatpush1.bf16.msra.mxu0 %v2901
    %2922 = vmatprep.subr.bf16.mxu0 0
    %2923 = vmatpush1.bf16.msra.mxu0 %v2902
    %2924 = vmatprep.subr.bf16.mxu0 0
    %2925 = vmatpush1.bf16.msra.mxu0 %v2903
    %2926 = vmatprep.subr.bf16.mxu0 0
    %2927 = vmatpush1.bf16.msra.mxu0 %v2904
    %2928 = vmatprep.subr.bf16.mxu0 0
    %2929 = vmatpush1.bf16.msra.mxu0 %v2905
    %2930 = vmatprep.subr.bf16.mxu0 0
    %2931 = vmatpush1.bf16.msra.mxu0 %v2906
    %2932 = vmatprep.subr.bf16.mxu0 0
    %2933 = vmatpush1.bf16.msra.mxu0 %v2907
    %2934 = vmatprep.subr.bf16.mxu0 0
    %2935 = vmatpush1.bf16.msra.mxu0 %v2908
    %2936 = vmatprep.subr.bf16.mxu0 0
    %2937 = vmatpush1.bf16.msra.mxu0 %v2909
    %2938 = vmatprep.subr.bf16.mxu0 0
    %2939 = vmatpush1.bf16.msra.mxu0 %v2910
    %2940 = vmatprep.subr.bf16.mxu0 0
    %2941 = vmatpush1.bf16.msra.mxu0 %v2911
    %2942 = vmatprep.subr.bf16.mxu0 0
    %2943 = vmatpush1.bf16.msra.mxu0 %v2912
    %2944 = vmatprep.subr.bf16.mxu0 0
    %2945 = vmatpush1.bf16.msra.mxu0 %v2913
    %2946 = vmatprep.mubr.bf16.mxu0 %v907
    %2947 = vmatmul.mubr.bf16.gmra.mrb[0].mxu0 %v906
    %v2948 = vpop.f32.mrb[0].mxu0
    %v2949 = vadd.f32 0.0, %v2948
    %v2950 = vpop.f32.mrb[0].mxu0
    %v2951 = vpop.f32.mrb[0].mxu0
    %v2952 = vadd.f32 0.0, %v2951
    %v2953 = vpop.f32.mrb[0].mxu0
    %2954 = vmatprep.mubr.bf16.mxu0 %v909
    %2955 = vmatmul.mubr.bf16.gmra.mrb[0].mxu0 %v908
    %v2956 = vpop.f32.mrb[0].mxu0
    %v2957 = vadd.f32 0.0, %v2956
    %v2958 = vpop.f32.mrb[0].mxu0
    %v2959 = vpop.f32.mrb[0].mxu0
    %v2960 = vadd.f32 0.0, %v2959
    %v2961 = vpop.f32.mrb[0].mxu0
    %2962 = vmatprep.mubr.bf16.mxu0 %v911
    %2963 = vmatmul.mubr.bf16.gmra.mrb[0].mxu0 %v910
    %v2964 = vpop.f32.mrb[0].mxu0
    %v2965 = vadd.f32 0.0, %v2964
    %v2966 = vpop.f32.mrb[0].mxu0
    %v2967 = vpop.f32.mrb[0].mxu0
    %v2968 = vadd.f32 0.0, %v2967
    %v2969 = vpop.f32.mrb[0].mxu0
    %2970 = vmatprep.mubr.bf16.mxu0 %v913
    %2971 = vmatmul.mubr.bf16.gmra.mrb[0].mxu0 %v912
    %v2972 = vpop.f32.mrb[0].mxu0
    %v2973 = vadd.f32 0.0, %v2972
    %v2974 = vpop.f32.mrb[0].mxu0
    %v2975 = vpop.f32.mrb[0].mxu0
    %v2976 = vadd.f32 0.0, %v2975
    %v2977 = vpop.f32.mrb[0].mxu0
    %2978 = vmatprep.mubr.bf16.mxu0 %v915
    %2979 = vmatmul.mubr.bf16.gmra.mrb[0].mxu0 %v914
    %v2980 = vpop.f32.mrb[0].mxu0
    %v2981 = vadd.f32 0.0, %v2980
    %v2982 = vpop.f32.mrb[0].mxu0
    %v2983 = vpop.f32.mrb[0].mxu0
    %v2984 = vadd.f32 0.0, %v2983
    %v2985 = vpop.f32.mrb[0].mxu0
    %2986 = vmatprep.mubr.bf16.mxu0 %v917
    %2987 = vmatmul.mubr.bf16.gmra.mrb[0].mxu0 %v916
    %v2988 = vpop.f32.mrb[0].mxu0
    %v2989 = vadd.f32 0.0, %v2988
    %v2990 = vpop.f32.mrb[0].mxu0
    %v2991 = vpop.f32.mrb[0].mxu0
    %v2992 = vadd.f32 0.0, %v2991
    %v2993 = vpop.f32.mrb[0].mxu0
    %2994 = vmatprep.mubr.bf16.mxu0 %v919
    %2995 = vmatmul.mubr.bf16.gmra.mrb[0].mxu0 %v918
    %v2996 = vpop.f32.mrb[0].mxu0
    %v2997 = vadd.f32 0.0, %v2996
    %v2998 = vpop.f32.mrb[0].mxu0
    %v2999 = vpop.f32.mrb[0].mxu0
    %v3000 = vadd.f32 0.0, %v2999
    %v3001 = vpop.f32.mrb[0].mxu0
    %3002 = vmatprep.mubr.bf16.mxu0 %v921
    %3003 = vmatmul.mubr.bf16.gmra.mrb[0].mxu0 %v920
    %v3004 = vpop.f32.mrb[0].mxu0
    %v3005 = vadd.f32 0.0, %v3004
    %v3006 = vpop.f32.mrb[0].mxu0
    %v3007 = vpop.f32.mrb[0].mxu0
    %v3008 = vadd.f32 0.0, %v3007
    %v3009 = vpop.f32.mrb[0].mxu0
    %3010 = vmatprep.mubr.bf16.mxu0 %v923
    %3011 = vmatmul.mubr.bf16.gmra.mrb[0].mxu0 %v922
    %v3012 = vpop.f32.mrb[0].mxu0
    %v3013 = vadd.f32 0.0, %v3012
    %v3014 = vpop.f32.mrb[0].mxu0
    %v3015 = vpop.f32.mrb[0].mxu0
    %v3016 = vadd.f32 0.0, %v3015
    %v3017 = vpop.f32.mrb[0].mxu0
    %3018 = vmatprep.mubr.bf16.mxu0 %v925
    %3019 = vmatmul.mubr.bf16.gmra.mrb[0].mxu0 %v924
    %v3020 = vpop.f32.mrb[0].mxu0
    %v3021 = vadd.f32 0.0, %v3020
    %v3022 = vpop.f32.mrb[0].mxu0
    %v3023 = vpop.f32.mrb[0].mxu0
    %v3024 = vadd.f32 0.0, %v3023
    %v3025 = vpop.f32.mrb[0].mxu0
    %3026 = vmatprep.mubr.bf16.mxu0 %v927
    %3027 = vmatmul.mubr.bf16.gmra.mrb[0].mxu0 %v926
    %v3028 = vpop.f32.mrb[0].mxu0
    %v3029 = vadd.f32 0.0, %v3028
    %v3030 = vpop.f32.mrb[0].mxu0
    %v3031 = vpop.f32.mrb[0].mxu0
    %v3032 = vadd.f32 0.0, %v3031
    %v3033 = vpop.f32.mrb[0].mxu0
    %3034 = vmatprep.mubr.bf16.mxu0 %v929
    %3035 = vmatmul.mubr.bf16.gmra.mrb[0].mxu0 %v928
    %v3036 = vpop.f32.mrb[0].mxu0
    %v3037 = vadd.f32 0.0, %v3036
    %v3038 = vpop.f32.mrb[0].mxu0
    %v3039 = vpop.f32.mrb[0].mxu0
    %v3040 = vadd.f32 0.0, %v3039
    %v3041 = vpop.f32.mrb[0].mxu0
    %3042 = vmatprep.mubr.bf16.mxu0 %v931
    %3043 = vmatmul.mubr.bf16.gmra.mrb[0].mxu0 %v930
    %v3044 = vpop.f32.mrb[0].mxu0
    %v3045 = vadd.f32 0.0, %v3044
    %v3046 = vpop.f32.mrb[0].mxu0
    %v3047 = vpop.f32.mrb[0].mxu0
    %v3048 = vadd.f32 0.0, %v3047
    %v3049 = vpop.f32.mrb[0].mxu0
    %3050 = vmatprep.mubr.bf16.mxu0 %v933
    %3051 = vmatmul.mubr.bf16.gmra.mrb[0].mxu0 %v932
    %v3052 = vpop.f32.mrb[0].mxu0
    %v3053 = vadd.f32 0.0, %v3052
    %v3054 = vpop.f32.mrb[0].mxu0
    %v3055 = vpop.f32.mrb[0].mxu0
    %v3056 = vadd.f32 0.0, %v3055
    %v3057 = vpop.f32.mrb[0].mxu0
    %3058 = vmatprep.mubr.bf16.mxu0 %v935
    %3059 = vmatmul.mubr.bf16.gmra.mrb[0].mxu0 %v934
    %v3060 = vpop.f32.mrb[0].mxu0
    %v3061 = vadd.f32 0.0, %v3060
    %v3062 = vpop.f32.mrb[0].mxu0
    %v3063 = vpop.f32.mrb[0].mxu0
    %v3064 = vadd.f32 0.0, %v3063
    %v3065 = vpop.f32.mrb[0].mxu0
    %3066 = vmatprep.mubr.bf16.mxu0 %v937
    %3067 = vmatmul.mubr.bf16.gmra.mrb[0].mxu0 %v936
    %v3068 = vpop.f32.mrb[0].mxu0
    %v3069 = vadd.f32 0.0, %v3068
    %v3070 = vpop.f32.mrb[0].mxu0
    %v3071 = vpop.f32.mrb[0].mxu0
    %v3072 = vadd.f32 0.0, %v3071
    %v3073 = vpop.f32.mrb[0].mxu0
    %3074 = vdwg.mxu0
    %s3075 = sld [smem:[#allocation2 + $0x9]]
    %v3076 = vstv %s3075
    %v3077 = vmul.f32 %v3076, %v2949
    %v3078 = vmul.f32 %v3076, %v2952
    %v3079 = vmul.f32 %v3076, %v2957
    %v3080 = vmul.f32 %v3076, %v2960
    %v3081 = vmul.f32 %v3076, %v2965
    %v3082 = vmul.f32 %v3076, %v2968
    %v3083 = vmul.f32 %v3076, %v2973
    %v3084 = vmul.f32 %v3076, %v2976
    %v3085 = vmul.f32 %v3076, %v2981
    %v3086 = vmul.f32 %v3076, %v2984
    %v3087 = vmul.f32 %v3076, %v2989
    %v3088 = vmul.f32 %v3076, %v2992
    %v3089 = vmul.f32 %v3076, %v2997
    %v3090 = vmul.f32 %v3076, %v3000
    %v3091 = vmul.f32 %v3076, %v3005
    %v3092 = vmul.f32 %v3076, %v3008
    %v3093 = vmul.f32 %v3076, %v3013
    %v3094 = vmul.f32 %v3076, %v3016
    %v3095 = vmul.f32 %v3076, %v3021
    %v3096 = vmul.f32 %v3076, %v3024
    %v3097 = vmul.f32 %v3076, %v3029
    %v3098 = vmul.f32 %v3076, %v3032
    %v3099 = vmul.f32 %v3076, %v3037
    %v3100 = vmul.f32 %v3076, %v3040
    %v3101 = vmul.f32 %v3076, %v3045
    %v3102 = vmul.f32 %v3076, %v3048
    %v3103 = vmul.f32 %v3076, %v3053
    %v3104 = vmul.f32 %v3076, %v3056
    %v3105 = vmul.f32 %v3076, %v3061
    %v3106 = vmul.f32 %v3076, %v3064
    %v3107 = vmul.f32 %v3076, %v3069
    %v3108 = vmul.f32 %v3076, %v3072
    %v3109 = vadd.f32 %v2866, %v3077
    %v3110 = vadd.f32 %v2867, %v3078
    %v3111 = vadd.f32 %v2868, %v3079
    %v3112 = vadd.f32 %v2869, %v3080
    %v3113 = vadd.f32 %v2870, %v3081
    %v3114 = vadd.f32 %v2871, %v3082
    %v3115 = vadd.f32 %v2872, %v3083
    %v3116 = vadd.f32 %v2873, %v3084
    %v3117 = vadd.f32 %v2874, %v3085
    %v3118 = vadd.f32 %v2875, %v3086
    %v3119 = vadd.f32 %v2876, %v3087
    %v3120 = vadd.f32 %v2877, %v3088
    %v3121 = vadd.f32 %v2878, %v3089
    %v3122 = vadd.f32 %v2879, %v3090
    %v3123 = vadd.f32 %v2880, %v3091
    %v3124 = vadd.f32 %v2881, %v3092
    %v3125 = vadd.f32 %v2882, %v3093
    %v3126 = vadd.f32 %v2883, %v3094
    %v3127 = vadd.f32 %v2884, %v3095
    %v3128 = vadd.f32 %v2885, %v3096
    %v3129 = vadd.f32 %v2886, %v3097
    %v3130 = vadd.f32 %v2887, %v3098
    %v3131 = vadd.f32 %v2888, %v3099
    %v3132 = vadd.f32 %v2889, %v3100
    %v3133 = vadd.f32 %v2890, %v3101
    %v3134 = vadd.f32 %v2891, %v3102
    %v3135 = vadd.f32 %v2892, %v3103
    %v3136 = vadd.f32 %v2893, %v3104
    %v3137 = vadd.f32 %v2894, %v3105
    %v3138 = vadd.f32 %v2895, %v3106
    %v3139 = vadd.f32 %v2896, %v3107
    %v3140 = vadd.f32 %v2897, %v3108
    %v3141 = vpack.c.bf16 %v2952, %v2949
    %v3142 = vpack.c.bf16 %v2960, %v2957
    %v3143 = vpack.c.bf16 %v2968, %v2965
    %v3144 = vpack.c.bf16 %v2976, %v2973
    %v3145 = vpack.c.bf16 %v2984, %v2981
    %v3146 = vpack.c.bf16 %v2992, %v2989
    %v3147 = vpack.c.bf16 %v3000, %v2997
    %v3148 = vpack.c.bf16 %v3008, %v3005
    %v3149 = vpack.c.bf16 %v3016, %v3013
    %v3150 = vpack.c.bf16 %v3024, %v3021
    %v3151 = vpack.c.bf16 %v3032, %v3029
    %v3152 = vpack.c.bf16 %v3040, %v3037
    %v3153 = vpack.c.bf16 %v3048, %v3045
    %v3154 = vpack.c.bf16 %v3056, %v3053
    %v3155 = vpack.c.bf16 %v3064, %v3061
    %v3156 = vpack.c.bf16 %v3072, %v3069
    %3157 = vmatprep.subr.bf16.mxu0 0
    %3158 = vmatpush1.bf16.msra.mxu0 %v3141
    %3159 = vmatprep.subr.bf16.mxu0 0
    %3160 = vmatpush1.bf16.msra.mxu0 %v3142
    %3161 = vmatprep.subr.bf16.mxu0 0
    %3162 = vmatpush1.bf16.msra.mxu0 %v3143
    %3163 = vmatprep.subr.bf16.mxu0 0
    %3164 = vmatpush1.bf16.msra.mxu0 %v3144
    %3165 = vmatprep.subr.bf16.mxu0 0
    %3166 = vmatpush1.bf16.msra.mxu0 %v3145
    %3167 = vmatprep.subr.bf16.mxu0 0
    %3168 = vmatpush1.bf16.msra.mxu0 %v3146
    %3169 = vmatprep.subr.bf16.mxu0 0
    %3170 = vmatpush1.bf16.msra.mxu0 %v3147
    %3171 = vmatprep.subr.bf16.mxu0 0
    %3172 = vmatpush1.bf16.msra.mxu0 %v3148
    %3173 = vmatprep.subr.bf16.mxu0 0
    %3174 = vmatpush1.bf16.msra.mxu0 %v3149
    %3175 = vmatprep.subr.bf16.mxu0 0
    %3176 = vmatpush1.bf16.msra.mxu0 %v3150
    %3177 = vmatprep.subr.bf16.mxu0 0
    %3178 = vmatpush1.bf16.msra.mxu0 %v3151
    %3179 = vmatprep.subr.bf16.mxu0 0
    %3180 = vmatpush1.bf16.msra.mxu0 %v3152
    %3181 = vmatprep.subr.bf16.mxu0 0
    %3182 = vmatpush1.bf16.msra.mxu0 %v3153
    %3183 = vmatprep.subr.bf16.mxu0 0
    %3184 = vmatpush1.bf16.msra.mxu0 %v3154
    %3185 = vmatprep.subr.bf16.mxu0 0
    %3186 = vmatpush1.bf16.msra.mxu0 %v3155
    %3187 = vmatprep.subr.bf16.mxu0 0
    %3188 = vmatpush1.bf16.msra.mxu0 %v3156
    %3189 = vmatprep.mubr.bf16.mxu0 %v907
    %3190 = vmatmul.mubr.bf16.gmra.mrb[0].mxu0 %v906
    %v3191 = vpop.f32.mrb[0].mxu0
    %v3192 = vadd.f32 0.0, %v3191
    %v3193 = vpop.f32.mrb[0].mxu0
    %v3194 = vpop.f32.mrb[0].mxu0
    %v3195 = vadd.f32 0.0, %v3194
    %v3196 = vpop.f32.mrb[0].mxu0
    %3197 = vmatprep.mubr.bf16.mxu0 %v909
    %3198 = vmatmul.mubr.bf16.gmra.mrb[0].mxu0 %v908
    %v3199 = vpop.f32.mrb[0].mxu0
    %v3200 = vadd.f32 0.0, %v3199
    %v3201 = vpop.f32.mrb[0].mxu0
    %v3202 = vpop.f32.mrb[0].mxu0
    %v3203 = vadd.f32 0.0, %v3202
    %v3204 = vpop.f32.mrb[0].mxu0
    %3205 = vmatprep.mubr.bf16.mxu0 %v911
    %3206 = vmatmul.mubr.bf16.gmra.mrb[0].mxu0 %v910
    %v3207 = vpop.f32.mrb[0].mxu0
    %v3208 = vadd.f32 0.0, %v3207
    %v3209 = vpop.f32.mrb[0].mxu0
    %v3210 = vpop.f32.mrb[0].mxu0
    %v3211 = vadd.f32 0.0, %v3210
    %v3212 = vpop.f32.mrb[0].mxu0
    %3213 = vmatprep.mubr.bf16.mxu0 %v913
    %3214 = vmatmul.mubr.bf16.gmra.mrb[0].mxu0 %v912
    %v3215 = vpop.f32.mrb[0].mxu0
    %v3216 = vadd.f32 0.0, %v3215
    %v3217 = vpop.f32.mrb[0].mxu0
    %v3218 = vpop.f32.mrb[0].mxu0
    %v3219 = vadd.f32 0.0, %v3218
    %v3220 = vpop.f32.mrb[0].mxu0
    %3221 = vmatprep.mubr.bf16.mxu0 %v915
    %3222 = vmatmul.mubr.bf16.gmra.mrb[0].mxu0 %v914
    %v3223 = vpop.f32.mrb[0].mxu0
    %v3224 = vadd.f32 0.0, %v3223
    %v3225 = vpop.f32.mrb[0].mxu0
    %v3226 = vpop.f32.mrb[0].mxu0
    %v3227 = vadd.f32 0.0, %v3226
    %v3228 = vpop.f32.mrb[0].mxu0
    %3229 = vmatprep.mubr.bf16.mxu0 %v917
    %3230 = vmatmul.mubr.bf16.gmra.mrb[0].mxu0 %v916
    %v3231 = vpop.f32.mrb[0].mxu0
    %v3232 = vadd.f32 0.0, %v3231
    %v3233 = vpop.f32.mrb[0].mxu0
    %v3234 = vpop.f32.mrb[0].mxu0
    %v3235 = vadd.f32 0.0, %v3234
    %v3236 = vpop.f32.mrb[0].mxu0
    %3237 = vmatprep.mubr.bf16.mxu0 %v919
    %3238 = vmatmul.mubr.bf16.gmra.mrb[0].mxu0 %v918
    %v3239 = vpop.f32.mrb[0].mxu0
    %v3240 = vadd.f32 0.0, %v3239
    %v3241 = vpop.f32.mrb[0].mxu0
    %v3242 = vpop.f32.mrb[0].mxu0
    %v3243 = vadd.f32 0.0, %v3242
    %v3244 = vpop.f32.mrb[0].mxu0
    %3245 = vmatprep.mubr.bf16.mxu0 %v921
    %3246 = vmatmul.mubr.bf16.gmra.mrb[0].mxu0 %v920
    %v3247 = vpop.f32.mrb[0].mxu0
    %v3248 = vadd.f32 0.0, %v3247
    %v3249 = vpop.f32.mrb[0].mxu0
    %v3250 = vpop.f32.mrb[0].mxu0
    %v3251 = vadd.f32 0.0, %v3250
    %v3252 = vpop.f32.mrb[0].mxu0
    %3253 = vmatprep.mubr.bf16.mxu0 %v923
    %3254 = vmatmul.mubr.bf16.gmra.mrb[0].mxu0 %v922
    %v3255 = vpop.f32.mrb[0].mxu0
    %v3256 = vadd.f32 0.0, %v3255
    %v3257 = vpop.f32.mrb[0].mxu0
    %v3258 = vpop.f32.mrb[0].mxu0
    %v3259 = vadd.f32 0.0, %v3258
    %v3260 = vpop.f32.mrb[0].mxu0
    %3261 = vmatprep.mubr.bf16.mxu0 %v925
    %3262 = vmatmul.mubr.bf16.gmra.mrb[0].mxu0 %v924
    %v3263 = vpop.f32.mrb[0].mxu0
    %v3264 = vadd.f32 0.0, %v3263
    %v3265 = vpop.f32.mrb[0].mxu0
    %v3266 = vpop.f32.mrb[0].mxu0
    %v3267 = vadd.f32 0.0, %v3266
    %v3268 = vpop.f32.mrb[0].mxu0
    %3269 = vmatprep.mubr.bf16.mxu0 %v927
    %3270 = vmatmul.mubr.bf16.gmra.mrb[0].mxu0 %v926
    %v3271 = vpop.f32.mrb[0].mxu0
    %v3272 = vadd.f32 0.0, %v3271
    %v3273 = vpop.f32.mrb[0].mxu0
    %v3274 = vpop.f32.mrb[0].mxu0
    %v3275 = vadd.f32 0.0, %v3274
    %v3276 = vpop.f32.mrb[0].mxu0
    %3277 = vmatprep.mubr.bf16.mxu0 %v929
    %3278 = vmatmul.mubr.bf16.gmra.mrb[0].mxu0 %v928
    %v3279 = vpop.f32.mrb[0].mxu0
    %v3280 = vadd.f32 0.0, %v3279
    %v3281 = vpop.f32.mrb[0].mxu0
    %v3282 = vpop.f32.mrb[0].mxu0
    %v3283 = vadd.f32 0.0, %v3282
    %v3284 = vpop.f32.mrb[0].mxu0
    %3285 = vmatprep.mubr.bf16.mxu0 %v931
    %3286 = vmatmul.mubr.bf16.gmra.mrb[0].mxu0 %v930
    %v3287 = vpop.f32.mrb[0].mxu0
    %v3288 = vadd.f32 0.0, %v3287
    %v3289 = vpop.f32.mrb[0].mxu0
    %v3290 = vpop.f32.mrb[0].mxu0
    %v3291 = vadd.f32 0.0, %v3290
    %v3292 = vpop.f32.mrb[0].mxu0
    %3293 = vmatprep.mubr.bf16.mxu0 %v933
    %3294 = vmatmul.mubr.bf16.gmra.mrb[0].mxu0 %v932
    %v3295 = vpop.f32.mrb[0].mxu0
    %v3296 = vadd.f32 0.0, %v3295
    %v3297 = vpop.f32.mrb[0].mxu0
    %v3298 = vpop.f32.mrb[0].mxu0
    %v3299 = vadd.f32 0.0, %v3298
    %v3300 = vpop.f32.mrb[0].mxu0
    %3301 = vmatprep.mubr.bf16.mxu0 %v935
    %3302 = vmatmul.mubr.bf16.gmra.mrb[0].mxu0 %v934
    %v3303 = vpop.f32.mrb[0].mxu0
    %v3304 = vadd.f32 0.0, %v3303
    %v3305 = vpop.f32.mrb[0].mxu0
    %v3306 = vpop.f32.mrb[0].mxu0
    %v3307 = vadd.f32 0.0, %v3306
    %v3308 = vpop.f32.mrb[0].mxu0
    %3309 = vmatprep.mubr.bf16.mxu0 %v937
    %3310 = vmatmul.mubr.bf16.gmra.mrb[0].mxu0 %v936
    %v3311 = vpop.f32.mrb[0].mxu0
    %v3312 = vadd.f32 0.0, %v3311
    %v3313 = vpop.f32.mrb[0].mxu0
    %v3314 = vpop.f32.mrb[0].mxu0
    %v3315 = vadd.f32 0.0, %v3314
    %v3316 = vpop.f32.mrb[0].mxu0
    %3317 = vdwg.mxu0
    %s3318 = sld [smem:[#allocation2 + $0xa]]
    %v3319 = vstv %s3318
    %v3320 = vmul.f32 %v3319, %v3192
    %v3321 = vmul.f32 %v3319, %v3195
    %v3322 = vmul.f32 %v3319, %v3200
    %v3323 = vmul.f32 %v3319, %v3203
    %v3324 = vmul.f32 %v3319, %v3208
    %v3325 = vmul.f32 %v3319, %v3211
    %v3326 = vmul.f32 %v3319, %v3216
    %v3327 = vmul.f32 %v3319, %v3219
    %v3328 = vmul.f32 %v3319, %v3224
    %v3329 = vmul.f32 %v3319, %v3227
    %v3330 = vmul.f32 %v3319, %v3232
    %v3331 = vmul.f32 %v3319, %v3235
    %v3332 = vmul.f32 %v3319, %v3240
    %v3333 = vmul.f32 %v3319, %v3243
    %v3334 = vmul.f32 %v3319, %v3248
    %v3335 = vmul.f32 %v3319, %v3251
    %v3336 = vmul.f32 %v3319, %v3256
    %v3337 = vmul.f32 %v3319, %v3259
    %v3338 = vmul.f32 %v3319, %v3264
    %v3339 = vmul.f32 %v3319, %v3267
    %v3340 = vmul.f32 %v3319, %v3272
    %v3341 = vmul.f32 %v3319, %v3275
    %v3342 = vmul.f32 %v3319, %v3280
    %v3343 = vmul.f32 %v3319, %v3283
    %v3344 = vmul.f32 %v3319, %v3288
    %v3345 = vmul.f32 %v3319, %v3291
    %v3346 = vmul.f32 %v3319, %v3296
    %v3347 = vmul.f32 %v3319, %v3299
    %v3348 = vmul.f32 %v3319, %v3304
    %v3349 = vmul.f32 %v3319, %v3307
    %v3350 = vmul.f32 %v3319, %v3312
    %v3351 = vmul.f32 %v3319, %v3315
    %v3352 = vadd.f32 %v3109, %v3320
    %v3353 = vadd.f32 %v3110, %v3321
    %v3354 = vadd.f32 %v3111, %v3322
    %v3355 = vadd.f32 %v3112, %v3323
    %v3356 = vadd.f32 %v3113, %v3324
    %v3357 = vadd.f32 %v3114, %v3325
    %v3358 = vadd.f32 %v3115, %v3326
    %v3359 = vadd.f32 %v3116, %v3327
    %v3360 = vadd.f32 %v3117, %v3328
    %v3361 = vadd.f32 %v3118, %v3329
    %v3362 = vadd.f32 %v3119, %v3330
    %v3363 = vadd.f32 %v3120, %v3331
    %v3364 = vadd.f32 %v3121, %v3332
    %v3365 = vadd.f32 %v3122, %v3333
    %v3366 = vadd.f32 %v3123, %v3334
    %v3367 = vadd.f32 %v3124, %v3335
    %v3368 = vadd.f32 %v3125, %v3336
    %v3369 = vadd.f32 %v3126, %v3337
    %v3370 = vadd.f32 %v3127, %v3338
    %v3371 = vadd.f32 %v3128, %v3339
    %v3372 = vadd.f32 %v3129, %v3340
    %v3373 = vadd.f32 %v3130, %v3341
    %v3374 = vadd.f32 %v3131, %v3342
    %v3375 = vadd.f32 %v3132, %v3343
    %v3376 = vadd.f32 %v3133, %v3344
    %v3377 = vadd.f32 %v3134, %v3345
    %v3378 = vadd.f32 %v3135, %v3346
    %v3379 = vadd.f32 %v3136, %v3347
    %v3380 = vadd.f32 %v3137, %v3348
    %v3381 = vadd.f32 %v3138, %v3349
    %v3382 = vadd.f32 %v3139, %v3350
    %v3383 = vadd.f32 %v3140, %v3351
    %v3384 = vlaneseq
    %v3385 = vand.u32 %v3384, 127
    %vm3386 = vcmp.lt.s32.totalorder %v3385, 16
    %v3387 = vsel %vm3386, %v3352, -inf
    %v3388 = vsel %vm3386, %v3353, -inf
    %v3389 = vsel %vm3386, %v3354, -inf
    %v3390 = vsel %vm3386, %v3355, -inf
    %v3391 = vsel %vm3386, %v3356, -inf
    %v3392 = vsel %vm3386, %v3357, -inf
    %v3393 = vsel %vm3386, %v3358, -inf
    %v3394 = vsel %vm3386, %v3359, -inf
    %v3395 = vsel %vm3386, %v3360, -inf
    %v3396 = vsel %vm3386, %v3361, -inf
    %v3397 = vsel %vm3386, %v3362, -inf
    %v3398 = vsel %vm3386, %v3363, -inf
    %v3399 = vsel %vm3386, %v3364, -inf
    %v3400 = vsel %vm3386, %v3365, -inf
    %v3401 = vsel %vm3386, %v3366, -inf
    %v3402 = vsel %vm3386, %v3367, -inf
    %v3403 = vsel %vm3386, %v3368, -inf
    %v3404 = vsel %vm3386, %v3369, -inf
    %v3405 = vsel %vm3386, %v3370, -inf
    %v3406 = vsel %vm3386, %v3371, -inf
    %v3407 = vsel %vm3386, %v3372, -inf
    %v3408 = vsel %vm3386, %v3373, -inf
    %v3409 = vsel %vm3386, %v3374, -inf
    %v3410 = vsel %vm3386, %v3375, -inf
    %v3411 = vsel %vm3386, %v3376, -inf
    %v3412 = vsel %vm3386, %v3377, -inf
    %v3413 = vsel %vm3386, %v3378, -inf
    %v3414 = vsel %vm3386, %v3379, -inf
    %v3415 = vsel %vm3386, %v3380, -inf
    %v3416 = vsel %vm3386, %v3381, -inf
    %v3417 = vsel %vm3386, %v3382, -inf
    %v3418 = vsel %vm3386, %v3383, -inf
    %3419 = vmax.xlane.f32.xlu0 %v3387
    %v3420 = vpop.xlane.xlu0 %3419
    %3421 = vmax.xlane.f32.xlu0 %v3388
    %v3422 = vpop.xlane.xlu0 %3421
    %3423 = vmax.xlane.f32.xlu0 %v3389
    %v3424 = vpop.xlane.xlu0 %3423
    %3425 = vmax.xlane.f32.xlu0 %v3390
    %v3426 = vpop.xlane.xlu0 %3425
    %3427 = vmax.xlane.f32.xlu0 %v3391
    %v3428 = vpop.xlane.xlu0 %3427
    %3429 = vmax.xlane.f32.xlu0 %v3392
    %v3430 = vpop.xlane.xlu0 %3429
    %3431 = vmax.xlane.f32.xlu0 %v3393
    %v3432 = vpop.xlane.xlu0 %3431
    %3433 = vmax.xlane.f32.xlu0 %v3394
    %v3434 = vpop.xlane.xlu0 %3433
    %3435 = vmax.xlane.f32.xlu0 %v3395
    %v3436 = vpop.xlane.xlu0 %3435
    %3437 = vmax.xlane.f32.xlu0 %v3396
    %v3438 = vpop.xlane.xlu0 %3437
    %3439 = vmax.xlane.f32.xlu0 %v3397
    %v3440 = vpop.xlane.xlu0 %3439
    %3441 = vmax.xlane.f32.xlu0 %v3398
    %v3442 = vpop.xlane.xlu0 %3441
    %3443 = vmax.xlane.f32.xlu0 %v3399
    %v3444 = vpop.xlane.xlu0 %3443
    %3445 = vmax.xlane.f32.xlu0 %v3400
    %v3446 = vpop.xlane.xlu0 %3445
    %3447 = vmax.xlane.f32.xlu0 %v3401
    %v3448 = vpop.xlane.xlu0 %3447
    %3449 = vmax.xlane.f32.xlu0 %v3402
    %v3450 = vpop.xlane.xlu0 %3449
    %3451 = vmax.xlane.f32.xlu0 %v3403
    %v3452 = vpop.xlane.xlu0 %3451
    %3453 = vmax.xlane.f32.xlu0 %v3404
    %v3454 = vpop.xlane.xlu0 %3453
    %3455 = vmax.xlane.f32.xlu0 %v3405
    %v3456 = vpop.xlane.xlu0 %3455
    %3457 = vmax.xlane.f32.xlu0 %v3406
    %v3458 = vpop.xlane.xlu0 %3457
    %3459 = vmax.xlane.f32.xlu0 %v3407
    %v3460 = vpop.xlane.xlu0 %3459
    %3461 = vmax.xlane.f32.xlu0 %v3408
    %v3462 = vpop.xlane.xlu0 %3461
    %3463 = vmax.xlane.f32.xlu0 %v3409
    %v3464 = vpop.xlane.xlu0 %3463
    %3465 = vmax.xlane.f32.xlu0 %v3410
    %v3466 = vpop.xlane.xlu0 %3465
    %3467 = vmax.xlane.f32.xlu0 %v3411
    %v3468 = vpop.xlane.xlu0 %3467
    %3469 = vmax.xlane.f32.xlu0 %v3412
    %v3470 = vpop.xlane.xlu0 %3469
    %3471 = vmax.xlane.f32.xlu0 %v3413
    %v3472 = vpop.xlane.xlu0 %3471
    %3473 = vmax.xlane.f32.xlu0 %v3414
    %v3474 = vpop.xlane.xlu0 %3473
    %3475 = vmax.xlane.f32.xlu0 %v3415
    %v3476 = vpop.xlane.xlu0 %3475
    %3477 = vmax.xlane.f32.xlu0 %v3416
    %v3478 = vpop.xlane.xlu0 %3477
    %3479 = vmax.xlane.f32.xlu0 %v3417
    %v3480 = vpop.xlane.xlu0 %3479
    %3481 = vmax.xlane.f32.xlu0 %v3418
    %v3482 = vpop.xlane.xlu0 %3481
    %v3483 = vsub.f32 %v3352, %v3420
    %v3484 = vsub.f32 %v3353, %v3422
    %v3485 = vsub.f32 %v3354, %v3424
    %v3486 = vsub.f32 %v3355, %v3426
    %v3487 = vsub.f32 %v3356, %v3428
    %v3488 = vsub.f32 %v3357, %v3430
    %v3489 = vsub.f32 %v3358, %v3432
    %v3490 = vsub.f32 %v3359, %v3434
    %v3491 = vsub.f32 %v3360, %v3436
    %v3492 = vsub.f32 %v3361, %v3438
    %v3493 = vsub.f32 %v3362, %v3440
    %v3494 = vsub.f32 %v3363, %v3442
    %v3495 = vsub.f32 %v3364, %v3444
    %v3496 = vsub.f32 %v3365, %v3446
    %v3497 = vsub.f32 %v3366, %v3448
    %v3498 = vsub.f32 %v3367, %v3450
    %v3499 = vsub.f32 %v3368, %v3452
    %v3500 = vsub.f32 %v3369, %v3454
    %v3501 = vsub.f32 %v3370, %v3456
    %v3502 = vsub.f32 %v3371, %v3458
    %v3503 = vsub.f32 %v3372, %v3460
    %v3504 = vsub.f32 %v3373, %v3462
    %v3505 = vsub.f32 %v3374, %v3464
    %v3506 = vsub.f32 %v3375, %v3466
    %v3507 = vsub.f32 %v3376, %v3468
    %v3508 = vsub.f32 %v3377, %v3470
    %v3509 = vsub.f32 %v3378, %v3472
    %v3510 = vsub.f32 %v3379, %v3474
    %v3511 = vsub.f32 %v3380, %v3476
    %v3512 = vsub.f32 %v3381, %v3478
    %v3513 = vsub.f32 %v3382, %v3480
    %v3514 = vsub.f32 %v3383, %v3482
    %v3515 = vmul.f32 %v3483, 1.442695
    %v3516 = vpow.pop %v3515
    %v3517 = vmul.f32 %v3484, 1.442695
    %v3518 = vpow.pop %v3517
    %v3519 = vmul.f32 %v3485, 1.442695
    %v3520 = vpow.pop %v3519
    %v3521 = vmul.f32 %v3486, 1.442695
    %v3522 = vpow.pop %v3521
    %v3523 = vmul.f32 %v3487, 1.442695
    %v3524 = vpow.pop %v3523
    %v3525 = vmul.f32 %v3488, 1.442695
    %v3526 = vpow.pop %v3525
    %v3527 = vmul.f32 %v3489, 1.442695
    %v3528 = vpow.pop %v3527
    %v3529 = vmul.f32 %v3490, 1.442695
    %v3530 = vpow.pop %v3529
    %v3531 = vmul.f32 %v3491, 1.442695
    %v3532 = vpow.pop %v3531
    %v3533 = vmul.f32 %v3492, 1.442695
    %v3534 = vpow.pop %v3533
    %v3535 = vmul.f32 %v3493, 1.442695
    %v3536 = vpow.pop %v3535
    %v3537 = vmul.f32 %v3494, 1.442695
    %v3538 = vpow.pop %v3537
    %v3539 = vmul.f32 %v3495, 1.442695
    %v3540 = vpow.pop %v3539
    %v3541 = vmul.f32 %v3496, 1.442695
    %v3542 = vpow.pop %v3541
    %v3543 = vmul.f32 %v3497, 1.442695
    %v3544 = vpow.pop %v3543
    %v3545 = vmul.f32 %v3498, 1.442695
    %v3546 = vpow.pop %v3545
    %v3547 = vmul.f32 %v3499, 1.442695
    %v3548 = vpow.pop %v3547
    %v3549 = vmul.f32 %v3500, 1.442695
    %v3550 = vpow.pop %v3549
    %v3551 = vmul.f32 %v3501, 1.442695
    %v3552 = vpow.pop %v3551
    %v3553 = vmul.f32 %v3502, 1.442695
    %v3554 = vpow.pop %v3553
    %v3555 = vmul.f32 %v3503, 1.442695
    %v3556 = vpow.pop %v3555
    %v3557 = vmul.f32 %v3504, 1.442695
    %v3558 = vpow.pop %v3557
    %v3559 = vmul.f32 %v3505, 1.442695
    %v3560 = vpow.pop %v3559
    %v3561 = vmul.f32 %v3506, 1.442695
    %v3562 = vpow.pop %v3561
    %v3563 = vmul.f32 %v3507, 1.442695
    %v3564 = vpow.pop %v3563
    %v3565 = vmul.f32 %v3508, 1.442695
    %v3566 = vpow.pop %v3565
    %v3567 = vmul.f32 %v3509, 1.442695
    %v3568 = vpow.pop %v3567
    %v3569 = vmul.f32 %v3510, 1.442695
    %v3570 = vpow.pop %v3569
    %v3571 = vmul.f32 %v3511, 1.442695
    %v3572 = vpow.pop %v3571
    %v3573 = vmul.f32 %v3512, 1.442695
    %v3574 = vpow.pop %v3573
    %v3575 = vmul.f32 %v3513, 1.442695
    %v3576 = vpow.pop %v3575
    %v3577 = vmul.f32 %v3514, 1.442695
    %v3578 = vpow.pop %v3577
    %v3579 = vsel %vm3386, %v3516, 0.0
    %v3580 = vsel %vm3386, %v3518, 0.0
    %v3581 = vsel %vm3386, %v3520, 0.0
    %v3582 = vsel %vm3386, %v3522, 0.0
    %v3583 = vsel %vm3386, %v3524, 0.0
    %v3584 = vsel %vm3386, %v3526, 0.0
    %v3585 = vsel %vm3386, %v3528, 0.0
    %v3586 = vsel %vm3386, %v3530, 0.0
    %v3587 = vsel %vm3386, %v3532, 0.0
    %v3588 = vsel %vm3386, %v3534, 0.0
    %v3589 = vsel %vm3386, %v3536, 0.0
    %v3590 = vsel %vm3386, %v3538, 0.0
    %v3591 = vsel %vm3386, %v3540, 0.0
    %v3592 = vsel %vm3386, %v3542, 0.0
    %v3593 = vsel %vm3386, %v3544, 0.0
    %v3594 = vsel %vm3386, %v3546, 0.0
    %v3595 = vsel %vm3386, %v3548, 0.0
    %v3596 = vsel %vm3386, %v3550, 0.0
    %v3597 = vsel %vm3386, %v3552, 0.0
    %v3598 = vsel %vm3386, %v3554, 0.0
    %v3599 = vsel %vm3386, %v3556, 0.0
    %v3600 = vsel %vm3386, %v3558, 0.0
    %v3601 = vsel %vm3386, %v3560, 0.0
    %v3602 = vsel %vm3386, %v3562, 0.0
    %v3603 = vsel %vm3386, %v3564, 0.0
    %v3604 = vsel %vm3386, %v3566, 0.0
    %v3605 = vsel %vm3386, %v3568, 0.0
    %v3606 = vsel %vm3386, %v3570, 0.0
    %v3607 = vsel %vm3386, %v3572, 0.0
    %v3608 = vsel %vm3386, %v3574, 0.0
    %v3609 = vsel %vm3386, %v3576, 0.0
    %v3610 = vsel %vm3386, %v3578, 0.0
    %3611 = vadd.xlane.f32.xlu0 %v3579
    %v3612 = vpop.xlane.xlu0 %3611
    %3613 = vadd.xlane.f32.xlu0 %v3580
    %v3614 = vpop.xlane.xlu0 %3613
    %3615 = vadd.xlane.f32.xlu0 %v3581
    %v3616 = vpop.xlane.xlu0 %3615
    %3617 = vadd.xlane.f32.xlu0 %v3582
    %v3618 = vpop.xlane.xlu0 %3617
    %3619 = vadd.xlane.f32.xlu0 %v3583
    %v3620 = vpop.xlane.xlu0 %3619
    %3621 = vadd.xlane.f32.xlu0 %v3584
    %v3622 = vpop.xlane.xlu0 %3621
    %3623 = vadd.xlane.f32.xlu0 %v3585
    %v3624 = vpop.xlane.xlu0 %3623
    %3625 = vadd.xlane.f32.xlu0 %v3586
    %v3626 = vpop.xlane.xlu0 %3625
    %3627 = vadd.xlane.f32.xlu0 %v3587
    %v3628 = vpop.xlane.xlu0 %3627
    %3629 = vadd.xlane.f32.xlu0 %v3588
    %v3630 = vpop.xlane.xlu0 %3629
    %3631 = vadd.xlane.f32.xlu0 %v3589
    %v3632 = vpop.xlane.xlu0 %3631
    %3633 = vadd.xlane.f32.xlu0 %v3590
    %v3634 = vpop.xlane.xlu0 %3633
    %3635 = vadd.xlane.f32.xlu0 %v3591
    %v3636 = vpop.xlane.xlu0 %3635
    %3637 = vadd.xlane.f32.xlu0 %v3592
    %v3638 = vpop.xlane.xlu0 %3637
    %3639 = vadd.xlane.f32.xlu0 %v3593
    %v3640 = vpop.xlane.xlu0 %3639
    %3641 = vadd.xlane.f32.xlu0 %v3594
    %v3642 = vpop.xlane.xlu0 %3641
    %3643 = vadd.xlane.f32.xlu0 %v3595
    %v3644 = vpop.xlane.xlu0 %3643
    %3645 = vadd.xlane.f32.xlu0 %v3596
    %v3646 = vpop.xlane.xlu0 %3645
    %3647 = vadd.xlane.f32.xlu0 %v3597
    %v3648 = vpop.xlane.xlu0 %3647
    %3649 = vadd.xlane.f32.xlu0 %v3598
    %v3650 = vpop.xlane.xlu0 %3649
    %3651 = vadd.xlane.f32.xlu0 %v3599
    %v3652 = vpop.xlane.xlu0 %3651
    %3653 = vadd.xlane.f32.xlu0 %v3600
    %v3654 = vpop.xlane.xlu0 %3653
    %3655 = vadd.xlane.f32.xlu0 %v3601
    %v3656 = vpop.xlane.xlu0 %3655
    %3657 = vadd.xlane.f32.xlu0 %v3602
    %v3658 = vpop.xlane.xlu0 %3657
    %3659 = vadd.xlane.f32.xlu0 %v3603
    %v3660 = vpop.xlane.xlu0 %3659
    %3661 = vadd.xlane.f32.xlu0 %v3604
    %v3662 = vpop.xlane.xlu0 %3661
    %3663 = vadd.xlane.f32.xlu0 %v3605
    %v3664 = vpop.xlane.xlu0 %3663
    %3665 = vadd.xlane.f32.xlu0 %v3606
    %v3666 = vpop.xlane.xlu0 %3665
    %3667 = vadd.xlane.f32.xlu0 %v3607
    %v3668 = vpop.xlane.xlu0 %3667
    %3669 = vadd.xlane.f32.xlu0 %v3608
    %v3670 = vpop.xlane.xlu0 %3669
    %3671 = vadd.xlane.f32.xlu0 %v3609
    %v3672 = vpop.xlane.xlu0 %3671
    %3673 = vadd.xlane.f32.xlu0 %v3610
    %v3674 = vpop.xlane.xlu0 %3673
    %v3675 = vlog2.pop %v3612
    %v3676 = vmul.f32 %v3675, 0.6931472
    %v3677 = vlog2.pop %v3614
    %v3678 = vmul.f32 %v3677, 0.6931472
    %v3679 = vlog2.pop %v3616
    %v3680 = vmul.f32 %v3679, 0.6931472
    %v3681 = vlog2.pop %v3618
    %v3682 = vmul.f32 %v3681, 0.6931472
    %v3683 = vlog2.pop %v3620
    %v3684 = vmul.f32 %v3683, 0.6931472
    %v3685 = vlog2.pop %v3622
    %v3686 = vmul.f32 %v3685, 0.6931472
    %v3687 = vlog2.pop %v3624
    %v3688 = vmul.f32 %v3687, 0.6931472
    %v3689 = vlog2.pop %v3626
    %v3690 = vmul.f32 %v3689, 0.6931472
    %v3691 = vlog2.pop %v3628
    %v3692 = vmul.f32 %v3691, 0.6931472
    %v3693 = vlog2.pop %v3630
    %v3694 = vmul.f32 %v3693, 0.6931472
    %v3695 = vlog2.pop %v3632
    %v3696 = vmul.f32 %v3695, 0.6931472
    %v3697 = vlog2.pop %v3634
    %v3698 = vmul.f32 %v3697, 0.6931472
    %v3699 = vlog2.pop %v3636
    %v3700 = vmul.f32 %v3699, 0.6931472
    %v3701 = vlog2.pop %v3638
    %v3702 = vmul.f32 %v3701, 0.6931472
    %v3703 = vlog2.pop %v3640
    %v3704 = vmul.f32 %v3703, 0.6931472
    %v3705 = vlog2.pop %v3642
    %v3706 = vmul.f32 %v3705, 0.6931472
    %v3707 = vlog2.pop %v3644
    %v3708 = vmul.f32 %v3707, 0.6931472
    %v3709 = vlog2.pop %v3646
    %v3710 = vmul.f32 %v3709, 0.6931472
    %v3711 = vlog2.pop %v3648
    %v3712 = vmul.f32 %v3711, 0.6931472
    %v3713 = vlog2.pop %v3650
    %v3714 = vmul.f32 %v3713, 0.6931472
    %v3715 = vlog2.pop %v3652
    %v3716 = vmul.f32 %v3715, 0.6931472
    %v3717 = vlog2.pop %v3654
    %v3718 = vmul.f32 %v3717, 0.6931472
    %v3719 = vlog2.pop %v3656
    %v3720 = vmul.f32 %v3719, 0.6931472
    %v3721 = vlog2.pop %v3658
    %v3722 = vmul.f32 %v3721, 0.6931472
    %v3723 = vlog2.pop %v3660
    %v3724 = vmul.f32 %v3723, 0.6931472
    %v3725 = vlog2.pop %v3662
    %v3726 = vmul.f32 %v3725, 0.6931472
    %v3727 = vlog2.pop %v3664
    %v3728 = vmul.f32 %v3727, 0.6931472
    %v3729 = vlog2.pop %v3666
    %v3730 = vmul.f32 %v3729, 0.6931472
    %v3731 = vlog2.pop %v3668
    %v3732 = vmul.f32 %v3731, 0.6931472
    %v3733 = vlog2.pop %v3670
    %v3734 = vmul.f32 %v3733, 0.6931472
    %v3735 = vlog2.pop %v3672
    %v3736 = vmul.f32 %v3735, 0.6931472
    %v3737 = vlog2.pop %v3674
    %v3738 = vmul.f32 %v3737, 0.6931472
    %v3739 = vsub.f32 %v3483, %v3676
    %v3740 = vsub.f32 %v3484, %v3678
    %v3741 = vsub.f32 %v3485, %v3680
    %v3742 = vsub.f32 %v3486, %v3682
    %v3743 = vsub.f32 %v3487, %v3684
    %v3744 = vsub.f32 %v3488, %v3686
    %v3745 = vsub.f32 %v3489, %v3688
    %v3746 = vsub.f32 %v3490, %v3690
    %v3747 = vsub.f32 %v3491, %v3692
    %v3748 = vsub.f32 %v3492, %v3694
    %v3749 = vsub.f32 %v3493, %v3696
    %v3750 = vsub.f32 %v3494, %v3698
    %v3751 = vsub.f32 %v3495, %v3700
    %v3752 = vsub.f32 %v3496, %v3702
    %v3753 = vsub.f32 %v3497, %v3704
    %v3754 = vsub.f32 %v3498, %v3706
    %v3755 = vsub.f32 %v3499, %v3708
    %v3756 = vsub.f32 %v3500, %v3710
    %v3757 = vsub.f32 %v3501, %v3712
    %v3758 = vsub.f32 %v3502, %v3714
    %v3759 = vsub.f32 %v3503, %v3716
    %v3760 = vsub.f32 %v3504, %v3718
    %v3761 = vsub.f32 %v3505, %v3720
    %v3762 = vsub.f32 %v3506, %v3722
    %v3763 = vsub.f32 %v3507, %v3724
    %v3764 = vsub.f32 %v3508, %v3726
    %v3765 = vsub.f32 %v3509, %v3728
    %v3766 = vsub.f32 %v3510, %v3730
    %v3767 = vsub.f32 %v3511, %v3732
    %v3768 = vsub.f32 %v3512, %v3734
    %v3769 = vsub.f32 %v3513, %v3736
    %v3770 = vsub.f32 %v3514, %v3738
    %3771 = vst [vmem:[#allocation7] sm:$0xff] %v3739
    %3772 = vst [vmem:[#allocation7 + $0x8] sm:$0xff] %v3740
    %3773 = vst [vmem:[#allocation7 + $0x10] sm:$0xff] %v3741
    %3774 = vst [vmem:[#allocation7 + $0x18] sm:$0xff] %v3742
    %3775 = vst [vmem:[#allocation7 + $0x20] sm:$0xff] %v3743
    %3776 = vst [vmem:[#allocation7 + $0x28] sm:$0xff] %v3744
    %3777 = vst [vmem:[#allocation7 + $0x30] sm:$0xff] %v3745
    %3778 = vst [vmem:[#allocation7 + $0x38] sm:$0xff] %v3746
    %3779 = vst [vmem:[#allocation7 + $0x40] sm:$0xff] %v3747
    %3780 = vst [vmem:[#allocation7 + $0x48] sm:$0xff] %v3748
    %3781 = vst [vmem:[#allocation7 + $0x50] sm:$0xff] %v3749
    %3782 = vst [vmem:[#allocation7 + $0x58] sm:$0xff] %v3750
    %3783 = vst [vmem:[#allocation7 + $0x60] sm:$0xff] %v3751
    %3784 = vst [vmem:[#allocation7 + $0x68] sm:$0xff] %v3752
    %3785 = vst [vmem:[#allocation7 + $0x70] sm:$0xff] %v3753
    %3786 = vst [vmem:[#allocation7 + $0x78] sm:$0xff] %v3754
    %3787 = vst [vmem:[#allocation7 + $0x80] sm:$0xff] %v3755
    %3788 = vst [vmem:[#allocation7 + $0x88] sm:$0xff] %v3756
    %3789 = vst [vmem:[#allocation7 + $0x90] sm:$0xff] %v3757
    %3790 = vst [vmem:[#allocation7 + $0x98] sm:$0xff] %v3758
    %3791 = vst [vmem:[#allocation7 + $0xa0] sm:$0xff] %v3759
    %3792 = vst [vmem:[#allocation7 + $0xa8] sm:$0xff] %v3760
    %3793 = vst [vmem:[#allocation7 + $0xb0] sm:$0xff] %v3761
    %3794 = vst [vmem:[#allocation7 + $0xb8] sm:$0xff] %v3762
    %3795 = vst [vmem:[#allocation7 + $0xc0] sm:$0xff] %v3763
    %3796 = vst [vmem:[#allocation7 + $0xc8] sm:$0xff] %v3764
    %3797 = vst [vmem:[#allocation7 + $0xd0] sm:$0xff] %v3765
    %3798 = vst [vmem:[#allocation7 + $0xd8] sm:$0xff] %v3766
    %3799 = vst [vmem:[#allocation7 + $0xe0] sm:$0xff] %v3767
    %3800 = vst [vmem:[#allocation7 + $0xe8] sm:$0xff] %v3768
    %3801 = vst [vmem:[#allocation7 + $0xf0] sm:$0xff] %v3769
    %3802 = vst [vmem:[#allocation7 + $0xf8] sm:$0xff] %v3770
    // Predicated region
    $region38: #{tpu_custom_call.1} parent=1 // pred_check
      _
    $region39: #{tpu_custom_call.1} parent=1 // pred_check_branch
      %3804 = sbr.rel (0) target = $region41
    $region40: #{tpu_custom_call.1} parent=1 // pred_region
      %s3806 = ssub.s32 4096, 4096
      %3807 = vsyncadd [#allocation4], %s3806
      %s3808 = sshll.u32 [#allocation7], 4
      %s3809 = int_to_ptr.vmem [resolvable:$true] %s3808
      %3814 = dma.vmem_to_hbm [thread:$0]  %s3809, 4096, %s7, [#allocation4], 128, 128, 8
    $region41: #{tpu_custom_call.1} parent=1 // pred_fallthru
      _
    // Predicated region
    $region42: #{tpu_custom_call.1} parent=1 // pred_check
      _
    $region43: #{tpu_custom_call.1} parent=1 // pred_check_branch
      %3816 = sbr.rel (0) target = $region45
    $region44: #{tpu_custom_call.1} parent=1 // pred_region
      %3817 = dma.done [#allocation4], 4096
    $region45: #{tpu_custom_call.1} parent=1 // pred_fallthru
      _
    %3818 = vsyncpa [#allocation3], 1
    %3819 = vsyncpa [#allocation4], 1
    %3820 = vsyncpa [#allocation5], 1

</llo_original>
